<compile_context>
chip_gen: v7x
topology: tpu7x:2x2x1
jax: 0.10.0
libtpu: 0.0.40
codegen_flags: <defaults>
</compile_context>

<pallas_src>
import jax
import jax.numpy as jnp
import numpy as np
from jax import lax
from jax.experimental import pallas as pl
from jax.experimental.pallas import tpu as pltpu


def _round_up(x, m):
    return ((x + m - 1) // m) * m


def attn_lstm_kernel(x_ref, enc_ref,
                     wah_ref, wae_ref, ab_ref, v_ref,
                     wix_ref, wrec_ref, bias_ref,
                     h_seq_ref, c_seq_ref,
                     x4h_ref):
    """One batch-tile: whole decoder recurrence in VMEM.

    x_ref    : (T_dec, B, I)      decoder inputs, time-major
    enc_ref  : (B, T_enc, E)      encoder outputs
    wah_ref  : (Hp, Hp)           attn Linear rows for the hidden part (transposed, padded)
    wae_ref  : (E, Hp)            attn Linear rows for the encoder part (transposed, padded)
    ab_ref   : (1, Hp)            attn Linear bias (padded)
    v_ref    : (1, Hp)            attention score vector v (padded)
    wix_ref  : (I, 4*Hp)          LSTM weight_ih rows for current_input (gate-padded)
    wrec_ref : (Hp + E, 4*Hp)     fused [weight_hh ; weight_ih(context rows)] (gate-padded)
    bias_ref : (1, 4*Hp)          b_ih + b_hh (gate-padded)
    h_seq_ref, c_seq_ref : (T_dec, B, Hp) outputs (lane-dense; padding sliced in wrapper)
    x4h_ref  : (T_dec, B, 4*Hp)   VMEM scratch for the hoisted input-to-gates term
    """
    T_dec, B, I = x_ref.shape
    _, T_enc, E = enc_ref.shape
    Hp = wah_ref.shape[0]
    G = 4 * Hp

    enc = enc_ref[...]                                                  # (B, T_enc, E)

    # ---- hoisted, step-independent work -------------------------------------
    # (1) Encoder half of the attention Linear (does not depend on the step).
    enc_proj = (jnp.dot(enc.reshape(B * T_enc, E), wae_ref[...],
                        preferred_element_type=jnp.float32)
                .reshape(B, T_enc, Hp) + ab_ref[...])                   # (B, T_enc, Hp)
    v = v_ref[...]                                                      # (1, Hp)

    # (2) Input-to-gates projection + fused bias for ALL decoder steps at once:
    #     one MXU matmul with M = T_dec*B instead of T_dec tiny M=B matmuls.
    x4h_ref[...] = (jnp.dot(x_ref[...].reshape(T_dec * B, I), wix_ref[...],
                            preferred_element_type=jnp.float32)
                    + bias_ref[...]).reshape(T_dec, B, G)

    wah = wah_ref[...]
    wrec = wrec_ref[...]                                                # (Hp+E, 4Hp)

    def step(t, carry):
        # s0 plays the role of LSTM h, s1 the role of LSTM c.  The attention in the
        # original module reads state[1] (== the cell state after step 0) -- quirk kept.
        s0, s1 = carry

        # ---- Attn.score: tanh(Linear([hidden, enc])) . v ---------------------
        hid_proj = jnp.dot(s1, wah, preferred_element_type=jnp.float32)     # (B, Hp)
        energy = jnp.tanh(enc_proj + hid_proj.reshape(B, 1, Hp))            # (B, T_enc, Hp)
        scores = jnp.sum(energy * v, axis=-1)                               # (B, T_enc)

        # ---- softmax over T_enc (src_len is None in this forward) ------------
        m = jnp.max(scores, axis=-1, keepdims=True)
        e = jnp.exp(scores - m)
        w = e * pl.reciprocal(jnp.sum(e, axis=-1, keepdims=True), approx=True)

        # ---- context = attn_weights.bmm(encoder_outputs) on the MXU ----------
        context = jnp.einsum("bqt,bte->bqe", w.reshape(B, 1, T_enc), enc,
                             preferred_element_type=jnp.float32).reshape(B, E)

        # ---- LSTMCell gates: hoisted input term + ONE fused recurrent matmul -
        rnn_in = jnp.concatenate([s0, context], axis=1)                     # (B, Hp+E)
        gates = x4h_ref[t] + jnp.dot(rnn_in, wrec,
                                     preferred_element_type=jnp.float32)    # (B, 4Hp)

        # Gate slices are 128-lane aligned (Hp = multiple of 128).
        i_g = jax.nn.sigmoid(gates[:, 0 * Hp:1 * Hp])
        f_g = jax.nn.sigmoid(gates[:, 1 * Hp:2 * Hp])
        g_g = jnp.tanh(gates[:, 2 * Hp:3 * Hp])
        o_g = jax.nn.sigmoid(gates[:, 3 * Hp:4 * Hp])
        c_new = f_g * s1 + i_g * g_g
        h_new = o_g * jnp.tanh(c_new)

        # Lane-dense (Hp-wide) unmasked stores.
        h_seq_ref[t] = h_new
        c_seq_ref[t] = c_new
        return (h_new, c_new)

    init = (jnp.zeros((B, Hp), jnp.float32), jnp.zeros((B, Hp), jnp.float32))
    # T_dec is static and small: fully unroll so the LLO scheduler can overlap
    # EUP/XLU/MXU latencies across steps.
    lax.fori_loop(0, T_dec, step, init, unroll=True)


def _pad_lanes(w, new_last):
    pad = new_last - w.shape[-1]
    if pad == 0:
        return w
    return jnp.pad(w, [(0, 0)] * (w.ndim - 1) + [(0, pad)])


def _pad_gate_lanes(w, H, Hp):
    """(..., 4*H) -> (..., 4*Hp): zero-pad each of the i|f|g|o gate blocks to Hp lanes."""
    if Hp == H:
        return w
    lead = w.shape[:-1]
    w4 = w.reshape(lead + (4, H))
    w4 = jnp.pad(w4, [(0, 0)] * len(lead) + [(0, 0), (0, Hp - H)])
    return w4.reshape(lead + (4 * Hp,))


def attn_lstm_forward(input_emb, img_seq, params):
    """Matches ATTNLSTM.forward: returns (cell_seq, hid_seq), each (B, T_dec, H)."""
    B, T_dec, I = input_emb.shape
    _, T_enc, E = img_seq.shape
    H = params["w_hh"].shape[0]
    Hp = _round_up(H, 128)          # lane-dense hidden width inside the kernel

    # Decoder time axis leading so each step is an index on the first axis.
    x_tbi = jnp.transpose(input_emb, (1, 0, 2))                           # (T_dec, B, I)

    # ---- one-time parameter padding / fusion to the lane-dense Hp layout -----
    wah = jnp.pad(params["attn_w_h"], ((0, Hp - H), (0, Hp - H)))         # (Hp, Hp)
    wae = _pad_lanes(params["attn_w_e"], Hp)                              # (E, Hp)
    ab = _pad_lanes(params["attn_b"], Hp)                                 # (1, Hp)
    v = _pad_lanes(params["v"], Hp)                                       # (1, Hp)
    wix = _pad_gate_lanes(params["w_ih_x"], H, Hp)                        # (I, 4Hp)
    wic = _pad_gate_lanes(params["w_ih_c"], H, Hp)                        # (E, 4Hp)
    whh = _pad_gate_lanes(jnp.pad(params["w_hh"], ((0, Hp - H), (0, 0))), H, Hp)  # (Hp, 4Hp)
    wrec = jnp.concatenate([whh, wic], axis=0)                            # rows match [h | context]
    bias = _pad_gate_lanes(params["b_ih"] + params["b_hh"], H, Hp)        # (1, 4Hp)

    # Batch grid: batches are independent, so tiles pipeline their DMAs under the
    # previous tile's recurrence and can be split across v7x's two TensorCores.
    tb = 8 if B % 8 == 0 else B
    grid = (B // tb,)

    def _whole(shape):
        return pl.BlockSpec(shape, lambda b: (0,) * len(shape))

    # TODO(synk): for very large production shapes, cast MXU operands (enc, x, weights)
    # to bf16 with f32 accumulation; kept f32 here to guarantee the tight check below.
    h_seq, c_seq = pl.pallas_call(
        attn_lstm_kernel,
        out_shape=(jax.ShapeDtypeStruct((T_dec, B, Hp), jnp.float32),
                   jax.ShapeDtypeStruct((T_dec, B, Hp), jnp.float32)),
        grid_spec=pltpu.PrefetchScalarGridSpec(
            num_scalar_prefetch=0,
            grid=grid,
            in_specs=[
                pl.BlockSpec((T_dec, tb, I), lambda b: (0, b, 0)),   # x (time-major)
                pl.BlockSpec((tb, T_enc, E), lambda b: (b, 0, 0)),   # encoder outputs
                _whole((Hp, Hp)),                                    # attn W (hidden rows)
                _whole((E, Hp)),                                     # attn W (encoder rows)
                _whole((1, Hp)),                                     # attn bias
                _whole((1, Hp)),                                     # attn v
                _whole((I, 4 * Hp)),                                 # W_ih (input rows)
                _whole((Hp + E, 4 * Hp)),                            # fused [W_hh ; W_ih(ctx)]
                _whole((1, 4 * Hp)),                                 # fused bias
            ],
            out_specs=(pl.BlockSpec((T_dec, tb, Hp), lambda b: (0, b, 0)),
                       pl.BlockSpec((T_dec, tb, Hp), lambda b: (0, b, 0))),
            scratch_shapes=[pltpu.VMEM((T_dec, tb, 4 * Hp), jnp.float32)],
        ),
        compiler_params=pltpu.CompilerParams(
            dimension_semantics=("parallel",),
            vmem_limit_bytes=32 * 1024 * 1024),
    )(x_tbi, img_seq, wah, wae, ab, v, wix, wrec, bias)

    # PyTorch module stacks along dim=1: cell_seq == stacked state[0] (h's),
    # hid_seq == stacked state[1] (c's).  Slice away the Hp-H lane padding.
    cell_seq = jnp.transpose(h_seq, (1, 0, 2))[:, :, :H]
    hid_seq = jnp.transpose(c_seq, (1, 0, 2))[:, :, :H]
    return cell_seq, hid_seq


def reference_forward(input_emb, img_seq, params):
    """Pure-JAX reference mirroring the PyTorch forward (including the (c,h) quirk)."""
    B, T_dec, _ = input_emb.shape
    H = params["w_hh"].shape[0]
    s0 = jnp.zeros((B, H), jnp.float32)   # LSTM h
    s1 = jnp.zeros((B, H), jnp.float32)   # LSTM c (used by attention, per original code)
    enc_proj = jnp.einsum("bte,eh->bth", img_seq, params["attn_w_e"]) + params["attn_b"]
    h_list, c_list = [], []
    for t in range(T_dec):
        x_t = input_emb[:, t, :]
        hid_proj = s1 @ params["attn_w_h"]
        energy = jnp.tanh(enc_proj + hid_proj[:, None, :])
        scores = jnp.sum(energy * params["v"], axis=-1)
        w = jax.nn.softmax(scores, axis=-1)
        context = jnp.einsum("bt,bte->be", w, img_seq)
        gates = (x_t @ params["w_ih_x"] + context @ params["w_ih_c"]
                 + s0 @ params["w_hh"] + params["b_ih"] + params["b_hh"])
        i_g = jax.nn.sigmoid(gates[:, :H])
        f_g = jax.nn.sigmoid(gates[:, H:2 * H])
        g_g = jnp.tanh(gates[:, 2 * H:3 * H])
        o_g = jax.nn.sigmoid(gates[:, 3 * H:])
        c_new = f_g * s1 + i_g * g_g
        h_new = o_g * jnp.tanh(c_new)
        h_list.append(h_new)
        c_list.append(c_new)
        s0, s1 = h_new, c_new
    return jnp.stack(h_list, axis=1), jnp.stack(c_list, axis=1)


if __name__ == "__main__":
    # Small deterministic shapes consistent with the module.
    B, T_dec, T_enc = 2, 8, 8
    H, I, E = 32, 16, 32          # hidden_size, input_size, encoder_size

    key = jax.random.PRNGKey(0)
    ks = jax.random.split(key, 13)
    input_emb = jax.random.normal(ks[0], (B, T_dec, I), jnp.float32)
    img_seq = jax.random.normal(ks[1], (B, T_enc, E), jnp.float32)

    # Deterministic synthetic parameters (shapes follow the module's __init__;
    # stored transposed for x @ W inside the kernel).
    s = 0.1
    params = {
        "attn_w_h": s * jax.random.normal(ks[2], (H, H), jnp.float32),       # Linear(H+E,H) rows for hidden
        "attn_w_e": s * jax.random.normal(ks[3], (E, H), jnp.float32),       # Linear(H+E,H) rows for encoder
        "attn_b":   s * jax.random.normal(ks[4], (1, H), jnp.float32),
        "v":        s * jax.random.normal(ks[5], (1, H), jnp.float32),       # Attn.v
        "w_ih_x":   s * jax.random.normal(ks[6], (I, 4 * H), jnp.float32),   # LSTMCell weight_ih (input part)
        "w_ih_c":   s * jax.random.normal(ks[7], (E, 4 * H), jnp.float32),   # LSTMCell weight_ih (context part)
        "w_hh":     s * jax.random.normal(ks[8], (H, 4 * H), jnp.float32),   # LSTMCell weight_hh
        "b_ih":     s * jax.random.normal(ks[9], (1, 4 * H), jnp.float32),
        "b_hh":     s * jax.random.normal(ks[10], (1, 4 * H), jnp.float32),
    }

    cell_seq, hid_seq = jax.jit(attn_lstm_forward)(input_emb, img_seq, params)
    jax.block_until_ready((cell_seq, hid_seq))

    ref_cell, ref_hid = reference_forward(input_emb, img_seq, params)
    assert cell_seq.shape == (B, T_dec, H) and hid_seq.shape == (B, T_dec, H)
    np.testing.assert_allclose(np.asarray(cell_seq), np.asarray(ref_cell), rtol=2e-2, atol=2e-2)
    np.testing.assert_allclose(np.asarray(hid_seq), np.asarray(ref_hid), rtol=2e-2, atol=2e-2)

    print("KERNEL_OK")
</pallas_src>

<mosaic_0001>
module attributes {stable_mosaic.version = 11 : i64} {
  func.func @attn_lstm_kernel(%arg0: i32, %arg1: memref<8x2x16xf32, #tpu.memory_space<vmem>>, %arg2: memref<2x8x32xf32, #tpu.memory_space<vmem>>, %arg3: memref<128x128xf32, #tpu.memory_space<vmem>>, %arg4: memref<32x128xf32, #tpu.memory_space<vmem>>, %arg5: memref<1x128xf32, #tpu.memory_space<vmem>>, %arg6: memref<1x128xf32, #tpu.memory_space<vmem>>, %arg7: memref<16x512xf32, #tpu.memory_space<vmem>>, %arg8: memref<160x512xf32, #tpu.memory_space<vmem>>, %arg9: memref<1x512xf32, #tpu.memory_space<vmem>>, %arg10: memref<8x2x128xf32, #tpu.memory_space<vmem>>, %arg11: memref<8x2x128xf32, #tpu.memory_space<vmem>>, %arg12: memref<8x2x512xf32, #tpu.memory_space<vmem>>) attributes {dimension_semantics = [#tpu.dimension_semantics<parallel>], iteration_bounds = array<i64: 1>, scalar_prefetch = 0 : i64, scratch_operands = 1 : i64, tpu.core_type = #tpu.core_type<tc>, window_params = [{transform_indices = @transform_0, window_bounds = array<i64: 8, 2, 16>}, {transform_indices = @transform_1, window_bounds = array<i64: 2, 8, 32>}, {pipeline_mode = #tpu.pipeline_mode<synchronous>, transform_indices = @transform_2, window_bounds = array<i64: 128, 128>}, {pipeline_mode = #tpu.pipeline_mode<synchronous>, transform_indices = @transform_3, window_bounds = array<i64: 32, 128>}, {pipeline_mode = #tpu.pipeline_mode<synchronous>, transform_indices = @transform_4, window_bounds = array<i64: 1, 128>}, {pipeline_mode = #tpu.pipeline_mode<synchronous>, transform_indices = @transform_5, window_bounds = array<i64: 1, 128>}, {pipeline_mode = #tpu.pipeline_mode<synchronous>, transform_indices = @transform_6, window_bounds = array<i64: 16, 512>}, {pipeline_mode = #tpu.pipeline_mode<synchronous>, transform_indices = @transform_7, window_bounds = array<i64: 160, 512>}, {pipeline_mode = #tpu.pipeline_mode<synchronous>, transform_indices = @transform_8, window_bounds = array<i64: 1, 512>}, {transform_indices = @transform_9, window_bounds = array<i64: 8, 2, 128>}, {transform_indices = @transform_10, window_bounds = array<i64: 8, 2, 128>}]} {
    %c0 = arith.constant 0 : index
    %c0_0 = arith.constant 0 : index
    %c0_1 = arith.constant 0 : index
    %0 = vector.load %arg2[%c0, %c0_0, %c0_1] : memref<2x8x32xf32, #tpu.memory_space<vmem>>, vector<2x8x32xf32>
    %1 = vector.shape_cast %0 : vector<2x8x32xf32> to vector<16x32xf32>
    %c0_2 = arith.constant 0 : index
    %c0_3 = arith.constant 0 : index
    %2 = vector.load %arg4[%c0_2, %c0_3] : memref<32x128xf32, #tpu.memory_space<vmem>>, vector<32x128xf32>
    %cst = arith.constant dense<0.000000e+00> : vector<16x128xf32>
    %3 = tpu.matmul %1, %2, %cst {dimension_numbers = #tpu.dot_dimension_numbers<[1], [0], [0], [1], [0, 0, 1, 1], [], []>} : vector<16x32xf32>, vector<32x128xf32>, vector<16x128xf32> -> vector<16x128xf32>
    %4 = vector.shape_cast %3 : vector<16x128xf32> to vector<2x8x128xf32>
    %c0_4 = arith.constant 0 : index
    %c0_5 = arith.constant 0 : index
    %5 = vector.load %arg5[%c0_4, %c0_5] : memref<1x128xf32, #tpu.memory_space<vmem>>, vector<1x128xf32>
    %6 = vector.shape_cast %5 : vector<1x128xf32> to vector<1x1x128xf32>
    %7 = vector.broadcast %6 : vector<1x1x128xf32> to vector<2x8x128xf32>
    %8 = arith.addf %4, %7 : vector<2x8x128xf32>
    %c0_6 = arith.constant 0 : index
    %c0_7 = arith.constant 0 : index
    %9 = vector.load %arg6[%c0_6, %c0_7] : memref<1x128xf32, #tpu.memory_space<vmem>>, vector<1x128xf32>
    %c0_8 = arith.constant 0 : index
    %c0_9 = arith.constant 0 : index
    %c0_10 = arith.constant 0 : index
    %10 = vector.load %arg1[%c0_8, %c0_9, %c0_10] : memref<8x2x16xf32, #tpu.memory_space<vmem>>, vector<8x2x16xf32>
    %11 = vector.shape_cast %10 : vector<8x2x16xf32> to vector<16x16xf32>
    %c0_11 = arith.constant 0 : index
    %c0_12 = arith.constant 0 : index
    %12 = vector.load %arg7[%c0_11, %c0_12] : memref<16x512xf32, #tpu.memory_space<vmem>>, vector<16x512xf32>
    %cst_13 = arith.constant dense<0.000000e+00> : vector<16x512xf32>
    %13 = tpu.matmul %11, %12, %cst_13 {dimension_numbers = #tpu.dot_dimension_numbers<[1], [0], [0], [1], [0, 0, 1, 1], [], []>} : vector<16x16xf32>, vector<16x512xf32>, vector<16x512xf32> -> vector<16x512xf32>
    %c0_14 = arith.constant 0 : index
    %c0_15 = arith.constant 0 : index
    %14 = vector.load %arg9[%c0_14, %c0_15] : memref<1x512xf32, #tpu.memory_space<vmem>>, vector<1x512xf32>
    %15 = vector.broadcast %14 : vector<1x512xf32> to vector<16x512xf32>
    %16 = arith.addf %13, %15 : vector<16x512xf32>
    %17 = vector.shape_cast %16 : vector<16x512xf32> to vector<8x2x512xf32>
    %c0_16 = arith.constant 0 : index
    %c0_17 = arith.constant 0 : index
    %c0_18 = arith.constant 0 : index
    %18 = vector.load %arg12[%c0_16, %c0_17, %c0_18] : memref<8x2x512xf32, #tpu.memory_space<vmem>>, vector<8x2x512xf32>
    tpu.vector_store %arg12[%c0_16, %c0_17, %c0_18], %17 {strides = array<i32>} : memref<8x2x512xf32, #tpu.memory_space<vmem>>, vector<8x2x512xf32>,
    %c0_19 = arith.constant 0 : index
    %c0_20 = arith.constant 0 : index
    %19 = vector.load %arg3[%c0_19, %c0_20] : memref<128x128xf32, #tpu.memory_space<vmem>>, vector<128x128xf32>
    %c0_21 = arith.constant 0 : index
    %c0_22 = arith.constant 0 : index
    %20 = vector.load %arg8[%c0_21, %c0_22] : memref<160x512xf32, #tpu.memory_space<vmem>>, vector<160x512xf32>
    %cst_23 = arith.constant 0.000000e+00 : f32
    %21 = vector.broadcast %cst_23 : f32 to vector<2x128xf32>
    %cst_24 = arith.constant 0.000000e+00 : f32
    %22 = vector.broadcast %cst_24 : f32 to vector<2x128xf32>
    %c0_i32 = arith.constant 0 : i32
    %cst_25 = arith.constant dense<0.000000e+00> : vector<2x128xf32>
    %23 = tpu.matmul %22, %19, %cst_25 {dimension_numbers = #tpu.dot_dimension_numbers<[1], [0], [0], [1], [0, 0, 1, 1], [], []>} : vector<2x128xf32>, vector<128x128xf32>, vector<2x128xf32> -> vector<2x128xf32>
    %24 = vector.shape_cast %23 : vector<2x128xf32> to vector<2x1x128xf32>
    %25 = vector.broadcast %24 : vector<2x1x128xf32> to vector<2x8x128xf32>
    %26 = arith.addf %8, %25 : vector<2x8x128xf32>
    %27 = math.tanh %26 : vector<2x8x128xf32>
    %28 = vector.shape_cast %9 : vector<1x128xf32> to vector<1x1x128xf32>
    %29 = vector.broadcast %28 : vector<1x1x128xf32> to vector<2x8x128xf32>
    %30 = arith.mulf %27, %29 : vector<2x8x128xf32>
    %cst_26 = arith.constant dense<0.000000e+00> : vector<2x8xf32>
    %31 = vector.multi_reduction <add>, %30, %cst_26 [2] : vector<2x8x128xf32> to vector<2x8xf32>
    %cst_27 = arith.constant dense<0xFF800000> : vector<2xf32>
    %32 = vector.multi_reduction <maximumf>, %31, %cst_27 [1] : vector<2x8xf32> to vector<2xf32>
    %33 = vector.shape_cast %32 : vector<2xf32> to vector<2x1xf32>
    %34 = vector.broadcast %33 : vector<2x1xf32> to vector<2x8xf32>
    %35 = arith.subf %31, %34 : vector<2x8xf32>
    %36 = math.exp %35 : vector<2x8xf32>
    %cst_28 = arith.constant dense<0.000000e+00> : vector<2xf32>
    %37 = vector.multi_reduction <add>, %36, %cst_28 [1] : vector<2x8xf32> to vector<2xf32>
    %38 = vector.shape_cast %37 : vector<2xf32> to vector<2x1xf32>
    %39 = tpu.reciprocal %38 {approx = true} : vector<2x1xf32> -> vector<2x1xf32>
    %40 = vector.broadcast %39 : vector<2x1xf32> to vector<2x8xf32>
    %41 = arith.mulf %36, %40 : vector<2x8xf32>
    %42 = vector.shape_cast %41 : vector<2x8xf32> to vector<2x1x8xf32>
    "tpu.trace_start"() <{level = 10 : i32, message = "bqt,bte->bqe"}> : () -> ()
    %cst_29 = arith.constant dense<0.000000e+00> : vector<2x1x32xf32>
    %43 = tpu.matmul %42, %0, %cst_29 {dimension_numbers = #tpu.dot_dimension_numbers<[2], [1], [1], [2], [0, 0, 0, 1, 1, 2], [0], [0]>} : vector<2x1x8xf32>, vector<2x8x32xf32>, vector<2x1x32xf32> -> vector<2x1x32xf32>
    "tpu.trace_stop"() : () -> ()
    %44 = vector.shape_cast %43 : vector<2x1x32xf32> to vector<2x32xf32>
    %45 = tpu.concatenate %21, %44 in 1 : vector<2x128xf32>, vector<2x32xf32> -> vector<2x160xf32>
    %46 = arith.index_cast %c0_i32 : i32 to index
    %c0_30 = arith.constant 0 : index
    %c0_31 = arith.constant 0 : index
    %47 = vector.load %arg12[%46, %c0_30, %c0_31] : memref<8x2x512xf32, #tpu.memory_space<vmem>>, vector<1x2x512xf32>
    %48 = vector.shape_cast %47 : vector<1x2x512xf32> to vector<2x512xf32>
    %cst_32 = arith.constant dense<0.000000e+00> : vector<2x512xf32>
    %49 = tpu.matmul %45, %20, %cst_32 {dimension_numbers = #tpu.dot_dimension_numbers<[1], [0], [0], [1], [0, 0, 1, 1], [], []>} : vector<2x160xf32>, vector<160x512xf32>, vector<2x512xf32> -> vector<2x512xf32>
    %50 = arith.addf %48, %49 : vector<2x512xf32>
    %51 = vector.extract_strided_slice %50 {offsets = [0, 0], sizes = [2, 128], strides = [1, 1]} : vector<2x512xf32> to vector<2x128xf32>
    %52 = arith.negf %51 : vector<2x128xf32>
    %53 = math.exp %52 : vector<2x128xf32>
    %cst_33 = arith.constant 1.000000e+00 : f32
    %54 = vector.broadcast %cst_33 : f32 to vector<2x128xf32>
    %55 = arith.addf %54, %53 : vector<2x128xf32>
    %56 = arith.divf %54, %55 : vector<2x128xf32>
    %57 = vector.extract_strided_slice %50 {offsets = [0, 128], sizes = [2, 128], strides = [1, 1]} : vector<2x512xf32> to vector<2x128xf32>
    %58 = arith.negf %57 : vector<2x128xf32>
    %59 = math.exp %58 : vector<2x128xf32>
    %cst_34 = arith.constant 1.000000e+00 : f32
    %60 = vector.broadcast %cst_34 : f32 to vector<2x128xf32>
    %61 = arith.addf %60, %59 : vector<2x128xf32>
    %62 = arith.divf %60, %61 : vector<2x128xf32>
    %63 = vector.extract_strided_slice %50 {offsets = [0, 256], sizes = [2, 128], strides = [1, 1]} : vector<2x512xf32> to vector<2x128xf32>
    %64 = math.tanh %63 : vector<2x128xf32>
    %65 = vector.extract_strided_slice %50 {offsets = [0, 384], sizes = [2, 128], strides = [1, 1]} : vector<2x512xf32> to vector<2x128xf32>
    %66 = arith.negf %65 : vector<2x128xf32>
    %67 = math.exp %66 : vector<2x128xf32>
    %cst_35 = arith.constant 1.000000e+00 : f32
    %68 = vector.broadcast %cst_35 : f32 to vector<2x128xf32>
    %69 = arith.addf %68, %67 : vector<2x128xf32>
    %70 = arith.divf %68, %69 : vector<2x128xf32>
    %71 = arith.mulf %62, %22 : vector<2x128xf32>
    %72 = arith.mulf %56, %64 : vector<2x128xf32>
    %73 = arith.addf %71, %72 : vector<2x128xf32>
    %74 = math.tanh %73 : vector<2x128xf32>
    %75 = arith.mulf %70, %74 : vector<2x128xf32>
    %76 = arith.index_cast %c0_i32 : i32 to index
    %c0_36 = arith.constant 0 : index
    %c0_37 = arith.constant 0 : index
    %77 = vector.load %arg10[%76, %c0_36, %c0_37] : memref<8x2x128xf32, #tpu.memory_space<vmem>>, vector<1x2x128xf32>
    %78 = vector.shape_cast %77 : vector<1x2x128xf32> to vector<2x128xf32>
    %79 = vector.shape_cast %75 : vector<2x128xf32> to vector<1x2x128xf32>
    tpu.vector_store %arg10[%76, %c0_36, %c0_37], %79 {strides = array<i32>} : memref<8x2x128xf32, #tpu.memory_space<vmem>>, vector<1x2x128xf32>,
    %80 = arith.index_cast %c0_i32 : i32 to index
    %c0_38 = arith.constant 0 : index
    %c0_39 = arith.constant 0 : index
    %81 = vector.load %arg11[%80, %c0_38, %c0_39] : memref<8x2x128xf32, #tpu.memory_space<vmem>>, vector<1x2x128xf32>
    %82 = vector.shape_cast %81 : vector<1x2x128xf32> to vector<2x128xf32>
    %83 = vector.shape_cast %73 : vector<2x128xf32> to vector<1x2x128xf32>
    tpu.vector_store %arg11[%80, %c0_38, %c0_39], %83 {strides = array<i32>} : memref<8x2x128xf32, #tpu.memory_space<vmem>>, vector<1x2x128xf32>,
    %c1_i32 = arith.constant 1 : i32
    %cst_40 = arith.constant dense<0.000000e+00> : vector<2x128xf32>
    %84 = tpu.matmul %73, %19, %cst_40 {dimension_numbers = #tpu.dot_dimension_numbers<[1], [0], [0], [1], [0, 0, 1, 1], [], []>} : vector<2x128xf32>, vector<128x128xf32>, vector<2x128xf32> -> vector<2x128xf32>
    %85 = vector.shape_cast %84 : vector<2x128xf32> to vector<2x1x128xf32>
    %86 = vector.broadcast %85 : vector<2x1x128xf32> to vector<2x8x128xf32>
    %87 = arith.addf %8, %86 : vector<2x8x128xf32>
    %88 = math.tanh %87 : vector<2x8x128xf32>
    %89 = vector.shape_cast %9 : vector<1x128xf32> to vector<1x1x128xf32>
    %90 = vector.broadcast %89 : vector<1x1x128xf32> to vector<2x8x128xf32>
    %91 = arith.mulf %88, %90 : vector<2x8x128xf32>
    %cst_41 = arith.constant dense<0.000000e+00> : vector<2x8xf32>
    %92 = vector.multi_reduction <add>, %91, %cst_41 [2] : vector<2x8x128xf32> to vector<2x8xf32>
    %cst_42 = arith.constant dense<0xFF800000> : vector<2xf32>
    %93 = vector.multi_reduction <maximumf>, %92, %cst_42 [1] : vector<2x8xf32> to vector<2xf32>
    %94 = vector.shape_cast %93 : vector<2xf32> to vector<2x1xf32>
    %95 = vector.broadcast %94 : vector<2x1xf32> to vector<2x8xf32>
    %96 = arith.subf %92, %95 : vector<2x8xf32>
    %97 = math.exp %96 : vector<2x8xf32>
    %cst_43 = arith.constant dense<0.000000e+00> : vector<2xf32>
    %98 = vector.multi_reduction <add>, %97, %cst_43 [1] : vector<2x8xf32> to vector<2xf32>
    %99 = vector.shape_cast %98 : vector<2xf32> to vector<2x1xf32>
    %100 = tpu.reciprocal %99 {approx = true} : vector<2x1xf32> -> vector<2x1xf32>
    %101 = vector.broadcast %100 : vector<2x1xf32> to vector<2x8xf32>
    %102 = arith.mulf %97, %101 : vector<2x8xf32>
    %103 = vector.shape_cast %102 : vector<2x8xf32> to vector<2x1x8xf32>
    "tpu.trace_start"() <{level = 10 : i32, message = "bqt,bte->bqe"}> : () -> ()
    %cst_44 = arith.constant dense<0.000000e+00> : vector<2x1x32xf32>
    %104 = tpu.matmul %103, %0, %cst_44 {dimension_numbers = #tpu.dot_dimension_numbers<[2], [1], [1], [2], [0, 0, 0, 1, 1, 2], [0], [0]>} : vector<2x1x8xf32>, vector<2x8x32xf32>, vector<2x1x32xf32> -> vector<2x1x32xf32>
    "tpu.trace_stop"() : () -> ()
    %105 = vector.shape_cast %104 : vector<2x1x32xf32> to vector<2x32xf32>
    %106 = tpu.concatenate %75, %105 in 1 : vector<2x128xf32>, vector<2x32xf32> -> vector<2x160xf32>
    %107 = arith.index_cast %c1_i32 : i32 to index
    %c0_45 = arith.constant 0 : index
    %c0_46 = arith.constant 0 : index
    %108 = vector.load %arg12[%107, %c0_45, %c0_46] : memref<8x2x512xf32, #tpu.memory_space<vmem>>, vector<1x2x512xf32>
    %109 = vector.shape_cast %108 : vector<1x2x512xf32> to vector<2x512xf32>
    %cst_47 = arith.constant dense<0.000000e+00> : vector<2x512xf32>
    %110 = tpu.matmul %106, %20, %cst_47 {dimension_numbers = #tpu.dot_dimension_numbers<[1], [0], [0], [1], [0, 0, 1, 1], [], []>} : vector<2x160xf32>, vector<160x512xf32>, vector<2x512xf32> -> vector<2x512xf32>
    %111 = arith.addf %109, %110 : vector<2x512xf32>
    %112 = vector.extract_strided_slice %111 {offsets = [0, 0], sizes = [2, 128], strides = [1, 1]} : vector<2x512xf32> to vector<2x128xf32>
    %113 = arith.negf %112 : vector<2x128xf32>
    %114 = math.exp %113 : vector<2x128xf32>
    %cst_48 = arith.constant 1.000000e+00 : f32
    %115 = vector.broadcast %cst_48 : f32 to vector<2x128xf32>
    %116 = arith.addf %115, %114 : vector<2x128xf32>
    %117 = arith.divf %115, %116 : vector<2x128xf32>
    %118 = vector.extract_strided_slice %111 {offsets = [0, 128], sizes = [2, 128], strides = [1, 1]} : vector<2x512xf32> to vector<2x128xf32>
    %119 = arith.negf %118 : vector<2x128xf32>
    %120 = math.exp %119 : vector<2x128xf32>
    %cst_49 = arith.constant 1.000000e+00 : f32
    %121 = vector.broadcast %cst_49 : f32 to vector<2x128xf32>
    %122 = arith.addf %121, %120 : vector<2x128xf32>
    %123 = arith.divf %121, %122 : vector<2x128xf32>
    %124 = vector.extract_strided_slice %111 {offsets = [0, 256], sizes = [2, 128], strides = [1, 1]} : vector<2x512xf32> to vector<2x128xf32>
    %125 = math.tanh %124 : vector<2x128xf32>
    %126 = vector.extract_strided_slice %111 {offsets = [0, 384], sizes = [2, 128], strides = [1, 1]} : vector<2x512xf32> to vector<2x128xf32>
    %127 = arith.negf %126 : vector<2x128xf32>
    %128 = math.exp %127 : vector<2x128xf32>
    %cst_50 = arith.constant 1.000000e+00 : f32
    %129 = vector.broadcast %cst_50 : f32 to vector<2x128xf32>
    %130 = arith.addf %129, %128 : vector<2x128xf32>
    %131 = arith.divf %129, %130 : vector<2x128xf32>
    %132 = arith.mulf %123, %73 : vector<2x128xf32>
    %133 = arith.mulf %117, %125 : vector<2x128xf32>
    %134 = arith.addf %132, %133 : vector<2x128xf32>
    %135 = math.tanh %134 : vector<2x128xf32>
    %136 = arith.mulf %131, %135 : vector<2x128xf32>
    %137 = arith.index_cast %c1_i32 : i32 to index
    %c0_51 = arith.constant 0 : index
    %c0_52 = arith.constant 0 : index
    %138 = vector.load %arg10[%137, %c0_51, %c0_52] : memref<8x2x128xf32, #tpu.memory_space<vmem>>, vector<1x2x128xf32>
    %139 = vector.shape_cast %138 : vector<1x2x128xf32> to vector<2x128xf32>
    %140 = vector.shape_cast %136 : vector<2x128xf32> to vector<1x2x128xf32>
    tpu.vector_store %arg10[%137, %c0_51, %c0_52], %140 {strides = array<i32>} : memref<8x2x128xf32, #tpu.memory_space<vmem>>, vector<1x2x128xf32>,
    %141 = arith.index_cast %c1_i32 : i32 to index
    %c0_53 = arith.constant 0 : index
    %c0_54 = arith.constant 0 : index
    %142 = vector.load %arg11[%141, %c0_53, %c0_54] : memref<8x2x128xf32, #tpu.memory_space<vmem>>, vector<1x2x128xf32>
    %143 = vector.shape_cast %142 : vector<1x2x128xf32> to vector<2x128xf32>
    %144 = vector.shape_cast %134 : vector<2x128xf32> to vector<1x2x128xf32>
    tpu.vector_store %arg11[%141, %c0_53, %c0_54], %144 {strides = array<i32>} : memref<8x2x128xf32, #tpu.memory_space<vmem>>, vector<1x2x128xf32>,
    %c2_i32 = arith.constant 2 : i32
    %cst_55 = arith.constant dense<0.000000e+00> : vector<2x128xf32>
    %145 = tpu.matmul %134, %19, %cst_55 {dimension_numbers = #tpu.dot_dimension_numbers<[1], [0], [0], [1], [0, 0, 1, 1], [], []>} : vector<2x128xf32>, vector<128x128xf32>, vector<2x128xf32> -> vector<2x128xf32>
    %146 = vector.shape_cast %145 : vector<2x128xf32> to vector<2x1x128xf32>
    %147 = vector.broadcast %146 : vector<2x1x128xf32> to vector<2x8x128xf32>
    %148 = arith.addf %8, %147 : vector<2x8x128xf32>
    %149 = math.tanh %148 : vector<2x8x128xf32>
    %150 = vector.shape_cast %9 : vector<1x128xf32> to vector<1x1x128xf32>
    %151 = vector.broadcast %150 : vector<1x1x128xf32> to vector<2x8x128xf32>
    %152 = arith.mulf %149, %151 : vector<2x8x128xf32>
    %cst_56 = arith.constant dense<0.000000e+00> : vector<2x8xf32>
    %153 = vector.multi_reduction <add>, %152, %cst_56 [2] : vector<2x8x128xf32> to vector<2x8xf32>
    %cst_57 = arith.constant dense<0xFF800000> : vector<2xf32>
    %154 = vector.multi_reduction <maximumf>, %153, %cst_57 [1] : vector<2x8xf32> to vector<2xf32>
    %155 = vector.shape_cast %154 : vector<2xf32> to vector<2x1xf32>
    %156 = vector.broadcast %155 : vector<2x1xf32> to vector<2x8xf32>
    %157 = arith.subf %153, %156 : vector<2x8xf32>
    %158 = math.exp %157 : vector<2x8xf32>
    %cst_58 = arith.constant dense<0.000000e+00> : vector<2xf32>
    %159 = vector.multi_reduction <add>, %158, %cst_58 [1] : vector<2x8xf32> to vector<2xf32>
    %160 = vector.shape_cast %159 : vector<2xf32> to vector<2x1xf32>
    %161 = tpu.reciprocal %160 {approx = true} : vector<2x1xf32> -> vector<2x1xf32>
    %162 = vector.broadcast %161 : vector<2x1xf32> to vector<2x8xf32>
    %163 = arith.mulf %158, %162 : vector<2x8xf32>
    %164 = vector.shape_cast %163 : vector<2x8xf32> to vector<2x1x8xf32>
    "tpu.trace_start"() <{level = 10 : i32, message = "bqt,bte->bqe"}> : () -> ()
    %cst_59 = arith.constant dense<0.000000e+00> : vector<2x1x32xf32>
    %165 = tpu.matmul %164, %0, %cst_59 {dimension_numbers = #tpu.dot_dimension_numbers<[2], [1], [1], [2], [0, 0, 0, 1, 1, 2], [0], [0]>} : vector<2x1x8xf32>, vector<2x8x32xf32>, vector<2x1x32xf32> -> vector<2x1x32xf32>
    "tpu.trace_stop"() : () -> ()
    %166 = vector.shape_cast %165 : vector<2x1x32xf32> to vector<2x32xf32>
    %167 = tpu.concatenate %136, %166 in 1 : vector<2x128xf32>, vector<2x32xf32> -> vector<2x160xf32>
    %168 = arith.index_cast %c2_i32 : i32 to index
    %c0_60 = arith.constant 0 : index
    %c0_61 = arith.constant 0 : index
    %169 = vector.load %arg12[%168, %c0_60, %c0_61] : memref<8x2x512xf32, #tpu.memory_space<vmem>>, vector<1x2x512xf32>
    %170 = vector.shape_cast %169 : vector<1x2x512xf32> to vector<2x512xf32>
    %cst_62 = arith.constant dense<0.000000e+00> : vector<2x512xf32>
    %171 = tpu.matmul %167, %20, %cst_62 {dimension_numbers = #tpu.dot_dimension_numbers<[1], [0], [0], [1], [0, 0, 1, 1], [], []>} : vector<2x160xf32>, vector<160x512xf32>, vector<2x512xf32> -> vector<2x512xf32>
    %172 = arith.addf %170, %171 : vector<2x512xf32>
    %173 = vector.extract_strided_slice %172 {offsets = [0, 0], sizes = [2, 128], strides = [1, 1]} : vector<2x512xf32> to vector<2x128xf32>
    %174 = arith.negf %173 : vector<2x128xf32>
    %175 = math.exp %174 : vector<2x128xf32>
    %cst_63 = arith.constant 1.000000e+00 : f32
    %176 = vector.broadcast %cst_63 : f32 to vector<2x128xf32>
    %177 = arith.addf %176, %175 : vector<2x128xf32>
    %178 = arith.divf %176, %177 : vector<2x128xf32>
    %179 = vector.extract_strided_slice %172 {offsets = [0, 128], sizes = [2, 128], strides = [1, 1]} : vector<2x512xf32> to vector<2x128xf32>
    %180 = arith.negf %179 : vector<2x128xf32>
    %181 = math.exp %180 : vector<2x128xf32>
    %cst_64 = arith.constant 1.000000e+00 : f32
    %182 = vector.broadcast %cst_64 : f32 to vector<2x128xf32>
    %183 = arith.addf %182, %181 : vector<2x128xf32>
    %184 = arith.divf %182, %183 : vector<2x128xf32>
    %185 = vector.extract_strided_slice %172 {offsets = [0, 256], sizes = [2, 128], strides = [1, 1]} : vector<2x512xf32> to vector<2x128xf32>
    %186 = math.tanh %185 : vector<2x128xf32>
    %187 = vector.extract_strided_slice %172 {offsets = [0, 384], sizes = [2, 128], strides = [1, 1]} : vector<2x512xf32> to vector<2x128xf32>
    %188 = arith.negf %187 : vector<2x128xf32>
    %189 = math.exp %188 : vector<2x128xf32>
    %cst_65 = arith.constant 1.000000e+00 : f32
    %190 = vector.broadcast %cst_65 : f32 to vector<2x128xf32>
    %191 = arith.addf %190, %189 : vector<2x128xf32>
    %192 = arith.divf %190, %191 : vector<2x128xf32>
    %193 = arith.mulf %184, %134 : vector<2x128xf32>
    %194 = arith.mulf %178, %186 : vector<2x128xf32>
    %195 = arith.addf %193, %194 : vector<2x128xf32>
    %196 = math.tanh %195 : vector<2x128xf32>
    %197 = arith.mulf %192, %196 : vector<2x128xf32>
    %198 = arith.index_cast %c2_i32 : i32 to index
    %c0_66 = arith.constant 0 : index
    %c0_67 = arith.constant 0 : index
    %199 = vector.load %arg10[%198, %c0_66, %c0_67] : memref<8x2x128xf32, #tpu.memory_space<vmem>>, vector<1x2x128xf32>
    %200 = vector.shape_cast %199 : vector<1x2x128xf32> to vector<2x128xf32>
    %201 = vector.shape_cast %197 : vector<2x128xf32> to vector<1x2x128xf32>
    tpu.vector_store %arg10[%198, %c0_66, %c0_67], %201 {strides = array<i32>} : memref<8x2x128xf32, #tpu.memory_space<vmem>>, vector<1x2x128xf32>,
    %202 = arith.index_cast %c2_i32 : i32 to index
    %c0_68 = arith.constant 0 : index
    %c0_69 = arith.constant 0 : index
    %203 = vector.load %arg11[%202, %c0_68, %c0_69] : memref<8x2x128xf32, #tpu.memory_space<vmem>>, vector<1x2x128xf32>
    %204 = vector.shape_cast %203 : vector<1x2x128xf32> to vector<2x128xf32>
    %205 = vector.shape_cast %195 : vector<2x128xf32> to vector<1x2x128xf32>
    tpu.vector_store %arg11[%202, %c0_68, %c0_69], %205 {strides = array<i32>} : memref<8x2x128xf32, #tpu.memory_space<vmem>>, vector<1x2x128xf32>,
    %c3_i32 = arith.constant 3 : i32
    %cst_70 = arith.constant dense<0.000000e+00> : vector<2x128xf32>
    %206 = tpu.matmul %195, %19, %cst_70 {dimension_numbers = #tpu.dot_dimension_numbers<[1], [0], [0], [1], [0, 0, 1, 1], [], []>} : vector<2x128xf32>, vector<128x128xf32>, vector<2x128xf32> -> vector<2x128xf32>
    %207 = vector.shape_cast %206 : vector<2x128xf32> to vector<2x1x128xf32>
    %208 = vector.broadcast %207 : vector<2x1x128xf32> to vector<2x8x128xf32>
    %209 = arith.addf %8, %208 : vector<2x8x128xf32>
    %210 = math.tanh %209 : vector<2x8x128xf32>
    %211 = vector.shape_cast %9 : vector<1x128xf32> to vector<1x1x128xf32>
    %212 = vector.broadcast %211 : vector<1x1x128xf32> to vector<2x8x128xf32>
    %213 = arith.mulf %210, %212 : vector<2x8x128xf32>
    %cst_71 = arith.constant dense<0.000000e+00> : vector<2x8xf32>
    %214 = vector.multi_reduction <add>, %213, %cst_71 [2] : vector<2x8x128xf32> to vector<2x8xf32>
    %cst_72 = arith.constant dense<0xFF800000> : vector<2xf32>
    %215 = vector.multi_reduction <maximumf>, %214, %cst_72 [1] : vector<2x8xf32> to vector<2xf32>
    %216 = vector.shape_cast %215 : vector<2xf32> to vector<2x1xf32>
    %217 = vector.broadcast %216 : vector<2x1xf32> to vector<2x8xf32>
    %218 = arith.subf %214, %217 : vector<2x8xf32>
    %219 = math.exp %218 : vector<2x8xf32>
    %cst_73 = arith.constant dense<0.000000e+00> : vector<2xf32>
    %220 = vector.multi_reduction <add>, %219, %cst_73 [1] : vector<2x8xf32> to vector<2xf32>
    %221 = vector.shape_cast %220 : vector<2xf32> to vector<2x1xf32>
    %222 = tpu.reciprocal %221 {approx = true} : vector<2x1xf32> -> vector<2x1xf32>
    %223 = vector.broadcast %222 : vector<2x1xf32> to vector<2x8xf32>
    %224 = arith.mulf %219, %223 : vector<2x8xf32>
    %225 = vector.shape_cast %224 : vector<2x8xf32> to vector<2x1x8xf32>
    "tpu.trace_start"() <{level = 10 : i32, message = "bqt,bte->bqe"}> : () -> ()
    %cst_74 = arith.constant dense<0.000000e+00> : vector<2x1x32xf32>
    %226 = tpu.matmul %225, %0, %cst_74 {dimension_numbers = #tpu.dot_dimension_numbers<[2], [1], [1], [2], [0, 0, 0, 1, 1, 2], [0], [0]>} : vector<2x1x8xf32>, vector<2x8x32xf32>, vector<2x1x32xf32> -> vector<2x1x32xf32>
    "tpu.trace_stop"() : () -> ()
    %227 = vector.shape_cast %226 : vector<2x1x32xf32> to vector<2x32xf32>
    %228 = tpu.concatenate %197, %227 in 1 : vector<2x128xf32>, vector<2x32xf32> -> vector<2x160xf32>
    %229 = arith.index_cast %c3_i32 : i32 to index
    %c0_75 = arith.constant 0 : index
    %c0_76 = arith.constant 0 : index
    %230 = vector.load %arg12[%229, %c0_75, %c0_76] : memref<8x2x512xf32, #tpu.memory_space<vmem>>, vector<1x2x512xf32>
    %231 = vector.shape_cast %230 : vector<1x2x512xf32> to vector<2x512xf32>
    %cst_77 = arith.constant dense<0.000000e+00> : vector<2x512xf32>
    %232 = tpu.matmul %228, %20, %cst_77 {dimension_numbers = #tpu.dot_dimension_numbers<[1], [0], [0], [1], [0, 0, 1, 1], [], []>} : vector<2x160xf32>, vector<160x512xf32>, vector<2x512xf32> -> vector<2x512xf32>
    %233 = arith.addf %231, %232 : vector<2x512xf32>
    %234 = vector.extract_strided_slice %233 {offsets = [0, 0], sizes = [2, 128], strides = [1, 1]} : vector<2x512xf32> to vector<2x128xf32>
    %235 = arith.negf %234 : vector<2x128xf32>
    %236 = math.exp %235 : vector<2x128xf32>
    %cst_78 = arith.constant 1.000000e+00 : f32
    %237 = vector.broadcast %cst_78 : f32 to vector<2x128xf32>
    %238 = arith.addf %237, %236 : vector<2x128xf32>
    %239 = arith.divf %237, %238 : vector<2x128xf32>
    %240 = vector.extract_strided_slice %233 {offsets = [0, 128], sizes = [2, 128], strides = [1, 1]} : vector<2x512xf32> to vector<2x128xf32>
    %241 = arith.negf %240 : vector<2x128xf32>
    %242 = math.exp %241 : vector<2x128xf32>
    %cst_79 = arith.constant 1.000000e+00 : f32
    %243 = vector.broadcast %cst_79 : f32 to vector<2x128xf32>
    %244 = arith.addf %243, %242 : vector<2x128xf32>
    %245 = arith.divf %243, %244 : vector<2x128xf32>
    %246 = vector.extract_strided_slice %233 {offsets = [0, 256], sizes = [2, 128], strides = [1, 1]} : vector<2x512xf32> to vector<2x128xf32>
    %247 = math.tanh %246 : vector<2x128xf32>
    %248 = vector.extract_strided_slice %233 {offsets = [0, 384], sizes = [2, 128], strides = [1, 1]} : vector<2x512xf32> to vector<2x128xf32>
    %249 = arith.negf %248 : vector<2x128xf32>
    %250 = math.exp %249 : vector<2x128xf32>
    %cst_80 = arith.constant 1.000000e+00 : f32
    %251 = vector.broadcast %cst_80 : f32 to vector<2x128xf32>
    %252 = arith.addf %251, %250 : vector<2x128xf32>
    %253 = arith.divf %251, %252 : vector<2x128xf32>
    %254 = arith.mulf %245, %195 : vector<2x128xf32>
    %255 = arith.mulf %239, %247 : vector<2x128xf32>
    %256 = arith.addf %254, %255 : vector<2x128xf32>
    %257 = math.tanh %256 : vector<2x128xf32>
    %258 = arith.mulf %253, %257 : vector<2x128xf32>
    %259 = arith.index_cast %c3_i32 : i32 to index
    %c0_81 = arith.constant 0 : index
    %c0_82 = arith.constant 0 : index
    %260 = vector.load %arg10[%259, %c0_81, %c0_82] : memref<8x2x128xf32, #tpu.memory_space<vmem>>, vector<1x2x128xf32>
    %261 = vector.shape_cast %260 : vector<1x2x128xf32> to vector<2x128xf32>
    %262 = vector.shape_cast %258 : vector<2x128xf32> to vector<1x2x128xf32>
    tpu.vector_store %arg10[%259, %c0_81, %c0_82], %262 {strides = array<i32>} : memref<8x2x128xf32, #tpu.memory_space<vmem>>, vector<1x2x128xf32>,
    %263 = arith.index_cast %c3_i32 : i32 to index
    %c0_83 = arith.constant 0 : index
    %c0_84 = arith.constant 0 : index
    %264 = vector.load %arg11[%263, %c0_83, %c0_84] : memref<8x2x128xf32, #tpu.memory_space<vmem>>, vector<1x2x128xf32>
    %265 = vector.shape_cast %264 : vector<1x2x128xf32> to vector<2x128xf32>
    %266 = vector.shape_cast %256 : vector<2x128xf32> to vector<1x2x128xf32>
    tpu.vector_store %arg11[%263, %c0_83, %c0_84], %266 {strides = array<i32>} : memref<8x2x128xf32, #tpu.memory_space<vmem>>, vector<1x2x128xf32>,
    %c4_i32 = arith.constant 4 : i32
    %cst_85 = arith.constant dense<0.000000e+00> : vector<2x128xf32>
    %267 = tpu.matmul %256, %19, %cst_85 {dimension_numbers = #tpu.dot_dimension_numbers<[1], [0], [0], [1], [0, 0, 1, 1], [], []>} : vector<2x128xf32>, vector<128x128xf32>, vector<2x128xf32> -> vector<2x128xf32>
    %268 = vector.shape_cast %267 : vector<2x128xf32> to vector<2x1x128xf32>
    %269 = vector.broadcast %268 : vector<2x1x128xf32> to vector<2x8x128xf32>
    %270 = arith.addf %8, %269 : vector<2x8x128xf32>
    %271 = math.tanh %270 : vector<2x8x128xf32>
    %272 = vector.shape_cast %9 : vector<1x128xf32> to vector<1x1x128xf32>
    %273 = vector.broadcast %272 : vector<1x1x128xf32> to vector<2x8x128xf32>
    %274 = arith.mulf %271, %273 : vector<2x8x128xf32>
    %cst_86 = arith.constant dense<0.000000e+00> : vector<2x8xf32>
    %275 = vector.multi_reduction <add>, %274, %cst_86 [2] : vector<2x8x128xf32> to vector<2x8xf32>
    %cst_87 = arith.constant dense<0xFF800000> : vector<2xf32>
    %276 = vector.multi_reduction <maximumf>, %275, %cst_87 [1] : vector<2x8xf32> to vector<2xf32>
    %277 = vector.shape_cast %276 : vector<2xf32> to vector<2x1xf32>
    %278 = vector.broadcast %277 : vector<2x1xf32> to vector<2x8xf32>
    %279 = arith.subf %275, %278 : vector<2x8xf32>
    %280 = math.exp %279 : vector<2x8xf32>
    %cst_88 = arith.constant dense<0.000000e+00> : vector<2xf32>
    %281 = vector.multi_reduction <add>, %280, %cst_88 [1] : vector<2x8xf32> to vector<2xf32>
    %282 = vector.shape_cast %281 : vector<2xf32> to vector<2x1xf32>
    %283 = tpu.reciprocal %282 {approx = true} : vector<2x1xf32> -> vector<2x1xf32>
    %284 = vector.broadcast %283 : vector<2x1xf32> to vector<2x8xf32>
    %285 = arith.mulf %280, %284 : vector<2x8xf32>
    %286 = vector.shape_cast %285 : vector<2x8xf32> to vector<2x1x8xf32>
    "tpu.trace_start"() <{level = 10 : i32, message = "bqt,bte->bqe"}> : () -> ()
    %cst_89 = arith.constant dense<0.000000e+00> : vector<2x1x32xf32>
    %287 = tpu.matmul %286, %0, %cst_89 {dimension_numbers = #tpu.dot_dimension_numbers<[2], [1], [1], [2], [0, 0, 0, 1, 1, 2], [0], [0]>} : vector<2x1x8xf32>, vector<2x8x32xf32>, vector<2x1x32xf32> -> vector<2x1x32xf32>
    "tpu.trace_stop"() : () -> ()
    %288 = vector.shape_cast %287 : vector<2x1x32xf32> to vector<2x32xf32>
    %289 = tpu.concatenate %258, %288 in 1 : vector<2x128xf32>, vector<2x32xf32> -> vector<2x160xf32>
    %290 = arith.index_cast %c4_i32 : i32 to index
    %c0_90 = arith.constant 0 : index
    %c0_91 = arith.constant 0 : index
    %291 = vector.load %arg12[%290, %c0_90, %c0_91] : memref<8x2x512xf32, #tpu.memory_space<vmem>>, vector<1x2x512xf32>
    %292 = vector.shape_cast %291 : vector<1x2x512xf32> to vector<2x512xf32>
    %cst_92 = arith.constant dense<0.000000e+00> : vector<2x512xf32>
    %293 = tpu.matmul %289, %20, %cst_92 {dimension_numbers = #tpu.dot_dimension_numbers<[1], [0], [0], [1], [0, 0, 1, 1], [], []>} : vector<2x160xf32>, vector<160x512xf32>, vector<2x512xf32> -> vector<2x512xf32>
    %294 = arith.addf %292, %293 : vector<2x512xf32>
    %295 = vector.extract_strided_slice %294 {offsets = [0, 0], sizes = [2, 128], strides = [1, 1]} : vector<2x512xf32> to vector<2x128xf32>
    %296 = arith.negf %295 : vector<2x128xf32>
    %297 = math.exp %296 : vector<2x128xf32>
    %cst_93 = arith.constant 1.000000e+00 : f32
    %298 = vector.broadcast %cst_93 : f32 to vector<2x128xf32>
    %299 = arith.addf %298, %297 : vector<2x128xf32>
    %300 = arith.divf %298, %299 : vector<2x128xf32>
    %301 = vector.extract_strided_slice %294 {offsets = [0, 128], sizes = [2, 128], strides = [1, 1]} : vector<2x512xf32> to vector<2x128xf32>
    %302 = arith.negf %301 : vector<2x128xf32>
    %303 = math.exp %302 : vector<2x128xf32>
    %cst_94 = arith.constant 1.000000e+00 : f32
    %304 = vector.broadcast %cst_94 : f32 to vector<2x128xf32>
    %305 = arith.addf %304, %303 : vector<2x128xf32>
    %306 = arith.divf %304, %305 : vector<2x128xf32>
    %307 = vector.extract_strided_slice %294 {offsets = [0, 256], sizes = [2, 128], strides = [1, 1]} : vector<2x512xf32> to vector<2x128xf32>
    %308 = math.tanh %307 : vector<2x128xf32>
    %309 = vector.extract_strided_slice %294 {offsets = [0, 384], sizes = [2, 128], strides = [1, 1]} : vector<2x512xf32> to vector<2x128xf32>
    %310 = arith.negf %309 : vector<2x128xf32>
    %311 = math.exp %310 : vector<2x128xf32>
    %cst_95 = arith.constant 1.000000e+00 : f32
    %312 = vector.broadcast %cst_95 : f32 to vector<2x128xf32>
    %313 = arith.addf %312, %311 : vector<2x128xf32>
    %314 = arith.divf %312, %313 : vector<2x128xf32>
    %315 = arith.mulf %306, %256 : vector<2x128xf32>
    %316 = arith.mulf %300, %308 : vector<2x128xf32>
    %317 = arith.addf %315, %316 : vector<2x128xf32>
    %318 = math.tanh %317 : vector<2x128xf32>
    %319 = arith.mulf %314, %318 : vector<2x128xf32>
    %320 = arith.index_cast %c4_i32 : i32 to index
    %c0_96 = arith.constant 0 : index
    %c0_97 = arith.constant 0 : index
    %321 = vector.load %arg10[%320, %c0_96, %c0_97] : memref<8x2x128xf32, #tpu.memory_space<vmem>>, vector<1x2x128xf32>
    %322 = vector.shape_cast %321 : vector<1x2x128xf32> to vector<2x128xf32>
    %323 = vector.shape_cast %319 : vector<2x128xf32> to vector<1x2x128xf32>
    tpu.vector_store %arg10[%320, %c0_96, %c0_97], %323 {strides = array<i32>} : memref<8x2x128xf32, #tpu.memory_space<vmem>>, vector<1x2x128xf32>,
    %324 = arith.index_cast %c4_i32 : i32 to index
    %c0_98 = arith.constant 0 : index
    %c0_99 = arith.constant 0 : index
    %325 = vector.load %arg11[%324, %c0_98, %c0_99] : memref<8x2x128xf32, #tpu.memory_space<vmem>>, vector<1x2x128xf32>
    %326 = vector.shape_cast %325 : vector<1x2x128xf32> to vector<2x128xf32>
    %327 = vector.shape_cast %317 : vector<2x128xf32> to vector<1x2x128xf32>
    tpu.vector_store %arg11[%324, %c0_98, %c0_99], %327 {strides = array<i32>} : memref<8x2x128xf32, #tpu.memory_space<vmem>>, vector<1x2x128xf32>,
    %c5_i32 = arith.constant 5 : i32
    %cst_100 = arith.constant dense<0.000000e+00> : vector<2x128xf32>
    %328 = tpu.matmul %317, %19, %cst_100 {dimension_numbers = #tpu.dot_dimension_numbers<[1], [0], [0], [1], [0, 0, 1, 1], [], []>} : vector<2x128xf32>, vector<128x128xf32>, vector<2x128xf32> -> vector<2x128xf32>
    %329 = vector.shape_cast %328 : vector<2x128xf32> to vector<2x1x128xf32>
    %330 = vector.broadcast %329 : vector<2x1x128xf32> to vector<2x8x128xf32>
    %331 = arith.addf %8, %330 : vector<2x8x128xf32>
    %332 = math.tanh %331 : vector<2x8x128xf32>
    %333 = vector.shape_cast %9 : vector<1x128xf32> to vector<1x1x128xf32>
    %334 = vector.broadcast %333 : vector<1x1x128xf32> to vector<2x8x128xf32>
    %335 = arith.mulf %332, %334 : vector<2x8x128xf32>
    %cst_101 = arith.constant dense<0.000000e+00> : vector<2x8xf32>
    %336 = vector.multi_reduction <add>, %335, %cst_101 [2] : vector<2x8x128xf32> to vector<2x8xf32>
    %cst_102 = arith.constant dense<0xFF800000> : vector<2xf32>
    %337 = vector.multi_reduction <maximumf>, %336, %cst_102 [1] : vector<2x8xf32> to vector<2xf32>
    %338 = vector.shape_cast %337 : vector<2xf32> to vector<2x1xf32>
    %339 = vector.broadcast %338 : vector<2x1xf32> to vector<2x8xf32>
    %340 = arith.subf %336, %339 : vector<2x8xf32>
    %341 = math.exp %340 : vector<2x8xf32>
    %cst_103 = arith.constant dense<0.000000e+00> : vector<2xf32>
    %342 = vector.multi_reduction <add>, %341, %cst_103 [1] : vector<2x8xf32> to vector<2xf32>
    %343 = vector.shape_cast %342 : vector<2xf32> to vector<2x1xf32>
    %344 = tpu.reciprocal %343 {approx = true} : vector<2x1xf32> -> vector<2x1xf32>
    %345 = vector.broadcast %344 : vector<2x1xf32> to vector<2x8xf32>
    %346 = arith.mulf %341, %345 : vector<2x8xf32>
    %347 = vector.shape_cast %346 : vector<2x8xf32> to vector<2x1x8xf32>
    "tpu.trace_start"() <{level = 10 : i32, message = "bqt,bte->bqe"}> : () -> ()
    %cst_104 = arith.constant dense<0.000000e+00> : vector<2x1x32xf32>
    %348 = tpu.matmul %347, %0, %cst_104 {dimension_numbers = #tpu.dot_dimension_numbers<[2], [1], [1], [2], [0, 0, 0, 1, 1, 2], [0], [0]>} : vector<2x1x8xf32>, vector<2x8x32xf32>, vector<2x1x32xf32> -> vector<2x1x32xf32>
    "tpu.trace_stop"() : () -> ()
    %349 = vector.shape_cast %348 : vector<2x1x32xf32> to vector<2x32xf32>
    %350 = tpu.concatenate %319, %349 in 1 : vector<2x128xf32>, vector<2x32xf32> -> vector<2x160xf32>
    %351 = arith.index_cast %c5_i32 : i32 to index
    %c0_105 = arith.constant 0 : index
    %c0_106 = arith.constant 0 : index
    %352 = vector.load %arg12[%351, %c0_105, %c0_106] : memref<8x2x512xf32, #tpu.memory_space<vmem>>, vector<1x2x512xf32>
    %353 = vector.shape_cast %352 : vector<1x2x512xf32> to vector<2x512xf32>
    %cst_107 = arith.constant dense<0.000000e+00> : vector<2x512xf32>
    %354 = tpu.matmul %350, %20, %cst_107 {dimension_numbers = #tpu.dot_dimension_numbers<[1], [0], [0], [1], [0, 0, 1, 1], [], []>} : vector<2x160xf32>, vector<160x512xf32>, vector<2x512xf32> -> vector<2x512xf32>
    %355 = arith.addf %353, %354 : vector<2x512xf32>
    %356 = vector.extract_strided_slice %355 {offsets = [0, 0], sizes = [2, 128], strides = [1, 1]} : vector<2x512xf32> to vector<2x128xf32>
    %357 = arith.negf %356 : vector<2x128xf32>
    %358 = math.exp %357 : vector<2x128xf32>
    %cst_108 = arith.constant 1.000000e+00 : f32
    %359 = vector.broadcast %cst_108 : f32 to vector<2x128xf32>
    %360 = arith.addf %359, %358 : vector<2x128xf32>
    %361 = arith.divf %359, %360 : vector<2x128xf32>
    %362 = vector.extract_strided_slice %355 {offsets = [0, 128], sizes = [2, 128], strides = [1, 1]} : vector<2x512xf32> to vector<2x128xf32>
    %363 = arith.negf %362 : vector<2x128xf32>
    %364 = math.exp %363 : vector<2x128xf32>
    %cst_109 = arith.constant 1.000000e+00 : f32
    %365 = vector.broadcast %cst_109 : f32 to vector<2x128xf32>
    %366 = arith.addf %365, %364 : vector<2x128xf32>
    %367 = arith.divf %365, %366 : vector<2x128xf32>
    %368 = vector.extract_strided_slice %355 {offsets = [0, 256], sizes = [2, 128], strides = [1, 1]} : vector<2x512xf32> to vector<2x128xf32>
    %369 = math.tanh %368 : vector<2x128xf32>
    %370 = vector.extract_strided_slice %355 {offsets = [0, 384], sizes = [2, 128], strides = [1, 1]} : vector<2x512xf32> to vector<2x128xf32>
    %371 = arith.negf %370 : vector<2x128xf32>
    %372 = math.exp %371 : vector<2x128xf32>
    %cst_110 = arith.constant 1.000000e+00 : f32
    %373 = vector.broadcast %cst_110 : f32 to vector<2x128xf32>
    %374 = arith.addf %373, %372 : vector<2x128xf32>
    %375 = arith.divf %373, %374 : vector<2x128xf32>
    %376 = arith.mulf %367, %317 : vector<2x128xf32>
    %377 = arith.mulf %361, %369 : vector<2x128xf32>
    %378 = arith.addf %376, %377 : vector<2x128xf32>
    %379 = math.tanh %378 : vector<2x128xf32>
    %380 = arith.mulf %375, %379 : vector<2x128xf32>
    %381 = arith.index_cast %c5_i32 : i32 to index
    %c0_111 = arith.constant 0 : index
    %c0_112 = arith.constant 0 : index
    %382 = vector.load %arg10[%381, %c0_111, %c0_112] : memref<8x2x128xf32, #tpu.memory_space<vmem>>, vector<1x2x128xf32>
    %383 = vector.shape_cast %382 : vector<1x2x128xf32> to vector<2x128xf32>
    %384 = vector.shape_cast %380 : vector<2x128xf32> to vector<1x2x128xf32>
    tpu.vector_store %arg10[%381, %c0_111, %c0_112], %384 {strides = array<i32>} : memref<8x2x128xf32, #tpu.memory_space<vmem>>, vector<1x2x128xf32>,
    %385 = arith.index_cast %c5_i32 : i32 to index
    %c0_113 = arith.constant 0 : index
    %c0_114 = arith.constant 0 : index
    %386 = vector.load %arg11[%385, %c0_113, %c0_114] : memref<8x2x128xf32, #tpu.memory_space<vmem>>, vector<1x2x128xf32>
    %387 = vector.shape_cast %386 : vector<1x2x128xf32> to vector<2x128xf32>
    %388 = vector.shape_cast %378 : vector<2x128xf32> to vector<1x2x128xf32>
    tpu.vector_store %arg11[%385, %c0_113, %c0_114], %388 {strides = array<i32>} : memref<8x2x128xf32, #tpu.memory_space<vmem>>, vector<1x2x128xf32>,
    %c6_i32 = arith.constant 6 : i32
    %cst_115 = arith.constant dense<0.000000e+00> : vector<2x128xf32>
    %389 = tpu.matmul %378, %19, %cst_115 {dimension_numbers = #tpu.dot_dimension_numbers<[1], [0], [0], [1], [0, 0, 1, 1], [], []>} : vector<2x128xf32>, vector<128x128xf32>, vector<2x128xf32> -> vector<2x128xf32>
    %390 = vector.shape_cast %389 : vector<2x128xf32> to vector<2x1x128xf32>
    %391 = vector.broadcast %390 : vector<2x1x128xf32> to vector<2x8x128xf32>
    %392 = arith.addf %8, %391 : vector<2x8x128xf32>
    %393 = math.tanh %392 : vector<2x8x128xf32>
    %394 = vector.shape_cast %9 : vector<1x128xf32> to vector<1x1x128xf32>
    %395 = vector.broadcast %394 : vector<1x1x128xf32> to vector<2x8x128xf32>
    %396 = arith.mulf %393, %395 : vector<2x8x128xf32>
    %cst_116 = arith.constant dense<0.000000e+00> : vector<2x8xf32>
    %397 = vector.multi_reduction <add>, %396, %cst_116 [2] : vector<2x8x128xf32> to vector<2x8xf32>
    %cst_117 = arith.constant dense<0xFF800000> : vector<2xf32>
    %398 = vector.multi_reduction <maximumf>, %397, %cst_117 [1] : vector<2x8xf32> to vector<2xf32>
    %399 = vector.shape_cast %398 : vector<2xf32> to vector<2x1xf32>
    %400 = vector.broadcast %399 : vector<2x1xf32> to vector<2x8xf32>
    %401 = arith.subf %397, %400 : vector<2x8xf32>
    %402 = math.exp %401 : vector<2x8xf32>
    %cst_118 = arith.constant dense<0.000000e+00> : vector<2xf32>
    %403 = vector.multi_reduction <add>, %402, %cst_118 [1] : vector<2x8xf32> to vector<2xf32>
    %404 = vector.shape_cast %403 : vector<2xf32> to vector<2x1xf32>
    %405 = tpu.reciprocal %404 {approx = true} : vector<2x1xf32> -> vector<2x1xf32>
    %406 = vector.broadcast %405 : vector<2x1xf32> to vector<2x8xf32>
    %407 = arith.mulf %402, %406 : vector<2x8xf32>
    %408 = vector.shape_cast %407 : vector<2x8xf32> to vector<2x1x8xf32>
    "tpu.trace_start"() <{level = 10 : i32, message = "bqt,bte->bqe"}> : () -> ()
    %cst_119 = arith.constant dense<0.000000e+00> : vector<2x1x32xf32>
    %409 = tpu.matmul %408, %0, %cst_119 {dimension_numbers = #tpu.dot_dimension_numbers<[2], [1], [1], [2], [0, 0, 0, 1, 1, 2], [0], [0]>} : vector<2x1x8xf32>, vector<2x8x32xf32>, vector<2x1x32xf32> -> vector<2x1x32xf32>
    "tpu.trace_stop"() : () -> ()
    %410 = vector.shape_cast %409 : vector<2x1x32xf32> to vector<2x32xf32>
    %411 = tpu.concatenate %380, %410 in 1 : vector<2x128xf32>, vector<2x32xf32> -> vector<2x160xf32>
    %412 = arith.index_cast %c6_i32 : i32 to index
    %c0_120 = arith.constant 0 : index
    %c0_121 = arith.constant 0 : index
    %413 = vector.load %arg12[%412, %c0_120, %c0_121] : memref<8x2x512xf32, #tpu.memory_space<vmem>>, vector<1x2x512xf32>
    %414 = vector.shape_cast %413 : vector<1x2x512xf32> to vector<2x512xf32>
    %cst_122 = arith.constant dense<0.000000e+00> : vector<2x512xf32>
    %415 = tpu.matmul %411, %20, %cst_122 {dimension_numbers = #tpu.dot_dimension_numbers<[1], [0], [0], [1], [0, 0, 1, 1], [], []>} : vector<2x160xf32>, vector<160x512xf32>, vector<2x512xf32> -> vector<2x512xf32>
    %416 = arith.addf %414, %415 : vector<2x512xf32>
    %417 = vector.extract_strided_slice %416 {offsets = [0, 0], sizes = [2, 128], strides = [1, 1]} : vector<2x512xf32> to vector<2x128xf32>
    %418 = arith.negf %417 : vector<2x128xf32>
    %419 = math.exp %418 : vector<2x128xf32>
    %cst_123 = arith.constant 1.000000e+00 : f32
    %420 = vector.broadcast %cst_123 : f32 to vector<2x128xf32>
    %421 = arith.addf %420, %419 : vector<2x128xf32>
    %422 = arith.divf %420, %421 : vector<2x128xf32>
    %423 = vector.extract_strided_slice %416 {offsets = [0, 128], sizes = [2, 128], strides = [1, 1]} : vector<2x512xf32> to vector<2x128xf32>
    %424 = arith.negf %423 : vector<2x128xf32>
    %425 = math.exp %424 : vector<2x128xf32>
    %cst_124 = arith.constant 1.000000e+00 : f32
    %426 = vector.broadcast %cst_124 : f32 to vector<2x128xf32>
    %427 = arith.addf %426, %425 : vector<2x128xf32>
    %428 = arith.divf %426, %427 : vector<2x128xf32>
    %429 = vector.extract_strided_slice %416 {offsets = [0, 256], sizes = [2, 128], strides = [1, 1]} : vector<2x512xf32> to vector<2x128xf32>
    %430 = math.tanh %429 : vector<2x128xf32>
    %431 = vector.extract_strided_slice %416 {offsets = [0, 384], sizes = [2, 128], strides = [1, 1]} : vector<2x512xf32> to vector<2x128xf32>
    %432 = arith.negf %431 : vector<2x128xf32>
    %433 = math.exp %432 : vector<2x128xf32>
    %cst_125 = arith.constant 1.000000e+00 : f32
    %434 = vector.broadcast %cst_125 : f32 to vector<2x128xf32>
    %435 = arith.addf %434, %433 : vector<2x128xf32>
    %436 = arith.divf %434, %435 : vector<2x128xf32>
    %437 = arith.mulf %428, %378 : vector<2x128xf32>
    %438 = arith.mulf %422, %430 : vector<2x128xf32>
    %439 = arith.addf %437, %438 : vector<2x128xf32>
    %440 = math.tanh %439 : vector<2x128xf32>
    %441 = arith.mulf %436, %440 : vector<2x128xf32>
    %442 = arith.index_cast %c6_i32 : i32 to index
    %c0_126 = arith.constant 0 : index
    %c0_127 = arith.constant 0 : index
    %443 = vector.load %arg10[%442, %c0_126, %c0_127] : memref<8x2x128xf32, #tpu.memory_space<vmem>>, vector<1x2x128xf32>
    %444 = vector.shape_cast %443 : vector<1x2x128xf32> to vector<2x128xf32>
    %445 = vector.shape_cast %441 : vector<2x128xf32> to vector<1x2x128xf32>
    tpu.vector_store %arg10[%442, %c0_126, %c0_127], %445 {strides = array<i32>} : memref<8x2x128xf32, #tpu.memory_space<vmem>>, vector<1x2x128xf32>,
    %446 = arith.index_cast %c6_i32 : i32 to index
    %c0_128 = arith.constant 0 : index
    %c0_129 = arith.constant 0 : index
    %447 = vector.load %arg11[%446, %c0_128, %c0_129] : memref<8x2x128xf32, #tpu.memory_space<vmem>>, vector<1x2x128xf32>
    %448 = vector.shape_cast %447 : vector<1x2x128xf32> to vector<2x128xf32>
    %449 = vector.shape_cast %439 : vector<2x128xf32> to vector<1x2x128xf32>
    tpu.vector_store %arg11[%446, %c0_128, %c0_129], %449 {strides = array<i32>} : memref<8x2x128xf32, #tpu.memory_space<vmem>>, vector<1x2x128xf32>,
    %c7_i32 = arith.constant 7 : i32
    %cst_130 = arith.constant dense<0.000000e+00> : vector<2x128xf32>
    %450 = tpu.matmul %439, %19, %cst_130 {dimension_numbers = #tpu.dot_dimension_numbers<[1], [0], [0], [1], [0, 0, 1, 1], [], []>} : vector<2x128xf32>, vector<128x128xf32>, vector<2x128xf32> -> vector<2x128xf32>
    %451 = vector.shape_cast %450 : vector<2x128xf32> to vector<2x1x128xf32>
    %452 = vector.broadcast %451 : vector<2x1x128xf32> to vector<2x8x128xf32>
    %453 = arith.addf %8, %452 : vector<2x8x128xf32>
    %454 = math.tanh %453 : vector<2x8x128xf32>
    %455 = vector.shape_cast %9 : vector<1x128xf32> to vector<1x1x128xf32>
    %456 = vector.broadcast %455 : vector<1x1x128xf32> to vector<2x8x128xf32>
    %457 = arith.mulf %454, %456 : vector<2x8x128xf32>
    %cst_131 = arith.constant dense<0.000000e+00> : vector<2x8xf32>
    %458 = vector.multi_reduction <add>, %457, %cst_131 [2] : vector<2x8x128xf32> to vector<2x8xf32>
    %cst_132 = arith.constant dense<0xFF800000> : vector<2xf32>
    %459 = vector.multi_reduction <maximumf>, %458, %cst_132 [1] : vector<2x8xf32> to vector<2xf32>
    %460 = vector.shape_cast %459 : vector<2xf32> to vector<2x1xf32>
    %461 = vector.broadcast %460 : vector<2x1xf32> to vector<2x8xf32>
    %462 = arith.subf %458, %461 : vector<2x8xf32>
    %463 = math.exp %462 : vector<2x8xf32>
    %cst_133 = arith.constant dense<0.000000e+00> : vector<2xf32>
    %464 = vector.multi_reduction <add>, %463, %cst_133 [1] : vector<2x8xf32> to vector<2xf32>
    %465 = vector.shape_cast %464 : vector<2xf32> to vector<2x1xf32>
    %466 = tpu.reciprocal %465 {approx = true} : vector<2x1xf32> -> vector<2x1xf32>
    %467 = vector.broadcast %466 : vector<2x1xf32> to vector<2x8xf32>
    %468 = arith.mulf %463, %467 : vector<2x8xf32>
    %469 = vector.shape_cast %468 : vector<2x8xf32> to vector<2x1x8xf32>
    "tpu.trace_start"() <{level = 10 : i32, message = "bqt,bte->bqe"}> : () -> ()
    %cst_134 = arith.constant dense<0.000000e+00> : vector<2x1x32xf32>
    %470 = tpu.matmul %469, %0, %cst_134 {dimension_numbers = #tpu.dot_dimension_numbers<[2], [1], [1], [2], [0, 0, 0, 1, 1, 2], [0], [0]>} : vector<2x1x8xf32>, vector<2x8x32xf32>, vector<2x1x32xf32> -> vector<2x1x32xf32>
    "tpu.trace_stop"() : () -> ()
    %471 = vector.shape_cast %470 : vector<2x1x32xf32> to vector<2x32xf32>
    %472 = tpu.concatenate %441, %471 in 1 : vector<2x128xf32>, vector<2x32xf32> -> vector<2x160xf32>
    %473 = arith.index_cast %c7_i32 : i32 to index
    %c0_135 = arith.constant 0 : index
    %c0_136 = arith.constant 0 : index
    %474 = vector.load %arg12[%473, %c0_135, %c0_136] : memref<8x2x512xf32, #tpu.memory_space<vmem>>, vector<1x2x512xf32>
    %475 = vector.shape_cast %474 : vector<1x2x512xf32> to vector<2x512xf32>
    %cst_137 = arith.constant dense<0.000000e+00> : vector<2x512xf32>
    %476 = tpu.matmul %472, %20, %cst_137 {dimension_numbers = #tpu.dot_dimension_numbers<[1], [0], [0], [1], [0, 0, 1, 1], [], []>} : vector<2x160xf32>, vector<160x512xf32>, vector<2x512xf32> -> vector<2x512xf32>
    %477 = arith.addf %475, %476 : vector<2x512xf32>
    %478 = vector.extract_strided_slice %477 {offsets = [0, 0], sizes = [2, 128], strides = [1, 1]} : vector<2x512xf32> to vector<2x128xf32>
    %479 = arith.negf %478 : vector<2x128xf32>
    %480 = math.exp %479 : vector<2x128xf32>
    %cst_138 = arith.constant 1.000000e+00 : f32
    %481 = vector.broadcast %cst_138 : f32 to vector<2x128xf32>
    %482 = arith.addf %481, %480 : vector<2x128xf32>
    %483 = arith.divf %481, %482 : vector<2x128xf32>
    %484 = vector.extract_strided_slice %477 {offsets = [0, 128], sizes = [2, 128], strides = [1, 1]} : vector<2x512xf32> to vector<2x128xf32>
    %485 = arith.negf %484 : vector<2x128xf32>
    %486 = math.exp %485 : vector<2x128xf32>
    %cst_139 = arith.constant 1.000000e+00 : f32
    %487 = vector.broadcast %cst_139 : f32 to vector<2x128xf32>
    %488 = arith.addf %487, %486 : vector<2x128xf32>
    %489 = arith.divf %487, %488 : vector<2x128xf32>
    %490 = vector.extract_strided_slice %477 {offsets = [0, 256], sizes = [2, 128], strides = [1, 1]} : vector<2x512xf32> to vector<2x128xf32>
    %491 = math.tanh %490 : vector<2x128xf32>
    %492 = vector.extract_strided_slice %477 {offsets = [0, 384], sizes = [2, 128], strides = [1, 1]} : vector<2x512xf32> to vector<2x128xf32>
    %493 = arith.negf %492 : vector<2x128xf32>
    %494 = math.exp %493 : vector<2x128xf32>
    %cst_140 = arith.constant 1.000000e+00 : f32
    %495 = vector.broadcast %cst_140 : f32 to vector<2x128xf32>
    %496 = arith.addf %495, %494 : vector<2x128xf32>
    %497 = arith.divf %495, %496 : vector<2x128xf32>
    %498 = arith.mulf %489, %439 : vector<2x128xf32>
    %499 = arith.mulf %483, %491 : vector<2x128xf32>
    %500 = arith.addf %498, %499 : vector<2x128xf32>
    %501 = math.tanh %500 : vector<2x128xf32>
    %502 = arith.mulf %497, %501 : vector<2x128xf32>
    %503 = arith.index_cast %c7_i32 : i32 to index
    %c0_141 = arith.constant 0 : index
    %c0_142 = arith.constant 0 : index
    %504 = vector.load %arg10[%503, %c0_141, %c0_142] : memref<8x2x128xf32, #tpu.memory_space<vmem>>, vector<1x2x128xf32>
    %505 = vector.shape_cast %504 : vector<1x2x128xf32> to vector<2x128xf32>
    %506 = vector.shape_cast %502 : vector<2x128xf32> to vector<1x2x128xf32>
    tpu.vector_store %arg10[%503, %c0_141, %c0_142], %506 {strides = array<i32>} : memref<8x2x128xf32, #tpu.memory_space<vmem>>, vector<1x2x128xf32>,
    %507 = arith.index_cast %c7_i32 : i32 to index
    %c0_143 = arith.constant 0 : index
    %c0_144 = arith.constant 0 : index
    %508 = vector.load %arg11[%507, %c0_143, %c0_144] : memref<8x2x128xf32, #tpu.memory_space<vmem>>, vector<1x2x128xf32>
    %509 = vector.shape_cast %508 : vector<1x2x128xf32> to vector<2x128xf32>
    %510 = vector.shape_cast %500 : vector<2x128xf32> to vector<1x2x128xf32>
    tpu.vector_store %arg11[%507, %c0_143, %c0_144], %510 {strides = array<i32>} : memref<8x2x128xf32, #tpu.memory_space<vmem>>, vector<1x2x128xf32>,
    %c8_i32 = arith.constant 8 : i32
    return
  }
  func.func @transform_0(%arg0: i32) -> (i32, i32, i32) {
    %c0_i32 = arith.constant 0 : i32
    %c0_i32_0 = arith.constant 0 : i32
    %c0_i32_1 = arith.constant 0 : i32
    return %c0_i32, %arg0, %c0_i32_0 : i32, i32, i32
  }
  func.func @transform_1(%arg0: i32) -> (i32, i32, i32) {
    %c0_i32 = arith.constant 0 : i32
    %c0_i32_0 = arith.constant 0 : i32
    %c0_i32_1 = arith.constant 0 : i32
    return %arg0, %c0_i32, %c0_i32_0 : i32, i32, i32
  }
  func.func @transform_2(%arg0: i32) -> (i32, i32) {
    %c0_i32 = arith.constant 0 : i32
    %c0_i32_0 = arith.constant 0 : i32
    %c0_i32_1 = arith.constant 0 : i32
    return %c0_i32, %c0_i32_0 : i32, i32
  }
  func.func @transform_3(%arg0: i32) -> (i32, i32) {
    %c0_i32 = arith.constant 0 : i32
    %c0_i32_0 = arith.constant 0 : i32
    %c0_i32_1 = arith.constant 0 : i32
    return %c0_i32, %c0_i32_0 : i32, i32
  }
  func.func @transform_4(%arg0: i32) -> (i32, i32) {
    %c0_i32 = arith.constant 0 : i32
    %c0_i32_0 = arith.constant 0 : i32
    %c0_i32_1 = arith.constant 0 : i32
    return %c0_i32, %c0_i32_0 : i32, i32
  }
  func.func @transform_5(%arg0: i32) -> (i32, i32) {
    %c0_i32 = arith.constant 0 : i32
    %c0_i32_0 = arith.constant 0 : i32
    %c0_i32_1 = arith.constant 0 : i32
    return %c0_i32, %c0_i32_0 : i32, i32
  }
  func.func @transform_6(%arg0: i32) -> (i32, i32) {
    %c0_i32 = arith.constant 0 : i32
    %c0_i32_0 = arith.constant 0 : i32
    %c0_i32_1 = arith.constant 0 : i32
    return %c0_i32, %c0_i32_0 : i32, i32
  }
  func.func @transform_7(%arg0: i32) -> (i32, i32) {
    %c0_i32 = arith.constant 0 : i32
    %c0_i32_0 = arith.constant 0 : i32
    %c0_i32_1 = arith.constant 0 : i32
    return %c0_i32, %c0_i32_0 : i32, i32
  }
  func.func @transform_8(%arg0: i32) -> (i32, i32) {
    %c0_i32 = arith.constant 0 : i32
    %c0_i32_0 = arith.constant 0 : i32
    %c0_i32_1 = arith.constant 0 : i32
    return %c0_i32, %c0_i32_0 : i32, i32
  }
  func.func @transform_9(%arg0: i32) -> (i32, i32, i32) {
    %c0_i32 = arith.constant 0 : i32
    %c0_i32_0 = arith.constant 0 : i32
    %c0_i32_1 = arith.constant 0 : i32
    return %c0_i32, %arg0, %c0_i32_0 : i32, i32, i32
  }
  func.func @transform_10(%arg0: i32) -> (i32, i32, i32) {
    %c0_i32 = arith.constant 0 : i32
    %c0_i32_0 = arith.constant 0 : i32
    %c0_i32_1 = arith.constant 0 : i32
    return %c0_i32, %arg0, %c0_i32_0 : i32, i32, i32
  }
}

</mosaic_0001>

<llo_original>
// kernel: attn_lstm_forward.1
$region0: #{attn_lstm_forward.1}
  #allocation0 [shape = 'u32[]', space=smem, size = 0x4, offset = 0x4, fixed_abs, tag = 'smem constant byte address 0x4 - core index']
  #allocation1 [shape = 'u32[144,128]{1,0:T(1,128)}', space=vmem, size = 0x12000, scoped, tag = 'internal scratch']
  #allocation2 [shape = 'f32[8,2,512]{2,1,0:T(2,128)}', space=vmem, size = 0x8000, scoped, tag = 'scratch operand']
  %s0 = inlined_call_operand.vmem [shape: f32[8,2,16], index: 0, kind: input, shape index: {}]
  %s1 = inlined_call_operand.vmem [shape: f32[2,8,32], index: 1, kind: input, shape index: {}]
  %s2 = inlined_call_operand.vmem [shape: f32[128,128], index: 2, kind: input, shape index: {}]
  %s3 = inlined_call_operand.vmem [shape: f32[32,128], index: 3, kind: input, shape index: {}]
  %s4 = inlined_call_operand.vmem [shape: f32[1,128], index: 4, kind: input, shape index: {}]
  %s5 = inlined_call_operand.vmem [shape: f32[1,128], index: 5, kind: input, shape index: {}]
  %s6 = inlined_call_operand.vmem [shape: f32[16,512], index: 6, kind: input, shape index: {}]
  %s7 = inlined_call_operand.vmem [shape: f32[160,512], index: 7, kind: input, shape index: {}]
  %s8 = inlined_call_operand.vmem [shape: f32[1,512], index: 8, kind: input, shape index: {}]
  %s9 = inlined_call_operand.vmem [shape: f32[8,2,128], index: 9, kind: output, shape index: {0}]
  %s10 = inlined_call_operand.vmem [shape: f32[8,2,128], index: 10, kind: output, shape index: {1}]
  %11 = xla_tuple %s9, %s10
  %s12 = sld [smem:[#allocation0]]
  $region54: #{attn_lstm_forward.1} parent=0
    _
  %s14 = ssub.s32 1, %s12
  %s15 = scalar_select 0, %s14, %s12
  // Predicated region
  $region2: #{attn_lstm_forward.1} parent=0 // pred_check
    _
  $region3: #{attn_lstm_forward.1} parent=0 // pred_check_branch
    %17 = sbr.rel (0) target = $region5
  $region4: #{attn_lstm_forward.1} parent=0 // pred_region
    _
  $region5: #{attn_lstm_forward.1} parent=0 // pred_fallthru
    _
  // Predicated region
  $region6: #{attn_lstm_forward.1} parent=0 // pred_check
    _
  $region7: #{attn_lstm_forward.1} parent=0 // pred_check_branch
    %19 = sbr.rel (0) target = $region9
  $region8: #{attn_lstm_forward.1} parent=0 // pred_region
    _
  $region9: #{attn_lstm_forward.1} parent=0 // pred_fallthru
    _
  // Predicated region
  $region10: #{attn_lstm_forward.1} parent=0 // pred_check
    _
  $region11: #{attn_lstm_forward.1} parent=0 // pred_check_branch
    %21 = sbr.rel (0) target = $region13
  $region12: #{attn_lstm_forward.1} parent=0 // pred_region
    _
  $region13: #{attn_lstm_forward.1} parent=0 // pred_fallthru
    _
  // Predicated region
  $region14: #{attn_lstm_forward.1} parent=0 // pred_check
    _
  $region15: #{attn_lstm_forward.1} parent=0 // pred_check_branch
    %23 = sbr.rel (0) target = $region17
  $region16: #{attn_lstm_forward.1} parent=0 // pred_region
    _
  $region17: #{attn_lstm_forward.1} parent=0 // pred_fallthru
    _
  // Predicated region
  $region18: #{attn_lstm_forward.1} parent=0 // pred_check
    _
  $region19: #{attn_lstm_forward.1} parent=0 // pred_check_branch
    %25 = sbr.rel (0) target = $region21
  $region20: #{attn_lstm_forward.1} parent=0 // pred_region
    _
  $region21: #{attn_lstm_forward.1} parent=0 // pred_fallthru
    _
  // Predicated region
  $region22: #{attn_lstm_forward.1} parent=0 // pred_check
    _
  $region23: #{attn_lstm_forward.1} parent=0 // pred_check_branch
    %27 = sbr.rel (0) target = $region25
  $region24: #{attn_lstm_forward.1} parent=0 // pred_region
    _
  $region25: #{attn_lstm_forward.1} parent=0 // pred_fallthru
    _
  // Predicated region
  $region26: #{attn_lstm_forward.1} parent=0 // pred_check
    _
  $region27: #{attn_lstm_forward.1} parent=0 // pred_check_branch
    %29 = sbr.rel (0) target = $region29
  $region28: #{attn_lstm_forward.1} parent=0 // pred_region
    _
  $region29: #{attn_lstm_forward.1} parent=0 // pred_fallthru
    _
  // Predicated region
  $region30: #{attn_lstm_forward.1} parent=0 // pred_check
    _
  $region31: #{attn_lstm_forward.1} parent=0 // pred_check_branch
    %31 = sbr.rel (0) target = $region33
  $region32: #{attn_lstm_forward.1} parent=0 // pred_region
    _
  $region33: #{attn_lstm_forward.1} parent=0 // pred_fallthru
    _
  // Predicated region
  $region34: #{attn_lstm_forward.1} parent=0 // pred_check
    _
  $region35: #{attn_lstm_forward.1} parent=0 // pred_check_branch
    %33 = sbr.rel (0) target = $region37
  $region36: #{attn_lstm_forward.1} parent=0 // pred_region
    _
  $region37: #{attn_lstm_forward.1} parent=0 // pred_fallthru
    _
  %v34 = vld [vmem:[%s1] sm:$0xff]
  %v35 = vld [vmem:[%s1 + $0x8] sm:$0xff]
  %v36 = vld [vmem:[%s3] sm:$0xff]
  %v37 = vld [vmem:[%s3 + $0x8] sm:$0xff]
  %v38 = vld [vmem:[%s3 + $0x10] sm:$0xff]
  %v39 = vld [vmem:[%s3 + $0x18] sm:$0xff]
  %vm40 = vcmask 261120
  %v42 = vsel %vm40, %v34, 0
  %v45 = vsel %vm40, %v35, 0
  %47 = vmatprep.subr.mxu0 0.0
  %48 = vmatpush1.msra.mxu0 %v36
  %49 = vmatprep.subr.mxu0 0.0
  %50 = vmatpush1.msra.mxu0 %v37
  %51 = vmatprep.subr.mxu0 0.0
  %52 = vmatpush1.msra.mxu0 %v38
  %53 = vmatprep.subr.mxu0 0.0
  %54 = vmatpush1.msra.mxu0 %v39
  %55 = vmatprep.subr.mxu0 0.0
  %56 = vmatpush1.msra.mxu0 0.0
  %57 = vmatprep.subr.mxu0 0.0
  %58 = vmatpush1.msra.mxu0 0.0
  %59 = vmatprep.subr.mxu0 0.0
  %60 = vmatpush1.msra.mxu0 0.0
  %61 = vmatprep.subr.mxu0 0.0
  %62 = vmatpush1.msra.mxu0 0.0
  %63 = vmatprep.subr.mxu0 0.0
  %64 = vmatpush1.msra.mxu0 0.0
  %65 = vmatprep.subr.mxu0 0.0
  %66 = vmatpush1.msra.mxu0 0.0
  %67 = vmatprep.subr.mxu0 0.0
  %68 = vmatpush1.msra.mxu0 0.0
  %69 = vmatprep.subr.mxu0 0.0
  %70 = vmatpush1.msra.mxu0 0.0
  %71 = vmatprep.subr.mxu0 0.0
  %72 = vmatpush1.msra.mxu0 0.0
  %73 = vmatprep.subr.mxu0 0.0
  %74 = vmatpush1.msra.mxu0 0.0
  %75 = vmatprep.subr.mxu0 0.0
  %76 = vmatpush1.msra.mxu0 0.0
  %77 = vmatprep.subr.mxu0 0.0
  %78 = vmatpush1.msra.mxu0 0.0
  %79 = vmatprep.subr.mxu0 0.0
  %80 = vmatpush1.msra.mxu0 0.0
  %81 = vmatprep.subr.mxu0 0.0
  %82 = vmatpush1.msra.mxu0 0.0
  %83 = vmatprep.subr.mxu0 0.0
  %84 = vmatpush1.msra.mxu0 0.0
  %85 = vmatprep.subr.mxu0 0.0
  %86 = vmatpush1.msra.mxu0 0.0
  %87 = vmatprep.subr.mxu0 0.0
  %88 = vmatpush1.msra.mxu0 0.0
  %89 = vmatprep.subr.mxu0 0.0
  %90 = vmatpush1.msra.mxu0 0.0
  %91 = vmatprep.subr.mxu0 0.0
  %92 = vmatpush1.msra.mxu0 0.0
  %93 = vmatprep.subr.mxu0 0.0
  %94 = vmatpush1.msra.mxu0 0.0
  %95 = vmatprep.subr.mxu0 0.0
  %96 = vmatpush1.msra.mxu0 0.0
  %97 = vmatprep.subr.mxu0 0.0
  %98 = vmatpush1.msra.mxu0 0.0
  %99 = vmatprep.subr.mxu0 0.0
  %100 = vmatpush1.msra.mxu0 0.0
  %101 = vmatprep.subr.mxu0 0.0
  %102 = vmatpush1.msra.mxu0 0.0
  %103 = vmatprep.subr.mxu0 0.0
  %104 = vmatpush1.msra.mxu0 0.0
  %105 = vmatprep.subr.mxu0 0.0
  %106 = vmatpush1.msra.mxu0 0.0
  %107 = vmatprep.subr.mxu0 0.0
  %108 = vmatpush1.msra.mxu0 0.0
  %109 = vmatprep.subr.mxu0 0.0
  %110 = vmatpush1.msra.mxu0 0.0
  %111 = vmatprep.mubr.f32.mxu0 0.0
  %112 = vmatmul.mubr.f32.gmra.mrb[0].mxu0 %v42
  %v113 = vpop.f32.mrb[0].mxu0
  %v114 = vadd.f32 0.0, %v113
  %v115 = vpop.f32.mrb[0].mxu0
  %116 = vmatprep.mubr.f32.mxu0 0.0
  %117 = vmatmul.mubr.f32.gmra.mrb[0].mxu0 %v45
  %v118 = vpop.f32.mrb[0].mxu0
  %v119 = vadd.f32 0.0, %v118
  %v120 = vpop.f32.mrb[0].mxu0
  %121 = vdwg.mxu0
  %v122 = vld [vmem:[%s4] sm:$0x1]
  %v124 = vlaneseq
  %v125 = vshrl.u32 %v124, 7
  %v126 = vsub.s32 0, %v125
  %v127 = vrot.slane %v122, %v126
  %v129 = vadd.f32 %v114, %v127
  %v130 = vadd.f32 %v119, %v127
  %v131 = vld [vmem:[%s5] sm:$0x1]
  %v132 = vld [vmem:[%s0] sm:$0x3]
  %v133 = vld [vmem:[%s0 + $0x2] sm:$0x3]
  %v134 = vld [vmem:[%s0 + $0x4] sm:$0x3]
  %v135 = vld [vmem:[%s0 + $0x6] sm:$0x3]
  %v136 = vld [vmem:[%s0 + $0x8] sm:$0x3]
  %v137 = vld [vmem:[%s0 + $0xa] sm:$0x3]
  %v138 = vld [vmem:[%s0 + $0xc] sm:$0x3]
  %v139 = vld [vmem:[%s0 + $0xe] sm:$0x3]
  %v140 = vld [vmem:[%s6] sm:$0xff]
  %v141 = vld [vmem:[%s6 + $0x8] sm:$0xff]
  %v142 = vld [vmem:[%s6 + $0x10] sm:$0xff]
  %v143 = vld [vmem:[%s6 + $0x18] sm:$0xff]
  %v144 = vld [vmem:[%s6 + $0x20] sm:$0xff]
  %v145 = vld [vmem:[%s6 + $0x28] sm:$0xff]
  %v146 = vld [vmem:[%s6 + $0x30] sm:$0xff]
  %v147 = vld [vmem:[%s6 + $0x38] sm:$0xff]
  %v148 = vld [vmem:[%s8] sm:$0xf]
  %v150 = vlaneseq
  %v151 = vshrl.u32 %v150, 7
  %v152 = vsub.s32 0, %v151
  %v153 = vrot.slane %v148, %v152
  %v154 = vlaneseq
  %v155 = vshrl.u32 %v154, 7
  %v156 = vsub.s32 1, %v155
  %v157 = vrot.slane %v148, %v156
  %v158 = vlaneseq
  %v159 = vshrl.u32 %v158, 7
  %v160 = vsub.s32 2, %v159
  %v161 = vrot.slane %v148, %v160
  %v162 = vlaneseq
  %v163 = vshrl.u32 %v162, 7
  %v164 = vsub.s32 3, %v163
  %v165 = vrot.slane %v148, %v164
  %v178 = vcombine.low %v132, %v133
  %v179 = vcombine.low %v134, %v135
  %v181 = vunpack.c.l.s4 1983009808
  %v182 = vunpack.c.0.s8 %v181
  %v183 = vlaneseq
  %v184 = vshrl.u32 %v183, 7
  %v185 = vsub.s32 %v182, %v184
  %v186 = vrot.slane %v178, %v185
  %v188 = vunpack.c.l.s4 1983009808
  %v189 = vunpack.c.0.s8 %v188
  %v190 = vlaneseq
  %v191 = vshrl.u32 %v190, 7
  %v192 = vsub.s32 %v189, %v191
  %v193 = vrot.slane %v179, %v192
  %v194 = vcombine.low %v186, %v193
  %v195 = vcombine.low %v136, %v137
  %v196 = vcombine.low %v138, %v139
  %v198 = vunpack.c.l.s4 1983009808
  %v199 = vunpack.c.0.s8 %v198
  %v200 = vlaneseq
  %v201 = vshrl.u32 %v200, 7
  %v202 = vsub.s32 %v199, %v201
  %v203 = vrot.slane %v195, %v202
  %v205 = vunpack.c.l.s4 1983009808
  %v206 = vunpack.c.0.s8 %v205
  %v207 = vlaneseq
  %v208 = vshrl.u32 %v207, 7
  %v209 = vsub.s32 %v206, %v208
  %v210 = vrot.slane %v196, %v209
  %v211 = vcombine.low %v203, %v210
  %vm212 = vcmask 130048
  %v213 = vsel %vm212, %v194, 0
  %v215 = vsel %vm212, %v211, 0
  %217 = vmatprep.subr.mxu0 %v141
  %218 = vmatpush1.msra.mxu0 %v140
  %219 = vmatprep.subr.mxu0 %v145
  %220 = vmatpush1.msra.mxu0 %v144
  %221 = vmatprep.subr.mxu0 0.0
  %222 = vmatpush1.msra.mxu0 0.0
  %223 = vmatprep.subr.mxu0 0.0
  %224 = vmatpush1.msra.mxu0 0.0
  %225 = vmatprep.subr.mxu0 0.0
  %226 = vmatpush1.msra.mxu0 0.0
  %227 = vmatprep.subr.mxu0 0.0
  %228 = vmatpush1.msra.mxu0 0.0
  %229 = vmatprep.subr.mxu0 0.0
  %230 = vmatpush1.msra.mxu0 0.0
  %231 = vmatprep.subr.mxu0 0.0
  %232 = vmatpush1.msra.mxu0 0.0
  %233 = vmatprep.subr.mxu0 0.0
  %234 = vmatpush1.msra.mxu0 0.0
  %235 = vmatprep.subr.mxu0 0.0
  %236 = vmatpush1.msra.mxu0 0.0
  %237 = vmatprep.subr.mxu0 0.0
  %238 = vmatpush1.msra.mxu0 0.0
  %239 = vmatprep.subr.mxu0 0.0
  %240 = vmatpush1.msra.mxu0 0.0
  %241 = vmatprep.subr.mxu0 0.0
  %242 = vmatpush1.msra.mxu0 0.0
  %243 = vmatprep.subr.mxu0 0.0
  %244 = vmatpush1.msra.mxu0 0.0
  %245 = vmatprep.subr.mxu0 0.0
  %246 = vmatpush1.msra.mxu0 0.0
  %247 = vmatprep.subr.mxu0 0.0
  %248 = vmatpush1.msra.mxu0 0.0
  %249 = vmatprep.subr.mxu0 0.0
  %250 = vmatpush1.msra.mxu0 0.0
  %251 = vmatprep.subr.mxu0 0.0
  %252 = vmatpush1.msra.mxu0 0.0
  %253 = vmatprep.subr.mxu0 0.0
  %254 = vmatpush1.msra.mxu0 0.0
  %255 = vmatprep.subr.mxu0 0.0
  %256 = vmatpush1.msra.mxu0 0.0
  %257 = vmatprep.subr.mxu0 0.0
  %258 = vmatpush1.msra.mxu0 0.0
  %259 = vmatprep.subr.mxu0 0.0
  %260 = vmatpush1.msra.mxu0 0.0
  %261 = vmatprep.subr.mxu0 0.0
  %262 = vmatpush1.msra.mxu0 0.0
  %263 = vmatprep.subr.mxu0 0.0
  %264 = vmatpush1.msra.mxu0 0.0
  %265 = vmatprep.subr.mxu0 0.0
  %266 = vmatpush1.msra.mxu0 0.0
  %267 = vmatprep.subr.mxu0 0.0
  %268 = vmatpush1.msra.mxu0 0.0
  %269 = vmatprep.subr.mxu0 0.0
  %270 = vmatpush1.msra.mxu0 0.0
  %271 = vmatprep.subr.mxu0 0.0
  %272 = vmatpush1.msra.mxu0 0.0
  %273 = vmatprep.subr.mxu0 0.0
  %274 = vmatpush1.msra.mxu0 0.0
  %275 = vmatprep.subr.mxu0 0.0
  %276 = vmatpush1.msra.mxu0 0.0
  %277 = vmatprep.subr.mxu0 0.0
  %278 = vmatpush1.msra.mxu0 0.0
  %279 = vmatprep.subr.mxu0 0.0
  %280 = vmatpush1.msra.mxu0 0.0
  %281 = vmatprep.mubr.f32.mxu0 0.0
  %282 = vmatmul.mubr.f32.gmra.mrb[0].mxu0 %v213
  %v283 = vpop.f32.mrb[0].mxu0
  %v284 = vadd.f32 %v153, %v283
  %v285 = vpop.f32.mrb[0].mxu0
  %v286 = vadd.f32 %v157, %v285
  %287 = vmatprep.mubr.f32.mxu0 0.0
  %288 = vmatmul.mubr.f32.gmra.mrb[0].mxu0 %v215
  %v289 = vpop.f32.mrb[0].mxu0
  %v290 = vadd.f32 %v153, %v289
  %v291 = vpop.f32.mrb[0].mxu0
  %v292 = vadd.f32 %v157, %v291
  %293 = vdwg.mxu0
  %294 = vmatprep.subr.mxu0 %v143
  %295 = vmatpush1.msra.mxu0 %v142
  %296 = vmatprep.subr.mxu0 %v147
  %297 = vmatpush1.msra.mxu0 %v146
  %298 = vmatprep.subr.mxu0 0.0
  %299 = vmatpush1.msra.mxu0 0.0
  %300 = vmatprep.subr.mxu0 0.0
  %301 = vmatpush1.msra.mxu0 0.0
  %302 = vmatprep.subr.mxu0 0.0
  %303 = vmatpush1.msra.mxu0 0.0
  %304 = vmatprep.subr.mxu0 0.0
  %305 = vmatpush1.msra.mxu0 0.0
  %306 = vmatprep.subr.mxu0 0.0
  %307 = vmatpush1.msra.mxu0 0.0
  %308 = vmatprep.subr.mxu0 0.0
  %309 = vmatpush1.msra.mxu0 0.0
  %310 = vmatprep.subr.mxu0 0.0
  %311 = vmatpush1.msra.mxu0 0.0
  %312 = vmatprep.subr.mxu0 0.0
  %313 = vmatpush1.msra.mxu0 0.0
  %314 = vmatprep.subr.mxu0 0.0
  %315 = vmatpush1.msra.mxu0 0.0
  %316 = vmatprep.subr.mxu0 0.0
  %317 = vmatpush1.msra.mxu0 0.0
  %318 = vmatprep.subr.mxu0 0.0
  %319 = vmatpush1.msra.mxu0 0.0
  %320 = vmatprep.subr.mxu0 0.0
  %321 = vmatpush1.msra.mxu0 0.0
  %322 = vmatprep.subr.mxu0 0.0
  %323 = vmatpush1.msra.mxu0 0.0
  %324 = vmatprep.subr.mxu0 0.0
  %325 = vmatpush1.msra.mxu0 0.0
  %326 = vmatprep.subr.mxu0 0.0
  %327 = vmatpush1.msra.mxu0 0.0
  %328 = vmatprep.subr.mxu0 0.0
  %329 = vmatpush1.msra.mxu0 0.0
  %330 = vmatprep.subr.mxu0 0.0
  %331 = vmatpush1.msra.mxu0 0.0
  %332 = vmatprep.subr.mxu0 0.0
  %333 = vmatpush1.msra.mxu0 0.0
  %334 = vmatprep.subr.mxu0 0.0
  %335 = vmatpush1.msra.mxu0 0.0
  %336 = vmatprep.subr.mxu0 0.0
  %337 = vmatpush1.msra.mxu0 0.0
  %338 = vmatprep.subr.mxu0 0.0
  %339 = vmatpush1.msra.mxu0 0.0
  %340 = vmatprep.subr.mxu0 0.0
  %341 = vmatpush1.msra.mxu0 0.0
  %342 = vmatprep.subr.mxu0 0.0
  %343 = vmatpush1.msra.mxu0 0.0
  %344 = vmatprep.subr.mxu0 0.0
  %345 = vmatpush1.msra.mxu0 0.0
  %346 = vmatprep.subr.mxu0 0.0
  %347 = vmatpush1.msra.mxu0 0.0
  %348 = vmatprep.subr.mxu0 0.0
  %349 = vmatpush1.msra.mxu0 0.0
  %350 = vmatprep.subr.mxu0 0.0
  %351 = vmatpush1.msra.mxu0 0.0
  %352 = vmatprep.subr.mxu0 0.0
  %353 = vmatpush1.msra.mxu0 0.0
  %354 = vmatprep.subr.mxu0 0.0
  %355 = vmatpush1.msra.mxu0 0.0
  %356 = vmatprep.subr.mxu0 0.0
  %357 = vmatpush1.msra.mxu0 0.0
  %358 = vmatprep.mubr.f32.mxu0 0.0
  %359 = vmatmul.mubr.f32.gmra.mrb[0].mxu0 %v213
  %v360 = vpop.f32.mrb[0].mxu0
  %v361 = vadd.f32 %v161, %v360
  %v362 = vpop.f32.mrb[0].mxu0
  %v363 = vadd.f32 %v165, %v362
  %364 = vmatprep.mubr.f32.mxu0 0.0
  %365 = vmatmul.mubr.f32.gmra.mrb[0].mxu0 %v215
  %v366 = vpop.f32.mrb[0].mxu0
  %v367 = vadd.f32 %v161, %v366
  %v368 = vpop.f32.mrb[0].mxu0
  %v369 = vadd.f32 %v165, %v368
  %370 = vdwg.mxu0
  %v379 = vcombine.low %v284, %v286
  %v380 = vcombine.high %v284, %v286
  %v381 = vcombine.low %v361, %v363
  %v382 = vcombine.high %v361, %v363
  %v384 = vunpack.c.l.s4 1983009808
  %v385 = vunpack.c.0.s8 %v384
  %v386 = vlaneseq
  %v387 = vshrl.u32 %v386, 7
  %v388 = vsub.s32 %v385, %v387
  %v389 = vrot.slane %v379, %v388
  %v391 = vunpack.c.l.s4 1983009808
  %v392 = vunpack.c.0.s8 %v391
  %v393 = vlaneseq
  %v394 = vshrl.u32 %v393, 7
  %v395 = vsub.s32 %v392, %v394
  %v396 = vrot.slane %v380, %v395
  %v398 = vunpack.c.l.s4 1983009808
  %v399 = vunpack.c.0.s8 %v398
  %v400 = vlaneseq
  %v401 = vshrl.u32 %v400, 7
  %v402 = vsub.s32 %v399, %v401
  %v403 = vrot.slane %v381, %v402
  %v405 = vunpack.c.l.s4 1983009808
  %v406 = vunpack.c.0.s8 %v405
  %v407 = vlaneseq
  %v408 = vshrl.u32 %v407, 7
  %v409 = vsub.s32 %v406, %v408
  %v410 = vrot.slane %v382, %v409
  %v411 = vcombine.low %v389, %v403
  %v412 = vcombine.high %v389, %v403
  %v413 = vcombine.low %v396, %v410
  %v414 = vcombine.high %v396, %v410
  %v415 = vcombine.low %v290, %v292
  %v416 = vcombine.high %v290, %v292
  %v417 = vcombine.low %v367, %v369
  %v418 = vcombine.high %v367, %v369
  %v420 = vunpack.c.l.s4 1983009808
  %v421 = vunpack.c.0.s8 %v420
  %v422 = vlaneseq
  %v423 = vshrl.u32 %v422, 7
  %v424 = vsub.s32 %v421, %v423
  %v425 = vrot.slane %v415, %v424
  %v427 = vunpack.c.l.s4 1983009808
  %v428 = vunpack.c.0.s8 %v427
  %v429 = vlaneseq
  %v430 = vshrl.u32 %v429, 7
  %v431 = vsub.s32 %v428, %v430
  %v432 = vrot.slane %v416, %v431
  %v434 = vunpack.c.l.s4 1983009808
  %v435 = vunpack.c.0.s8 %v434
  %v436 = vlaneseq
  %v437 = vshrl.u32 %v436, 7
  %v438 = vsub.s32 %v435, %v437
  %v439 = vrot.slane %v417, %v438
  %v441 = vunpack.c.l.s4 1983009808
  %v442 = vunpack.c.0.s8 %v441
  %v443 = vlaneseq
  %v444 = vshrl.u32 %v443, 7
  %v445 = vsub.s32 %v442, %v444
  %v446 = vrot.slane %v418, %v445
  %v447 = vcombine.low %v425, %v439
  %v448 = vcombine.high %v425, %v439
  %v449 = vcombine.low %v432, %v446
  %v450 = vcombine.high %v432, %v446
  %459 = vst [vmem:[#allocation2] sm:$0xff] %v411
  %460 = vst [vmem:[#allocation2 + $0x8] sm:$0xff] %v412
  %461 = vst [vmem:[#allocation2 + $0x10] sm:$0xff] %v413
  %462 = vst [vmem:[#allocation2 + $0x18] sm:$0xff] %v414
  %463 = vst [vmem:[#allocation2 + $0x20] sm:$0xff] %v447
  %464 = vst [vmem:[#allocation2 + $0x28] sm:$0xff] %v448
  %465 = vst [vmem:[#allocation2 + $0x30] sm:$0xff] %v449
  %466 = vst [vmem:[#allocation2 + $0x38] sm:$0xff] %v450
  %v467 = vld [vmem:[%s2] sm:$0xff]
  %v468 = vld [vmem:[%s2 + $0x8] sm:$0xff]
  %v469 = vld [vmem:[%s2 + $0x10] sm:$0xff]
  %v470 = vld [vmem:[%s2 + $0x18] sm:$0xff]
  %v471 = vld [vmem:[%s2 + $0x20] sm:$0xff]
  %v472 = vld [vmem:[%s2 + $0x28] sm:$0xff]
  %v473 = vld [vmem:[%s2 + $0x30] sm:$0xff]
  %v474 = vld [vmem:[%s2 + $0x38] sm:$0xff]
  %v475 = vld [vmem:[%s2 + $0x40] sm:$0xff]
  %v476 = vld [vmem:[%s2 + $0x48] sm:$0xff]
  %v477 = vld [vmem:[%s2 + $0x50] sm:$0xff]
  %v478 = vld [vmem:[%s2 + $0x58] sm:$0xff]
  %v479 = vld [vmem:[%s2 + $0x60] sm:$0xff]
  %v480 = vld [vmem:[%s2 + $0x68] sm:$0xff]
  %v481 = vld [vmem:[%s2 + $0x70] sm:$0xff]
  %v482 = vld [vmem:[%s2 + $0x78] sm:$0xff]
  %v483 = vld [vmem:[%s7] sm:$0xff]
  %v484 = vld [vmem:[%s7 + $0x8] sm:$0xff]
  %v485 = vld [vmem:[%s7 + $0x10] sm:$0xff]
  %v486 = vld [vmem:[%s7 + $0x18] sm:$0xff]
  %v487 = vld [vmem:[%s7 + $0x20] sm:$0xff]
  %v488 = vld [vmem:[%s7 + $0x28] sm:$0xff]
  %v489 = vld [vmem:[%s7 + $0x30] sm:$0xff]
  %v490 = vld [vmem:[%s7 + $0x38] sm:$0xff]
  %v491 = vld [vmem:[%s7 + $0x40] sm:$0xff]
  %v492 = vld [vmem:[%s7 + $0x48] sm:$0xff]
  %v493 = vld [vmem:[%s7 + $0x50] sm:$0xff]
  %v494 = vld [vmem:[%s7 + $0x58] sm:$0xff]
  %v495 = vld [vmem:[%s7 + $0x60] sm:$0xff]
  %v496 = vld [vmem:[%s7 + $0x68] sm:$0xff]
  %v497 = vld [vmem:[%s7 + $0x70] sm:$0xff]
  %v498 = vld [vmem:[%s7 + $0x78] sm:$0xff]
  %v499 = vld [vmem:[%s7 + $0x80] sm:$0xff]
  %v500 = vld [vmem:[%s7 + $0x88] sm:$0xff]
  %v501 = vld [vmem:[%s7 + $0x90] sm:$0xff]
  %v502 = vld [vmem:[%s7 + $0x98] sm:$0xff]
  %v503 = vld [vmem:[%s7 + $0xa0] sm:$0xff]
  %v504 = vld [vmem:[%s7 + $0xa8] sm:$0xff]
  %v505 = vld [vmem:[%s7 + $0xb0] sm:$0xff]
  %v506 = vld [vmem:[%s7 + $0xb8] sm:$0xff]
  %v507 = vld [vmem:[%s7 + $0xc0] sm:$0xff]
  %v508 = vld [vmem:[%s7 + $0xc8] sm:$0xff]
  %v509 = vld [vmem:[%s7 + $0xd0] sm:$0xff]
  %v510 = vld [vmem:[%s7 + $0xd8] sm:$0xff]
  %v511 = vld [vmem:[%s7 + $0xe0] sm:$0xff]
  %v512 = vld [vmem:[%s7 + $0xe8] sm:$0xff]
  %v513 = vld [vmem:[%s7 + $0xf0] sm:$0xff]
  %v514 = vld [vmem:[%s7 + $0xf8] sm:$0xff]
  %v515 = vld [vmem:[%s7 + $0x100] sm:$0xff]
  %v516 = vld [vmem:[%s7 + $0x108] sm:$0xff]
  %v517 = vld [vmem:[%s7 + $0x110] sm:$0xff]
  %v518 = vld [vmem:[%s7 + $0x118] sm:$0xff]
  %v519 = vld [vmem:[%s7 + $0x120] sm:$0xff]
  %v520 = vld [vmem:[%s7 + $0x128] sm:$0xff]
  %v521 = vld [vmem:[%s7 + $0x130] sm:$0xff]
  %v522 = vld [vmem:[%s7 + $0x138] sm:$0xff]
  %v523 = vld [vmem:[%s7 + $0x140] sm:$0xff]
  %v524 = vld [vmem:[%s7 + $0x148] sm:$0xff]
  %v525 = vld [vmem:[%s7 + $0x150] sm:$0xff]
  %v526 = vld [vmem:[%s7 + $0x158] sm:$0xff]
  %v527 = vld [vmem:[%s7 + $0x160] sm:$0xff]
  %v528 = vld [vmem:[%s7 + $0x168] sm:$0xff]
  %v529 = vld [vmem:[%s7 + $0x170] sm:$0xff]
  %v530 = vld [vmem:[%s7 + $0x178] sm:$0xff]
  %v531 = vld [vmem:[%s7 + $0x180] sm:$0xff]
  %v532 = vld [vmem:[%s7 + $0x188] sm:$0xff]
  %v533 = vld [vmem:[%s7 + $0x190] sm:$0xff]
  %v534 = vld [vmem:[%s7 + $0x198] sm:$0xff]
  %v535 = vld [vmem:[%s7 + $0x1a0] sm:$0xff]
  %v536 = vld [vmem:[%s7 + $0x1a8] sm:$0xff]
  %v537 = vld [vmem:[%s7 + $0x1b0] sm:$0xff]
  %v538 = vld [vmem:[%s7 + $0x1b8] sm:$0xff]
  %v539 = vld [vmem:[%s7 + $0x1c0] sm:$0xff]
  %v540 = vld [vmem:[%s7 + $0x1c8] sm:$0xff]
  %v541 = vld [vmem:[%s7 + $0x1d0] sm:$0xff]
  %v542 = vld [vmem:[%s7 + $0x1d8] sm:$0xff]
  %v543 = vld [vmem:[%s7 + $0x1e0] sm:$0xff]
  %v544 = vld [vmem:[%s7 + $0x1e8] sm:$0xff]
  %v545 = vld [vmem:[%s7 + $0x1f0] sm:$0xff]
  %v546 = vld [vmem:[%s7 + $0x1f8] sm:$0xff]
  %v547 = vld [vmem:[%s7 + $0x200] sm:$0xff]
  %v548 = vld [vmem:[%s7 + $0x208] sm:$0xff]
  %v549 = vld [vmem:[%s7 + $0x210] sm:$0xff]
  %v550 = vld [vmem:[%s7 + $0x218] sm:$0xff]
  %v551 = vld [vmem:[%s7 + $0x220] sm:$0xff]
  %v552 = vld [vmem:[%s7 + $0x228] sm:$0xff]
  %v553 = vld [vmem:[%s7 + $0x230] sm:$0xff]
  %v554 = vld [vmem:[%s7 + $0x238] sm:$0xff]
  %v555 = vld [vmem:[%s7 + $0x240] sm:$0xff]
  %v556 = vld [vmem:[%s7 + $0x248] sm:$0xff]
  %v557 = vld [vmem:[%s7 + $0x250] sm:$0xff]
  %v558 = vld [vmem:[%s7 + $0x258] sm:$0xff]
  %v559 = vld [vmem:[%s7 + $0x260] sm:$0xff]
  %v560 = vld [vmem:[%s7 + $0x268] sm:$0xff]
  %v561 = vld [vmem:[%s7 + $0x270] sm:$0xff]
  %v562 = vld [vmem:[%s7 + $0x278] sm:$0xff]
  %563 = vmatprep.subr.mxu0 0.0
  %564 = vmatpush1.msra.mxu0 %v467
  %565 = vmatprep.subr.mxu0 0.0
  %566 = vmatpush1.msra.mxu0 %v468
  %567 = vmatprep.subr.mxu0 0.0
  %568 = vmatpush1.msra.mxu0 %v469
  %569 = vmatprep.subr.mxu0 0.0
  %570 = vmatpush1.msra.mxu0 %v470
  %571 = vmatprep.subr.mxu0 0.0
  %572 = vmatpush1.msra.mxu0 %v471
  %573 = vmatprep.subr.mxu0 0.0
  %574 = vmatpush1.msra.mxu0 %v472
  %575 = vmatprep.subr.mxu0 0.0
  %576 = vmatpush1.msra.mxu0 %v473
  %577 = vmatprep.subr.mxu0 0.0
  %578 = vmatpush1.msra.mxu0 %v474
  %579 = vmatprep.subr.mxu0 0.0
  %580 = vmatpush1.msra.mxu0 %v475
  %581 = vmatprep.subr.mxu0 0.0
  %582 = vmatpush1.msra.mxu0 %v476
  %583 = vmatprep.subr.mxu0 0.0
  %584 = vmatpush1.msra.mxu0 %v477
  %585 = vmatprep.subr.mxu0 0.0
  %586 = vmatpush1.msra.mxu0 %v478
  %587 = vmatprep.subr.mxu0 0.0
  %588 = vmatpush1.msra.mxu0 %v479
  %589 = vmatprep.subr.mxu0 0.0
  %590 = vmatpush1.msra.mxu0 %v480
  %591 = vmatprep.subr.mxu0 0.0
  %592 = vmatpush1.msra.mxu0 %v481
  %593 = vmatprep.subr.mxu0 0.0
  %594 = vmatpush1.msra.mxu0 %v482
  %595 = vmatprep.subr.mxu0 0.0
  %596 = vmatpush1.msra.mxu0 0.0
  %597 = vmatprep.subr.mxu0 0.0
  %598 = vmatpush1.msra.mxu0 0.0
  %599 = vmatprep.subr.mxu0 0.0
  %600 = vmatpush1.msra.mxu0 0.0
  %601 = vmatprep.subr.mxu0 0.0
  %602 = vmatpush1.msra.mxu0 0.0
  %603 = vmatprep.subr.mxu0 0.0
  %604 = vmatpush1.msra.mxu0 0.0
  %605 = vmatprep.subr.mxu0 0.0
  %606 = vmatpush1.msra.mxu0 0.0
  %607 = vmatprep.subr.mxu0 0.0
  %608 = vmatpush1.msra.mxu0 0.0
  %609 = vmatprep.subr.mxu0 0.0
  %610 = vmatpush1.msra.mxu0 0.0
  %611 = vmatprep.subr.mxu0 0.0
  %612 = vmatpush1.msra.mxu0 0.0
  %613 = vmatprep.subr.mxu0 0.0
  %614 = vmatpush1.msra.mxu0 0.0
  %615 = vmatprep.subr.mxu0 0.0
  %616 = vmatpush1.msra.mxu0 0.0
  %617 = vmatprep.subr.mxu0 0.0
  %618 = vmatpush1.msra.mxu0 0.0
  %619 = vmatprep.subr.mxu0 0.0
  %620 = vmatpush1.msra.mxu0 0.0
  %621 = vmatprep.subr.mxu0 0.0
  %622 = vmatpush1.msra.mxu0 0.0
  %623 = vmatprep.subr.mxu0 0.0
  %624 = vmatpush1.msra.mxu0 0.0
  %625 = vmatprep.subr.mxu0 0.0
  %626 = vmatpush1.msra.mxu0 0.0
  %627 = vmatprep.mubr.f32.mxu0 0.0
  %628 = vmatmul.mubr.f32.gmra.mrb[0].mxu0 0.0
  %v629 = vpop.f32.mrb[0].mxu0
  %v630 = vadd.f32 0.0, %v629
  %v631 = vpop.f32.mrb[0].mxu0
  %632 = vdwg.mxu0
  %v635 = vunpack.c.l.s4 1966171168
  %v636 = vunpack.c.0.s8 %v635
  %v637 = vlaneseq
  %v638 = vshrl.u32 %v637, 7
  %v639 = vsub.s32 %v636, %v638
  %v640 = vrot.slane %v630, %v639
  %v641 = vcombine.high %v640, %v640
  %v643 = vunpack.c.l.s4 1966171168
  %v644 = vunpack.c.0.s8 %v643
  %v645 = vlaneseq
  %v646 = vshrl.u32 %v645, 7
  %v647 = vsub.s32 %v644, %v646
  %v648 = vrot.slane %v640, %v647
  %v650 = vunpack.c.l.s4 1966171168
  %v651 = vunpack.c.0.s8 %v650
  %v652 = vlaneseq
  %v653 = vshrl.u32 %v652, 7
  %v654 = vsub.s32 %v651, %v653
  %v655 = vrot.slane %v641, %v654
  %v656 = vlaneseq
  %v657 = vshrl.u32 %v656, 7
  %v658 = vsub.s32 0, %v657
  %v659 = vrot.slane %v648, %v658
  %v660 = vlaneseq
  %v661 = vshrl.u32 %v660, 7
  %v662 = vsub.s32 0, %v661
  %v663 = vrot.slane %v655, %v662
  %v666 = vadd.f32 %v129, %v659
  %v667 = vadd.f32 %v130, %v663
  %v668 = vtanh.pop %v666
  %v669 = vtanh.pop %v667
  %v671 = vlaneseq
  %v672 = vshrl.u32 %v671, 7
  %v673 = vsub.s32 0, %v672
  %v674 = vrot.slane %v131, %v673
  %v676 = vmul.f32 %v668, %v674
  %v677 = vmul.f32 %v669, %v674
  %678 = vadd.xlane.f32.xlu0 %v676
  %v679 = vpop.xlane.xlu0 %678
  %680 = vadd.xlane.f32.xlu0 %v677
  %v681 = vpop.xlane.xlu0 %680
  %v684 = vlaneseq
  %v685 = vand.u32 %v684, 127
  %v686 = vlaneseq
  %v687 = vshrl.u32 %v686, 7
  %v688 = vsub.s32 %v685, %v687
  %v689 = vrot.slane %v679, %v688
  %v690 = vlaneseq
  %v691 = vshrl.u32 %v690, 7
  %v692 = vsub.s32 %v685, %v691
  %v693 = vrot.slane %v681, %v692
  %vm694 = vcmask 1041409
  %v695 = vsel %vm694, %v693, %v689
  %vm697 = vcmask 58368
  %v698 = vsel %vm697, %v695, -inf
  %699 = vmax.xlane.f32.xlu0 %v698
  %v700 = vpop.xlane.xlu0 %699
  %v702 = vlaneseq
  %v703 = vshrl.u32 %v702, 7
  %v704 = vsub.s32 0, %v703
  %v705 = vrot.slane %v700, %v704
  %v706 = vlaneseq
  %v707 = vshrl.u32 %v706, 7
  %v708 = vsub.s32 1, %v707
  %v709 = vrot.slane %v700, %v708
  %v712 = vsub.f32 %v679, %v705
  %v713 = vsub.f32 %v681, %v709
  %v714 = vmul.f32 %v712, 1.442695
  %v715 = vpow.pop %v714
  %v716 = vmul.f32 %v713, 1.442695
  %v717 = vpow.pop %v716
  %720 = vset.pattern.permute.xlu0 0
  %721 = vperm.xlu0 %720, %v715
  %v722 = vpop.permute.xlu0 %721
  %723 = vset.pattern.permute.xlu0 0
  %724 = vperm.xlu0 %723, %v717
  %v725 = vpop.permute.xlu0 %724
  %v726 = vlaneseq
  %v727 = vshrl.u32 %v726, 7
  %v728 = vsub.s32 %v685, %v727
  %v729 = vrot.slane %v722, %v728
  %v730 = vlaneseq
  %v731 = vshrl.u32 %v730, 7
  %v732 = vsub.s32 %v685, %v731
  %v733 = vrot.slane %v725, %v732
  %v734 = vsel %vm694, %v733, %v729
  %v736 = vsel %vm697, %v734, 0.0
  %737 = vadd.xlane.f32.xlu0 %v736
  %v738 = vpop.xlane.xlu0 %737
  %v739 = vrcp.pop %v738
  %v741 = vlaneseq
  %v742 = vshrl.u32 %v741, 7
  %v743 = vsub.s32 0, %v742
  %v744 = vrot.slane %v739, %v743
  %v745 = vlaneseq
  %v746 = vshrl.u32 %v745, 7
  %v747 = vsub.s32 1, %v746
  %v748 = vrot.slane %v739, %v747
  %v751 = vmul.f32 %v715, %v744
  %v752 = vmul.f32 %v717, %v748
  %754 = vset.pattern.permute.xlu0 0
  %755 = vperm.xlu0 %754, %v751
  %v756 = vpop.permute.xlu0 %755
  %v757 = vlaneseq
  %v758 = vshrl.u32 %v757, 7
  %v759 = vsub.s32 %v685, %v758
  %v760 = vrot.slane %v756, %v759
  %vm761 = vcmask 64512
  %v762 = vsel %vm761, %v760, 0
  %764 = vmatprep.subr.mxu0 0.0
  %765 = vmatpush1.msra.mxu0 %v34
  %766 = vmatprep.subr.mxu0 0.0
  %767 = vmatpush1.msra.mxu0 0.0
  %768 = vmatprep.subr.mxu0 0.0
  %769 = vmatpush1.msra.mxu0 0.0
  %770 = vmatprep.subr.mxu0 0.0
  %771 = vmatpush1.msra.mxu0 0.0
  %772 = vmatprep.subr.mxu0 0.0
  %773 = vmatpush1.msra.mxu0 0.0
  %774 = vmatprep.subr.mxu0 0.0
  %775 = vmatpush1.msra.mxu0 0.0
  %776 = vmatprep.subr.mxu0 0.0
  %777 = vmatpush1.msra.mxu0 0.0
  %778 = vmatprep.subr.mxu0 0.0
  %779 = vmatpush1.msra.mxu0 0.0
  %780 = vmatprep.subr.mxu0 0.0
  %781 = vmatpush1.msra.mxu0 0.0
  %782 = vmatprep.subr.mxu0 0.0
  %783 = vmatpush1.msra.mxu0 0.0
  %784 = vmatprep.subr.mxu0 0.0
  %785 = vmatpush1.msra.mxu0 0.0
  %786 = vmatprep.subr.mxu0 0.0
  %787 = vmatpush1.msra.mxu0 0.0
  %788 = vmatprep.subr.mxu0 0.0
  %789 = vmatpush1.msra.mxu0 0.0
  %790 = vmatprep.subr.mxu0 0.0
  %791 = vmatpush1.msra.mxu0 0.0
  %792 = vmatprep.subr.mxu0 0.0
  %793 = vmatpush1.msra.mxu0 0.0
  %794 = vmatprep.subr.mxu0 0.0
  %795 = vmatpush1.msra.mxu0 0.0
  %796 = vmatprep.subr.mxu0 0.0
  %797 = vmatpush1.msra.mxu0 0.0
  %798 = vmatprep.subr.mxu0 0.0
  %799 = vmatpush1.msra.mxu0 0.0
  %800 = vmatprep.subr.mxu0 0.0
  %801 = vmatpush1.msra.mxu0 0.0
  %802 = vmatprep.subr.mxu0 0.0
  %803 = vmatpush1.msra.mxu0 0.0
  %804 = vmatprep.subr.mxu0 0.0
  %805 = vmatpush1.msra.mxu0 0.0
  %806 = vmatprep.subr.mxu0 0.0
  %807 = vmatpush1.msra.mxu0 0.0
  %808 = vmatprep.subr.mxu0 0.0
  %809 = vmatpush1.msra.mxu0 0.0
  %810 = vmatprep.subr.mxu0 0.0
  %811 = vmatpush1.msra.mxu0 0.0
  %812 = vmatprep.subr.mxu0 0.0
  %813 = vmatpush1.msra.mxu0 0.0
  %814 = vmatprep.subr.mxu0 0.0
  %815 = vmatpush1.msra.mxu0 0.0
  %816 = vmatprep.subr.mxu0 0.0
  %817 = vmatpush1.msra.mxu0 0.0
  %818 = vmatprep.subr.mxu0 0.0
  %819 = vmatpush1.msra.mxu0 0.0
  %820 = vmatprep.subr.mxu0 0.0
  %821 = vmatpush1.msra.mxu0 0.0
  %822 = vmatprep.subr.mxu0 0.0
  %823 = vmatpush1.msra.mxu0 0.0
  %824 = vmatprep.subr.mxu0 0.0
  %825 = vmatpush1.msra.mxu0 0.0
  %826 = vmatprep.subr.mxu0 0.0
  %827 = vmatpush1.msra.mxu0 0.0
  %828 = vmatprep.mubr.f32.mxu0 0.0
  %829 = vmatmul.mubr.f32.gmra.mrb[0].mxu0 %v762
  %v830 = vpop.f32.mrb[0].mxu0
  %v831 = vadd.f32 0.0, %v830
  %v832 = vpop.f32.mrb[0].mxu0
  %833 = vdwg.mxu0
  %835 = vset.pattern.permute.xlu0 0
  %836 = vperm.xlu0 %835, %v752
  %v837 = vpop.permute.xlu0 %836
  %v838 = vlaneseq
  %v839 = vshrl.u32 %v838, 7
  %v840 = vsub.s32 %v685, %v839
  %v841 = vrot.slane %v837, %v840
  %v842 = vsel %vm761, %v841, 0
  %844 = vmatprep.subr.mxu0 0.0
  %845 = vmatpush1.msra.mxu0 %v35
  %846 = vmatprep.subr.mxu0 0.0
  %847 = vmatpush1.msra.mxu0 0.0
  %848 = vmatprep.subr.mxu0 0.0
  %849 = vmatpush1.msra.mxu0 0.0
  %850 = vmatprep.subr.mxu0 0.0
  %851 = vmatpush1.msra.mxu0 0.0
  %852 = vmatprep.subr.mxu0 0.0
  %853 = vmatpush1.msra.mxu0 0.0
  %854 = vmatprep.subr.mxu0 0.0
  %855 = vmatpush1.msra.mxu0 0.0
  %856 = vmatprep.subr.mxu0 0.0
  %857 = vmatpush1.msra.mxu0 0.0
  %858 = vmatprep.subr.mxu0 0.0
  %859 = vmatpush1.msra.mxu0 0.0
  %860 = vmatprep.subr.mxu0 0.0
  %861 = vmatpush1.msra.mxu0 0.0
  %862 = vmatprep.subr.mxu0 0.0
  %863 = vmatpush1.msra.mxu0 0.0
  %864 = vmatprep.subr.mxu0 0.0
  %865 = vmatpush1.msra.mxu0 0.0
  %866 = vmatprep.subr.mxu0 0.0
  %867 = vmatpush1.msra.mxu0 0.0
  %868 = vmatprep.subr.mxu0 0.0
  %869 = vmatpush1.msra.mxu0 0.0
  %870 = vmatprep.subr.mxu0 0.0
  %871 = vmatpush1.msra.mxu0 0.0
  %872 = vmatprep.subr.mxu0 0.0
  %873 = vmatpush1.msra.mxu0 0.0
  %874 = vmatprep.subr.mxu0 0.0
  %875 = vmatpush1.msra.mxu0 0.0
  %876 = vmatprep.subr.mxu0 0.0
  %877 = vmatpush1.msra.mxu0 0.0
  %878 = vmatprep.subr.mxu0 0.0
  %879 = vmatpush1.msra.mxu0 0.0
  %880 = vmatprep.subr.mxu0 0.0
  %881 = vmatpush1.msra.mxu0 0.0
  %882 = vmatprep.subr.mxu0 0.0
  %883 = vmatpush1.msra.mxu0 0.0
  %884 = vmatprep.subr.mxu0 0.0
  %885 = vmatpush1.msra.mxu0 0.0
  %886 = vmatprep.subr.mxu0 0.0
  %887 = vmatpush1.msra.mxu0 0.0
  %888 = vmatprep.subr.mxu0 0.0
  %889 = vmatpush1.msra.mxu0 0.0
  %890 = vmatprep.subr.mxu0 0.0
  %891 = vmatpush1.msra.mxu0 0.0
  %892 = vmatprep.subr.mxu0 0.0
  %893 = vmatpush1.msra.mxu0 0.0
  %894 = vmatprep.subr.mxu0 0.0
  %895 = vmatpush1.msra.mxu0 0.0
  %896 = vmatprep.subr.mxu0 0.0
  %897 = vmatpush1.msra.mxu0 0.0
  %898 = vmatprep.subr.mxu0 0.0
  %899 = vmatpush1.msra.mxu0 0.0
  %900 = vmatprep.subr.mxu0 0.0
  %901 = vmatpush1.msra.mxu0 0.0
  %902 = vmatprep.subr.mxu0 0.0
  %903 = vmatpush1.msra.mxu0 0.0
  %904 = vmatprep.subr.mxu0 0.0
  %905 = vmatpush1.msra.mxu0 0.0
  %906 = vmatprep.subr.mxu0 0.0
  %907 = vmatpush1.msra.mxu0 0.0
  %908 = vmatprep.mubr.f32.mxu0 0.0
  %909 = vmatmul.mubr.f32.gmra.mrb[0].mxu0 %v842
  %v910 = vpop.f32.mrb[0].mxu0
  %v911 = vadd.f32 0.0, %v910
  %v912 = vpop.f32.mrb[0].mxu0
  %913 = vdwg.mxu0
  %v916 = vrot.slane %v911, 7
  %v917 = vsel %vm694, %v916, %v831
  %v918 = vld [vmem:[#allocation2] sm:$0xff]
  %v919 = vsel %vm40, %v917, 0
  %921 = vmatprep.subr.mxu0 %v484
  %922 = vmatpush1.msra.mxu0 %v483
  %923 = vmatprep.subr.mxu0 %v488
  %924 = vmatpush1.msra.mxu0 %v487
  %925 = vmatprep.subr.mxu0 %v492
  %926 = vmatpush1.msra.mxu0 %v491
  %927 = vmatprep.subr.mxu0 %v496
  %928 = vmatpush1.msra.mxu0 %v495
  %929 = vmatprep.subr.mxu0 %v500
  %930 = vmatpush1.msra.mxu0 %v499
  %931 = vmatprep.subr.mxu0 %v504
  %932 = vmatpush1.msra.mxu0 %v503
  %933 = vmatprep.subr.mxu0 %v508
  %934 = vmatpush1.msra.mxu0 %v507
  %935 = vmatprep.subr.mxu0 %v512
  %936 = vmatpush1.msra.mxu0 %v511
  %937 = vmatprep.subr.mxu0 %v516
  %938 = vmatpush1.msra.mxu0 %v515
  %939 = vmatprep.subr.mxu0 %v520
  %940 = vmatpush1.msra.mxu0 %v519
  %941 = vmatprep.subr.mxu0 %v524
  %942 = vmatpush1.msra.mxu0 %v523
  %943 = vmatprep.subr.mxu0 %v528
  %944 = vmatpush1.msra.mxu0 %v527
  %945 = vmatprep.subr.mxu0 %v532
  %946 = vmatpush1.msra.mxu0 %v531
  %947 = vmatprep.subr.mxu0 %v536
  %948 = vmatpush1.msra.mxu0 %v535
  %949 = vmatprep.subr.mxu0 %v540
  %950 = vmatpush1.msra.mxu0 %v539
  %951 = vmatprep.subr.mxu0 %v544
  %952 = vmatpush1.msra.mxu0 %v543
  %953 = vmatprep.subr.mxu0 %v548
  %954 = vmatpush1.msra.mxu0 %v547
  %955 = vmatprep.subr.mxu0 %v552
  %956 = vmatpush1.msra.mxu0 %v551
  %957 = vmatprep.subr.mxu0 %v556
  %958 = vmatpush1.msra.mxu0 %v555
  %959 = vmatprep.subr.mxu0 %v560
  %960 = vmatpush1.msra.mxu0 %v559
  %961 = vmatprep.subr.mxu0 0.0
  %962 = vmatpush1.msra.mxu0 0.0
  %963 = vmatprep.subr.mxu0 0.0
  %964 = vmatpush1.msra.mxu0 0.0
  %965 = vmatprep.subr.mxu0 0.0
  %966 = vmatpush1.msra.mxu0 0.0
  %967 = vmatprep.subr.mxu0 0.0
  %968 = vmatpush1.msra.mxu0 0.0
  %969 = vmatprep.subr.mxu0 0.0
  %970 = vmatpush1.msra.mxu0 0.0
  %971 = vmatprep.subr.mxu0 0.0
  %972 = vmatpush1.msra.mxu0 0.0
  %973 = vmatprep.subr.mxu0 0.0
  %974 = vmatpush1.msra.mxu0 0.0
  %975 = vmatprep.subr.mxu0 0.0
  %976 = vmatpush1.msra.mxu0 0.0
  %977 = vmatprep.subr.mxu0 0.0
  %978 = vmatpush1.msra.mxu0 0.0
  %979 = vmatprep.subr.mxu0 0.0
  %980 = vmatpush1.msra.mxu0 0.0
  %981 = vmatprep.subr.mxu0 0.0
  %982 = vmatpush1.msra.mxu0 0.0
  %983 = vmatprep.subr.mxu0 0.0
  %984 = vmatpush1.msra.mxu0 0.0
  %985 = vmatprep.mubr.f32.mxu0 %v919
  %986 = vmatmul.mubr.f32.gmra.mrb[0].mxu0 0.0
  %v987 = vpop.f32.mrb[0].mxu0
  %v988 = vadd.f32 0.0, %v987
  %v989 = vpop.f32.mrb[0].mxu0
  %v990 = vadd.f32 0.0, %v989
  %991 = vdwg.mxu0
  %992 = vmatprep.subr.mxu0 %v486
  %993 = vmatpush1.msra.mxu0 %v485
  %994 = vmatprep.subr.mxu0 %v490
  %995 = vmatpush1.msra.mxu0 %v489
  %996 = vmatprep.subr.mxu0 %v494
  %997 = vmatpush1.msra.mxu0 %v493
  %998 = vmatprep.subr.mxu0 %v498
  %999 = vmatpush1.msra.mxu0 %v497
  %1000 = vmatprep.subr.mxu0 %v502
  %1001 = vmatpush1.msra.mxu0 %v501
  %1002 = vmatprep.subr.mxu0 %v506
  %1003 = vmatpush1.msra.mxu0 %v505
  %1004 = vmatprep.subr.mxu0 %v510
  %1005 = vmatpush1.msra.mxu0 %v509
  %1006 = vmatprep.subr.mxu0 %v514
  %1007 = vmatpush1.msra.mxu0 %v513
  %1008 = vmatprep.subr.mxu0 %v518
  %1009 = vmatpush1.msra.mxu0 %v517
  %1010 = vmatprep.subr.mxu0 %v522
  %1011 = vmatpush1.msra.mxu0 %v521
  %1012 = vmatprep.subr.mxu0 %v526
  %1013 = vmatpush1.msra.mxu0 %v525
  %1014 = vmatprep.subr.mxu0 %v530
  %1015 = vmatpush1.msra.mxu0 %v529
  %1016 = vmatprep.subr.mxu0 %v534
  %1017 = vmatpush1.msra.mxu0 %v533
  %1018 = vmatprep.subr.mxu0 %v538
  %1019 = vmatpush1.msra.mxu0 %v537
  %1020 = vmatprep.subr.mxu0 %v542
  %1021 = vmatpush1.msra.mxu0 %v541
  %1022 = vmatprep.subr.mxu0 %v546
  %1023 = vmatpush1.msra.mxu0 %v545
  %1024 = vmatprep.subr.mxu0 %v550
  %1025 = vmatpush1.msra.mxu0 %v549
  %1026 = vmatprep.subr.mxu0 %v554
  %1027 = vmatpush1.msra.mxu0 %v553
  %1028 = vmatprep.subr.mxu0 %v558
  %1029 = vmatpush1.msra.mxu0 %v557
  %1030 = vmatprep.subr.mxu0 %v562
  %1031 = vmatpush1.msra.mxu0 %v561
  %1032 = vmatprep.subr.mxu0 0.0
  %1033 = vmatpush1.msra.mxu0 0.0
  %1034 = vmatprep.subr.mxu0 0.0
  %1035 = vmatpush1.msra.mxu0 0.0
  %1036 = vmatprep.subr.mxu0 0.0
  %1037 = vmatpush1.msra.mxu0 0.0
  %1038 = vmatprep.subr.mxu0 0.0
  %1039 = vmatpush1.msra.mxu0 0.0
  %1040 = vmatprep.subr.mxu0 0.0
  %1041 = vmatpush1.msra.mxu0 0.0
  %1042 = vmatprep.subr.mxu0 0.0
  %1043 = vmatpush1.msra.mxu0 0.0
  %1044 = vmatprep.subr.mxu0 0.0
  %1045 = vmatpush1.msra.mxu0 0.0
  %1046 = vmatprep.subr.mxu0 0.0
  %1047 = vmatpush1.msra.mxu0 0.0
  %1048 = vmatprep.subr.mxu0 0.0
  %1049 = vmatpush1.msra.mxu0 0.0
  %1050 = vmatprep.subr.mxu0 0.0
  %1051 = vmatpush1.msra.mxu0 0.0
  %1052 = vmatprep.subr.mxu0 0.0
  %1053 = vmatpush1.msra.mxu0 0.0
  %1054 = vmatprep.subr.mxu0 0.0
  %1055 = vmatpush1.msra.mxu0 0.0
  %1056 = vmatprep.mubr.f32.mxu0 %v919
  %1057 = vmatmul.mubr.f32.gmra.mrb[0].mxu0 0.0
  %v1058 = vpop.f32.mrb[0].mxu0
  %v1059 = vadd.f32 0.0, %v1058
  %v1060 = vpop.f32.mrb[0].mxu0
  %v1061 = vadd.f32 0.0, %v1060
  %1062 = vdwg.mxu0
  %v1067 = vcombine.low %v988, %v990
  %v1068 = vcombine.low %v1059, %v1061
  %v1070 = vunpack.c.l.s4 1983009808
  %v1071 = vunpack.c.0.s8 %v1070
  %v1072 = vlaneseq
  %v1073 = vshrl.u32 %v1072, 7
  %v1074 = vsub.s32 %v1071, %v1073
  %v1075 = vrot.slane %v1067, %v1074
  %v1077 = vunpack.c.l.s4 1983009808
  %v1078 = vunpack.c.0.s8 %v1077
  %v1079 = vlaneseq
  %v1080 = vshrl.u32 %v1079, 7
  %v1081 = vsub.s32 %v1078, %v1080
  %v1082 = vrot.slane %v1068, %v1081
  %v1083 = vcombine.low %v1075, %v1082
  %v1085 = vadd.f32 %v918, %v1083
  %v1086 = vxor.u32 %v1085, 2147483648
  %v1087 = vmul.f32 %v1086, 1.442695
  %v1088 = vpow.pop %v1087
  %v1089 = vadd.f32 %v1088, 1.0
  %v1090 = vrcp.pop %v1089
  %v1091 = vmul.f32 1.0, %v1090
  %v1093 = vrot.slane %v1085, 2
  %v1095 = vxor.u32 %v1093, 2147483648
  %v1096 = vmul.f32 %v1095, 1.442695
  %v1097 = vpow.pop %v1096
  %v1098 = vadd.f32 %v1097, 1.0
  %v1099 = vrcp.pop %v1098
  %v1100 = vmul.f32 1.0, %v1099
  %v1101 = vrot.slane %v1085, 4
  %v1103 = vtanh.pop %v1101
  %v1104 = vrot.slane %v1085, 6
  %v1106 = vxor.u32 %v1104, 2147483648
  %v1107 = vmul.f32 %v1106, 1.442695
  %v1108 = vpow.pop %v1107
  %v1109 = vadd.f32 %v1108, 1.0
  %v1110 = vrcp.pop %v1109
  %v1111 = vmul.f32 1.0, %v1110
  %v1112 = vmul.f32 %v1100, 0.0
  %v1113 = vmul.f32 %v1091, %v1103
  %v1114 = vadd.f32 %v1112, %v1113
  %v1115 = vtanh.pop %v1114
  %v1116 = vmul.f32 %v1111, %v1115
  %1117 = vst [vmem:[%s9] sm:$0x3] %v1116
  %1118 = vst [vmem:[%s10] sm:$0x3] %v1114
  %1119 = vmatprep.subr.mxu0 0.0
  %1120 = vmatpush1.msra.mxu0 %v467
  %1121 = vmatprep.subr.mxu0 0.0
  %1122 = vmatpush1.msra.mxu0 %v468
  %1123 = vmatprep.subr.mxu0 0.0
  %1124 = vmatpush1.msra.mxu0 %v469
  %1125 = vmatprep.subr.mxu0 0.0
  %1126 = vmatpush1.msra.mxu0 %v470
  %1127 = vmatprep.subr.mxu0 0.0
  %1128 = vmatpush1.msra.mxu0 %v471
  %1129 = vmatprep.subr.mxu0 0.0
  %1130 = vmatpush1.msra.mxu0 %v472
  %1131 = vmatprep.subr.mxu0 0.0
  %1132 = vmatpush1.msra.mxu0 %v473
  %1133 = vmatprep.subr.mxu0 0.0
  %1134 = vmatpush1.msra.mxu0 %v474
  %1135 = vmatprep.subr.mxu0 0.0
  %1136 = vmatpush1.msra.mxu0 %v475
  %1137 = vmatprep.subr.mxu0 0.0
  %1138 = vmatpush1.msra.mxu0 %v476
  %1139 = vmatprep.subr.mxu0 0.0
  %1140 = vmatpush1.msra.mxu0 %v477
  %1141 = vmatprep.subr.mxu0 0.0
  %1142 = vmatpush1.msra.mxu0 %v478
  %1143 = vmatprep.subr.mxu0 0.0
  %1144 = vmatpush1.msra.mxu0 %v479
  %1145 = vmatprep.subr.mxu0 0.0
  %1146 = vmatpush1.msra.mxu0 %v480
  %1147 = vmatprep.subr.mxu0 0.0
  %1148 = vmatpush1.msra.mxu0 %v481
  %1149 = vmatprep.subr.mxu0 0.0
  %1150 = vmatpush1.msra.mxu0 %v482
  %1151 = vmatprep.subr.mxu0 0.0
  %1152 = vmatpush1.msra.mxu0 0.0
  %1153 = vmatprep.subr.mxu0 0.0
  %1154 = vmatpush1.msra.mxu0 0.0
  %1155 = vmatprep.subr.mxu0 0.0
  %1156 = vmatpush1.msra.mxu0 0.0
  %1157 = vmatprep.subr.mxu0 0.0
  %1158 = vmatpush1.msra.mxu0 0.0
  %1159 = vmatprep.subr.mxu0 0.0
  %1160 = vmatpush1.msra.mxu0 0.0
  %1161 = vmatprep.subr.mxu0 0.0
  %1162 = vmatpush1.msra.mxu0 0.0
  %1163 = vmatprep.subr.mxu0 0.0
  %1164 = vmatpush1.msra.mxu0 0.0
  %1165 = vmatprep.subr.mxu0 0.0
  %1166 = vmatpush1.msra.mxu0 0.0
  %1167 = vmatprep.subr.mxu0 0.0
  %1168 = vmatpush1.msra.mxu0 0.0
  %1169 = vmatprep.subr.mxu0 0.0
  %1170 = vmatpush1.msra.mxu0 0.0
  %1171 = vmatprep.subr.mxu0 0.0
  %1172 = vmatpush1.msra.mxu0 0.0
  %1173 = vmatprep.subr.mxu0 0.0
  %1174 = vmatpush1.msra.mxu0 0.0
  %1175 = vmatprep.subr.mxu0 0.0
  %1176 = vmatpush1.msra.mxu0 0.0
  %1177 = vmatprep.subr.mxu0 0.0
  %1178 = vmatpush1.msra.mxu0 0.0
  %1179 = vmatprep.subr.mxu0 0.0
  %1180 = vmatpush1.msra.mxu0 0.0
  %1181 = vmatprep.subr.mxu0 0.0
  %1182 = vmatpush1.msra.mxu0 0.0
  %1183 = vmatprep.mubr.f32.mxu0 0.0
  %1184 = vmatmul.mubr.f32.gmra.mrb[0].mxu0 %v1114
  %v1185 = vpop.f32.mrb[0].mxu0
  %v1186 = vadd.f32 0.0, %v1185
  %v1187 = vpop.f32.mrb[0].mxu0
  %1188 = vdwg.mxu0
  %v1191 = vunpack.c.l.s4 1966171168
  %v1192 = vunpack.c.0.s8 %v1191
  %v1193 = vlaneseq
  %v1194 = vshrl.u32 %v1193, 7
  %v1195 = vsub.s32 %v1192, %v1194
  %v1196 = vrot.slane %v1186, %v1195
  %v1197 = vcombine.high %v1196, %v1196
  %v1199 = vunpack.c.l.s4 1966171168
  %v1200 = vunpack.c.0.s8 %v1199
  %v1201 = vlaneseq
  %v1202 = vshrl.u32 %v1201, 7
  %v1203 = vsub.s32 %v1200, %v1202
  %v1204 = vrot.slane %v1196, %v1203
  %v1206 = vunpack.c.l.s4 1966171168
  %v1207 = vunpack.c.0.s8 %v1206
  %v1208 = vlaneseq
  %v1209 = vshrl.u32 %v1208, 7
  %v1210 = vsub.s32 %v1207, %v1209
  %v1211 = vrot.slane %v1197, %v1210
  %v1212 = vlaneseq
  %v1213 = vshrl.u32 %v1212, 7
  %v1214 = vsub.s32 0, %v1213
  %v1215 = vrot.slane %v1204, %v1214
  %v1216 = vlaneseq
  %v1217 = vshrl.u32 %v1216, 7
  %v1218 = vsub.s32 0, %v1217
  %v1219 = vrot.slane %v1211, %v1218
  %v1222 = vadd.f32 %v129, %v1215
  %v1223 = vadd.f32 %v130, %v1219
  %v1224 = vtanh.pop %v1222
  %v1225 = vtanh.pop %v1223
  %v1226 = vmul.f32 %v1224, %v674
  %v1227 = vmul.f32 %v1225, %v674
  %1228 = vadd.xlane.f32.xlu0 %v1226
  %v1229 = vpop.xlane.xlu0 %1228
  %1230 = vadd.xlane.f32.xlu0 %v1227
  %v1231 = vpop.xlane.xlu0 %1230
  %v1234 = vlaneseq
  %v1235 = vshrl.u32 %v1234, 7
  %v1236 = vsub.s32 %v685, %v1235
  %v1237 = vrot.slane %v1229, %v1236
  %v1238 = vlaneseq
  %v1239 = vshrl.u32 %v1238, 7
  %v1240 = vsub.s32 %v685, %v1239
  %v1241 = vrot.slane %v1231, %v1240
  %v1242 = vsel %vm694, %v1241, %v1237
  %v1244 = vsel %vm697, %v1242, -inf
  %1245 = vmax.xlane.f32.xlu0 %v1244
  %v1246 = vpop.xlane.xlu0 %1245
  %v1248 = vlaneseq
  %v1249 = vshrl.u32 %v1248, 7
  %v1250 = vsub.s32 0, %v1249
  %v1251 = vrot.slane %v1246, %v1250
  %v1252 = vlaneseq
  %v1253 = vshrl.u32 %v1252, 7
  %v1254 = vsub.s32 1, %v1253
  %v1255 = vrot.slane %v1246, %v1254
  %v1258 = vsub.f32 %v1229, %v1251
  %v1259 = vsub.f32 %v1231, %v1255
  %v1260 = vmul.f32 %v1258, 1.442695
  %v1261 = vpow.pop %v1260
  %v1262 = vmul.f32 %v1259, 1.442695
  %v1263 = vpow.pop %v1262
  %1266 = vset.pattern.permute.xlu0 0
  %1267 = vperm.xlu0 %1266, %v1261
  %v1268 = vpop.permute.xlu0 %1267
  %1269 = vset.pattern.permute.xlu0 0
  %1270 = vperm.xlu0 %1269, %v1263
  %v1271 = vpop.permute.xlu0 %1270
  %v1272 = vlaneseq
  %v1273 = vshrl.u32 %v1272, 7
  %v1274 = vsub.s32 %v685, %v1273
  %v1275 = vrot.slane %v1268, %v1274
  %v1276 = vlaneseq
  %v1277 = vshrl.u32 %v1276, 7
  %v1278 = vsub.s32 %v685, %v1277
  %v1279 = vrot.slane %v1271, %v1278
  %v1280 = vsel %vm694, %v1279, %v1275
  %v1282 = vsel %vm697, %v1280, 0.0
  %1283 = vadd.xlane.f32.xlu0 %v1282
  %v1284 = vpop.xlane.xlu0 %1283
  %v1285 = vrcp.pop %v1284
  %v1287 = vlaneseq
  %v1288 = vshrl.u32 %v1287, 7
  %v1289 = vsub.s32 0, %v1288
  %v1290 = vrot.slane %v1285, %v1289
  %v1291 = vlaneseq
  %v1292 = vshrl.u32 %v1291, 7
  %v1293 = vsub.s32 1, %v1292
  %v1294 = vrot.slane %v1285, %v1293
  %v1297 = vmul.f32 %v1261, %v1290
  %v1298 = vmul.f32 %v1263, %v1294
  %1300 = vset.pattern.permute.xlu0 0
  %1301 = vperm.xlu0 %1300, %v1297
  %v1302 = vpop.permute.xlu0 %1301
  %v1303 = vlaneseq
  %v1304 = vshrl.u32 %v1303, 7
  %v1305 = vsub.s32 %v685, %v1304
  %v1306 = vrot.slane %v1302, %v1305
  %v1307 = vsel %vm761, %v1306, 0
  %1309 = vmatprep.subr.mxu0 0.0
  %1310 = vmatpush1.msra.mxu0 %v34
  %1311 = vmatprep.subr.mxu0 0.0
  %1312 = vmatpush1.msra.mxu0 0.0
  %1313 = vmatprep.subr.mxu0 0.0
  %1314 = vmatpush1.msra.mxu0 0.0
  %1315 = vmatprep.subr.mxu0 0.0
  %1316 = vmatpush1.msra.mxu0 0.0
  %1317 = vmatprep.subr.mxu0 0.0
  %1318 = vmatpush1.msra.mxu0 0.0
  %1319 = vmatprep.subr.mxu0 0.0
  %1320 = vmatpush1.msra.mxu0 0.0
  %1321 = vmatprep.subr.mxu0 0.0
  %1322 = vmatpush1.msra.mxu0 0.0
  %1323 = vmatprep.subr.mxu0 0.0
  %1324 = vmatpush1.msra.mxu0 0.0
  %1325 = vmatprep.subr.mxu0 0.0
  %1326 = vmatpush1.msra.mxu0 0.0
  %1327 = vmatprep.subr.mxu0 0.0
  %1328 = vmatpush1.msra.mxu0 0.0
  %1329 = vmatprep.subr.mxu0 0.0
  %1330 = vmatpush1.msra.mxu0 0.0
  %1331 = vmatprep.subr.mxu0 0.0
  %1332 = vmatpush1.msra.mxu0 0.0
  %1333 = vmatprep.subr.mxu0 0.0
  %1334 = vmatpush1.msra.mxu0 0.0
  %1335 = vmatprep.subr.mxu0 0.0
  %1336 = vmatpush1.msra.mxu0 0.0
  %1337 = vmatprep.subr.mxu0 0.0
  %1338 = vmatpush1.msra.mxu0 0.0
  %1339 = vmatprep.subr.mxu0 0.0
  %1340 = vmatpush1.msra.mxu0 0.0
  %1341 = vmatprep.subr.mxu0 0.0
  %1342 = vmatpush1.msra.mxu0 0.0
  %1343 = vmatprep.subr.mxu0 0.0
  %1344 = vmatpush1.msra.mxu0 0.0
  %1345 = vmatprep.subr.mxu0 0.0
  %1346 = vmatpush1.msra.mxu0 0.0
  %1347 = vmatprep.subr.mxu0 0.0
  %1348 = vmatpush1.msra.mxu0 0.0
  %1349 = vmatprep.subr.mxu0 0.0
  %1350 = vmatpush1.msra.mxu0 0.0
  %1351 = vmatprep.subr.mxu0 0.0
  %1352 = vmatpush1.msra.mxu0 0.0
  %1353 = vmatprep.subr.mxu0 0.0
  %1354 = vmatpush1.msra.mxu0 0.0
  %1355 = vmatprep.subr.mxu0 0.0
  %1356 = vmatpush1.msra.mxu0 0.0
  %1357 = vmatprep.subr.mxu0 0.0
  %1358 = vmatpush1.msra.mxu0 0.0
  %1359 = vmatprep.subr.mxu0 0.0
  %1360 = vmatpush1.msra.mxu0 0.0
  %1361 = vmatprep.subr.mxu0 0.0
  %1362 = vmatpush1.msra.mxu0 0.0
  %1363 = vmatprep.subr.mxu0 0.0
  %1364 = vmatpush1.msra.mxu0 0.0
  %1365 = vmatprep.subr.mxu0 0.0
  %1366 = vmatpush1.msra.mxu0 0.0
  %1367 = vmatprep.subr.mxu0 0.0
  %1368 = vmatpush1.msra.mxu0 0.0
  %1369 = vmatprep.subr.mxu0 0.0
  %1370 = vmatpush1.msra.mxu0 0.0
  %1371 = vmatprep.subr.mxu0 0.0
  %1372 = vmatpush1.msra.mxu0 0.0
  %1373 = vmatprep.mubr.f32.mxu0 0.0
  %1374 = vmatmul.mubr.f32.gmra.mrb[0].mxu0 %v1307
  %v1375 = vpop.f32.mrb[0].mxu0
  %v1376 = vadd.f32 0.0, %v1375
  %v1377 = vpop.f32.mrb[0].mxu0
  %1378 = vdwg.mxu0
  %1380 = vset.pattern.permute.xlu0 0
  %1381 = vperm.xlu0 %1380, %v1298
  %v1382 = vpop.permute.xlu0 %1381
  %v1383 = vlaneseq
  %v1384 = vshrl.u32 %v1383, 7
  %v1385 = vsub.s32 %v685, %v1384
  %v1386 = vrot.slane %v1382, %v1385
  %v1387 = vsel %vm761, %v1386, 0
  %1389 = vmatprep.subr.mxu0 0.0
  %1390 = vmatpush1.msra.mxu0 %v35
  %1391 = vmatprep.subr.mxu0 0.0
  %1392 = vmatpush1.msra.mxu0 0.0
  %1393 = vmatprep.subr.mxu0 0.0
  %1394 = vmatpush1.msra.mxu0 0.0
  %1395 = vmatprep.subr.mxu0 0.0
  %1396 = vmatpush1.msra.mxu0 0.0
  %1397 = vmatprep.subr.mxu0 0.0
  %1398 = vmatpush1.msra.mxu0 0.0
  %1399 = vmatprep.subr.mxu0 0.0
  %1400 = vmatpush1.msra.mxu0 0.0
  %1401 = vmatprep.subr.mxu0 0.0
  %1402 = vmatpush1.msra.mxu0 0.0
  %1403 = vmatprep.subr.mxu0 0.0
  %1404 = vmatpush1.msra.mxu0 0.0
  %1405 = vmatprep.subr.mxu0 0.0
  %1406 = vmatpush1.msra.mxu0 0.0
  %1407 = vmatprep.subr.mxu0 0.0
  %1408 = vmatpush1.msra.mxu0 0.0
  %1409 = vmatprep.subr.mxu0 0.0
  %1410 = vmatpush1.msra.mxu0 0.0
  %1411 = vmatprep.subr.mxu0 0.0
  %1412 = vmatpush1.msra.mxu0 0.0
  %1413 = vmatprep.subr.mxu0 0.0
  %1414 = vmatpush1.msra.mxu0 0.0
  %1415 = vmatprep.subr.mxu0 0.0
  %1416 = vmatpush1.msra.mxu0 0.0
  %1417 = vmatprep.subr.mxu0 0.0
  %1418 = vmatpush1.msra.mxu0 0.0
  %1419 = vmatprep.subr.mxu0 0.0
  %1420 = vmatpush1.msra.mxu0 0.0
  %1421 = vmatprep.subr.mxu0 0.0
  %1422 = vmatpush1.msra.mxu0 0.0
  %1423 = vmatprep.subr.mxu0 0.0
  %1424 = vmatpush1.msra.mxu0 0.0
  %1425 = vmatprep.subr.mxu0 0.0
  %1426 = vmatpush1.msra.mxu0 0.0
  %1427 = vmatprep.subr.mxu0 0.0
  %1428 = vmatpush1.msra.mxu0 0.0
  %1429 = vmatprep.subr.mxu0 0.0
  %1430 = vmatpush1.msra.mxu0 0.0
  %1431 = vmatprep.subr.mxu0 0.0
  %1432 = vmatpush1.msra.mxu0 0.0
  %1433 = vmatprep.subr.mxu0 0.0
  %1434 = vmatpush1.msra.mxu0 0.0
  %1435 = vmatprep.subr.mxu0 0.0
  %1436 = vmatpush1.msra.mxu0 0.0
  %1437 = vmatprep.subr.mxu0 0.0
  %1438 = vmatpush1.msra.mxu0 0.0
  %1439 = vmatprep.subr.mxu0 0.0
  %1440 = vmatpush1.msra.mxu0 0.0
  %1441 = vmatprep.subr.mxu0 0.0
  %1442 = vmatpush1.msra.mxu0 0.0
  %1443 = vmatprep.subr.mxu0 0.0
  %1444 = vmatpush1.msra.mxu0 0.0
  %1445 = vmatprep.subr.mxu0 0.0
  %1446 = vmatpush1.msra.mxu0 0.0
  %1447 = vmatprep.subr.mxu0 0.0
  %1448 = vmatpush1.msra.mxu0 0.0
  %1449 = vmatprep.subr.mxu0 0.0
  %1450 = vmatpush1.msra.mxu0 0.0
  %1451 = vmatprep.subr.mxu0 0.0
  %1452 = vmatpush1.msra.mxu0 0.0
  %1453 = vmatprep.mubr.f32.mxu0 0.0
  %1454 = vmatmul.mubr.f32.gmra.mrb[0].mxu0 %v1387
  %v1455 = vpop.f32.mrb[0].mxu0
  %v1456 = vadd.f32 0.0, %v1455
  %v1457 = vpop.f32.mrb[0].mxu0
  %1458 = vdwg.mxu0
  %v1461 = vrot.slane %v1456, 7
  %v1462 = vsel %vm694, %v1461, %v1376
  %s1463 = scalar_lea.vmem [#allocation2], 8
  %v1464 = vld [vmem:[%s1463] sm:$0xff]
  %v1465 = vsel %vm40, %v1462, 0
  %1467 = vmatprep.subr.mxu0 %v484
  %1468 = vmatpush1.msra.mxu0 %v483
  %1469 = vmatprep.subr.mxu0 %v488
  %1470 = vmatpush1.msra.mxu0 %v487
  %1471 = vmatprep.subr.mxu0 %v492
  %1472 = vmatpush1.msra.mxu0 %v491
  %1473 = vmatprep.subr.mxu0 %v496
  %1474 = vmatpush1.msra.mxu0 %v495
  %1475 = vmatprep.subr.mxu0 %v500
  %1476 = vmatpush1.msra.mxu0 %v499
  %1477 = vmatprep.subr.mxu0 %v504
  %1478 = vmatpush1.msra.mxu0 %v503
  %1479 = vmatprep.subr.mxu0 %v508
  %1480 = vmatpush1.msra.mxu0 %v507
  %1481 = vmatprep.subr.mxu0 %v512
  %1482 = vmatpush1.msra.mxu0 %v511
  %1483 = vmatprep.subr.mxu0 %v516
  %1484 = vmatpush1.msra.mxu0 %v515
  %1485 = vmatprep.subr.mxu0 %v520
  %1486 = vmatpush1.msra.mxu0 %v519
  %1487 = vmatprep.subr.mxu0 %v524
  %1488 = vmatpush1.msra.mxu0 %v523
  %1489 = vmatprep.subr.mxu0 %v528
  %1490 = vmatpush1.msra.mxu0 %v527
  %1491 = vmatprep.subr.mxu0 %v532
  %1492 = vmatpush1.msra.mxu0 %v531
  %1493 = vmatprep.subr.mxu0 %v536
  %1494 = vmatpush1.msra.mxu0 %v535
  %1495 = vmatprep.subr.mxu0 %v540
  %1496 = vmatpush1.msra.mxu0 %v539
  %1497 = vmatprep.subr.mxu0 %v544
  %1498 = vmatpush1.msra.mxu0 %v543
  %1499 = vmatprep.subr.mxu0 %v548
  %1500 = vmatpush1.msra.mxu0 %v547
  %1501 = vmatprep.subr.mxu0 %v552
  %1502 = vmatpush1.msra.mxu0 %v551
  %1503 = vmatprep.subr.mxu0 %v556
  %1504 = vmatpush1.msra.mxu0 %v555
  %1505 = vmatprep.subr.mxu0 %v560
  %1506 = vmatpush1.msra.mxu0 %v559
  %1507 = vmatprep.subr.mxu0 0.0
  %1508 = vmatpush1.msra.mxu0 0.0
  %1509 = vmatprep.subr.mxu0 0.0
  %1510 = vmatpush1.msra.mxu0 0.0
  %1511 = vmatprep.subr.mxu0 0.0
  %1512 = vmatpush1.msra.mxu0 0.0
  %1513 = vmatprep.subr.mxu0 0.0
  %1514 = vmatpush1.msra.mxu0 0.0
  %1515 = vmatprep.subr.mxu0 0.0
  %1516 = vmatpush1.msra.mxu0 0.0
  %1517 = vmatprep.subr.mxu0 0.0
  %1518 = vmatpush1.msra.mxu0 0.0
  %1519 = vmatprep.subr.mxu0 0.0
  %1520 = vmatpush1.msra.mxu0 0.0
  %1521 = vmatprep.subr.mxu0 0.0
  %1522 = vmatpush1.msra.mxu0 0.0
  %1523 = vmatprep.subr.mxu0 0.0
  %1524 = vmatpush1.msra.mxu0 0.0
  %1525 = vmatprep.subr.mxu0 0.0
  %1526 = vmatpush1.msra.mxu0 0.0
  %1527 = vmatprep.subr.mxu0 0.0
  %1528 = vmatpush1.msra.mxu0 0.0
  %1529 = vmatprep.subr.mxu0 0.0
  %1530 = vmatpush1.msra.mxu0 0.0
  %1531 = vmatprep.mubr.f32.mxu0 %v1465
  %1532 = vmatmul.mubr.f32.gmra.mrb[0].mxu0 %v1116
  %v1533 = vpop.f32.mrb[0].mxu0
  %v1534 = vadd.f32 0.0, %v1533
  %v1535 = vpop.f32.mrb[0].mxu0
  %v1536 = vadd.f32 0.0, %v1535
  %1537 = vdwg.mxu0
  %1538 = vmatprep.subr.mxu0 %v486
  %1539 = vmatpush1.msra.mxu0 %v485
  %1540 = vmatprep.subr.mxu0 %v490
  %1541 = vmatpush1.msra.mxu0 %v489
  %1542 = vmatprep.subr.mxu0 %v494
  %1543 = vmatpush1.msra.mxu0 %v493
  %1544 = vmatprep.subr.mxu0 %v498
  %1545 = vmatpush1.msra.mxu0 %v497
  %1546 = vmatprep.subr.mxu0 %v502
  %1547 = vmatpush1.msra.mxu0 %v501
  %1548 = vmatprep.subr.mxu0 %v506
  %1549 = vmatpush1.msra.mxu0 %v505
  %1550 = vmatprep.subr.mxu0 %v510
  %1551 = vmatpush1.msra.mxu0 %v509
  %1552 = vmatprep.subr.mxu0 %v514
  %1553 = vmatpush1.msra.mxu0 %v513
  %1554 = vmatprep.subr.mxu0 %v518
  %1555 = vmatpush1.msra.mxu0 %v517
  %1556 = vmatprep.subr.mxu0 %v522
  %1557 = vmatpush1.msra.mxu0 %v521
  %1558 = vmatprep.subr.mxu0 %v526
  %1559 = vmatpush1.msra.mxu0 %v525
  %1560 = vmatprep.subr.mxu0 %v530
  %1561 = vmatpush1.msra.mxu0 %v529
  %1562 = vmatprep.subr.mxu0 %v534
  %1563 = vmatpush1.msra.mxu0 %v533
  %1564 = vmatprep.subr.mxu0 %v538
  %1565 = vmatpush1.msra.mxu0 %v537
  %1566 = vmatprep.subr.mxu0 %v542
  %1567 = vmatpush1.msra.mxu0 %v541
  %1568 = vmatprep.subr.mxu0 %v546
  %1569 = vmatpush1.msra.mxu0 %v545
  %1570 = vmatprep.subr.mxu0 %v550
  %1571 = vmatpush1.msra.mxu0 %v549
  %1572 = vmatprep.subr.mxu0 %v554
  %1573 = vmatpush1.msra.mxu0 %v553
  %1574 = vmatprep.subr.mxu0 %v558
  %1575 = vmatpush1.msra.mxu0 %v557
  %1576 = vmatprep.subr.mxu0 %v562
  %1577 = vmatpush1.msra.mxu0 %v561
  %1578 = vmatprep.subr.mxu0 0.0
  %1579 = vmatpush1.msra.mxu0 0.0
  %1580 = vmatprep.subr.mxu0 0.0
  %1581 = vmatpush1.msra.mxu0 0.0
  %1582 = vmatprep.subr.mxu0 0.0
  %1583 = vmatpush1.msra.mxu0 0.0
  %1584 = vmatprep.subr.mxu0 0.0
  %1585 = vmatpush1.msra.mxu0 0.0
  %1586 = vmatprep.subr.mxu0 0.0
  %1587 = vmatpush1.msra.mxu0 0.0
  %1588 = vmatprep.subr.mxu0 0.0
  %1589 = vmatpush1.msra.mxu0 0.0
  %1590 = vmatprep.subr.mxu0 0.0
  %1591 = vmatpush1.msra.mxu0 0.0
  %1592 = vmatprep.subr.mxu0 0.0
  %1593 = vmatpush1.msra.mxu0 0.0
  %1594 = vmatprep.subr.mxu0 0.0
  %1595 = vmatpush1.msra.mxu0 0.0
  %1596 = vmatprep.subr.mxu0 0.0
  %1597 = vmatpush1.msra.mxu0 0.0
  %1598 = vmatprep.subr.mxu0 0.0
  %1599 = vmatpush1.msra.mxu0 0.0
  %1600 = vmatprep.subr.mxu0 0.0
  %1601 = vmatpush1.msra.mxu0 0.0
  %1602 = vmatprep.mubr.f32.mxu0 %v1465
  %1603 = vmatmul.mubr.f32.gmra.mrb[0].mxu0 %v1116
  %v1604 = vpop.f32.mrb[0].mxu0
  %v1605 = vadd.f32 0.0, %v1604
  %v1606 = vpop.f32.mrb[0].mxu0
  %v1607 = vadd.f32 0.0, %v1606
  %1608 = vdwg.mxu0
  %v1613 = vcombine.low %v1534, %v1536
  %v1614 = vcombine.low %v1605, %v1607
  %v1616 = vunpack.c.l.s4 1983009808
  %v1617 = vunpack.c.0.s8 %v1616
  %v1618 = vlaneseq
  %v1619 = vshrl.u32 %v1618, 7
  %v1620 = vsub.s32 %v1617, %v1619
  %v1621 = vrot.slane %v1613, %v1620
  %v1623 = vunpack.c.l.s4 1983009808
  %v1624 = vunpack.c.0.s8 %v1623
  %v1625 = vlaneseq
  %v1626 = vshrl.u32 %v1625, 7
  %v1627 = vsub.s32 %v1624, %v1626
  %v1628 = vrot.slane %v1614, %v1627
  %v1629 = vcombine.low %v1621, %v1628
  %v1631 = vadd.f32 %v1464, %v1629
  %v1632 = vxor.u32 %v1631, 2147483648
  %v1633 = vmul.f32 %v1632, 1.442695
  %v1634 = vpow.pop %v1633
  %v1635 = vadd.f32 %v1634, 1.0
  %v1636 = vrcp.pop %v1635
  %v1637 = vmul.f32 1.0, %v1636
  %v1639 = vrot.slane %v1631, 2
  %v1641 = vxor.u32 %v1639, 2147483648
  %v1642 = vmul.f32 %v1641, 1.442695
  %v1643 = vpow.pop %v1642
  %v1644 = vadd.f32 %v1643, 1.0
  %v1645 = vrcp.pop %v1644
  %v1646 = vmul.f32 1.0, %v1645
  %v1647 = vrot.slane %v1631, 4
  %v1649 = vtanh.pop %v1647
  %v1650 = vrot.slane %v1631, 6
  %v1652 = vxor.u32 %v1650, 2147483648
  %v1653 = vmul.f32 %v1652, 1.442695
  %v1654 = vpow.pop %v1653
  %v1655 = vadd.f32 %v1654, 1.0
  %v1656 = vrcp.pop %v1655
  %v1657 = vmul.f32 1.0, %v1656
  %v1658 = vmul.f32 %v1646, %v1114
  %v1659 = vmul.f32 %v1637, %v1649
  %v1660 = vadd.f32 %v1658, %v1659
  %v1661 = vtanh.pop %v1660
  %v1662 = vmul.f32 %v1657, %v1661
  %s1663 = scalar_lea.vmem %s9, 2
  %1664 = vst [vmem:[%s1663] sm:$0x3] %v1662
  %s1665 = scalar_lea.vmem %s10, 2
  %1666 = vst [vmem:[%s1665] sm:$0x3] %v1660
  %1667 = vmatprep.subr.mxu0 0.0
  %1668 = vmatpush1.msra.mxu0 %v467
  %1669 = vmatprep.subr.mxu0 0.0
  %1670 = vmatpush1.msra.mxu0 %v468
  %1671 = vmatprep.subr.mxu0 0.0
  %1672 = vmatpush1.msra.mxu0 %v469
  %1673 = vmatprep.subr.mxu0 0.0
  %1674 = vmatpush1.msra.mxu0 %v470
  %1675 = vmatprep.subr.mxu0 0.0
  %1676 = vmatpush1.msra.mxu0 %v471
  %1677 = vmatprep.subr.mxu0 0.0
  %1678 = vmatpush1.msra.mxu0 %v472
  %1679 = vmatprep.subr.mxu0 0.0
  %1680 = vmatpush1.msra.mxu0 %v473
  %1681 = vmatprep.subr.mxu0 0.0
  %1682 = vmatpush1.msra.mxu0 %v474
  %1683 = vmatprep.subr.mxu0 0.0
  %1684 = vmatpush1.msra.mxu0 %v475
  %1685 = vmatprep.subr.mxu0 0.0
  %1686 = vmatpush1.msra.mxu0 %v476
  %1687 = vmatprep.subr.mxu0 0.0
  %1688 = vmatpush1.msra.mxu0 %v477
  %1689 = vmatprep.subr.mxu0 0.0
  %1690 = vmatpush1.msra.mxu0 %v478
  %1691 = vmatprep.subr.mxu0 0.0
  %1692 = vmatpush1.msra.mxu0 %v479
  %1693 = vmatprep.subr.mxu0 0.0
  %1694 = vmatpush1.msra.mxu0 %v480
  %1695 = vmatprep.subr.mxu0 0.0
  %1696 = vmatpush1.msra.mxu0 %v481
  %1697 = vmatprep.subr.mxu0 0.0
  %1698 = vmatpush1.msra.mxu0 %v482
  %1699 = vmatprep.subr.mxu0 0.0
  %1700 = vmatpush1.msra.mxu0 0.0
  %1701 = vmatprep.subr.mxu0 0.0
  %1702 = vmatpush1.msra.mxu0 0.0
  %1703 = vmatprep.subr.mxu0 0.0
  %1704 = vmatpush1.msra.mxu0 0.0
  %1705 = vmatprep.subr.mxu0 0.0
  %1706 = vmatpush1.msra.mxu0 0.0
  %1707 = vmatprep.subr.mxu0 0.0
  %1708 = vmatpush1.msra.mxu0 0.0
  %1709 = vmatprep.subr.mxu0 0.0
  %1710 = vmatpush1.msra.mxu0 0.0
  %1711 = vmatprep.subr.mxu0 0.0
  %1712 = vmatpush1.msra.mxu0 0.0
  %1713 = vmatprep.subr.mxu0 0.0
  %1714 = vmatpush1.msra.mxu0 0.0
  %1715 = vmatprep.subr.mxu0 0.0
  %1716 = vmatpush1.msra.mxu0 0.0
  %1717 = vmatprep.subr.mxu0 0.0
  %1718 = vmatpush1.msra.mxu0 0.0
  %1719 = vmatprep.subr.mxu0 0.0
  %1720 = vmatpush1.msra.mxu0 0.0
  %1721 = vmatprep.subr.mxu0 0.0
  %1722 = vmatpush1.msra.mxu0 0.0
  %1723 = vmatprep.subr.mxu0 0.0
  %1724 = vmatpush1.msra.mxu0 0.0
  %1725 = vmatprep.subr.mxu0 0.0
  %1726 = vmatpush1.msra.mxu0 0.0
  %1727 = vmatprep.subr.mxu0 0.0
  %1728 = vmatpush1.msra.mxu0 0.0
  %1729 = vmatprep.subr.mxu0 0.0
  %1730 = vmatpush1.msra.mxu0 0.0
  %1731 = vmatprep.mubr.f32.mxu0 0.0
  %1732 = vmatmul.mubr.f32.gmra.mrb[0].mxu0 %v1660
  %v1733 = vpop.f32.mrb[0].mxu0
  %v1734 = vadd.f32 0.0, %v1733
  %v1735 = vpop.f32.mrb[0].mxu0
  %1736 = vdwg.mxu0
  %v1739 = vunpack.c.l.s4 1966171168
  %v1740 = vunpack.c.0.s8 %v1739
  %v1741 = vlaneseq
  %v1742 = vshrl.u32 %v1741, 7
  %v1743 = vsub.s32 %v1740, %v1742
  %v1744 = vrot.slane %v1734, %v1743
  %v1745 = vcombine.high %v1744, %v1744
  %v1747 = vunpack.c.l.s4 1966171168
  %v1748 = vunpack.c.0.s8 %v1747
  %v1749 = vlaneseq
  %v1750 = vshrl.u32 %v1749, 7
  %v1751 = vsub.s32 %v1748, %v1750
  %v1752 = vrot.slane %v1744, %v1751
  %v1754 = vunpack.c.l.s4 1966171168
  %v1755 = vunpack.c.0.s8 %v1754
  %v1756 = vlaneseq
  %v1757 = vshrl.u32 %v1756, 7
  %v1758 = vsub.s32 %v1755, %v1757
  %v1759 = vrot.slane %v1745, %v1758
  %v1760 = vlaneseq
  %v1761 = vshrl.u32 %v1760, 7
  %v1762 = vsub.s32 0, %v1761
  %v1763 = vrot.slane %v1752, %v1762
  %v1764 = vlaneseq
  %v1765 = vshrl.u32 %v1764, 7
  %v1766 = vsub.s32 0, %v1765
  %v1767 = vrot.slane %v1759, %v1766
  %v1770 = vadd.f32 %v129, %v1763
  %v1771 = vadd.f32 %v130, %v1767
  %v1772 = vtanh.pop %v1770
  %v1773 = vtanh.pop %v1771
  %v1774 = vmul.f32 %v1772, %v674
  %v1775 = vmul.f32 %v1773, %v674
  %1776 = vadd.xlane.f32.xlu0 %v1774
  %v1777 = vpop.xlane.xlu0 %1776
  %1778 = vadd.xlane.f32.xlu0 %v1775
  %v1779 = vpop.xlane.xlu0 %1778
  %v1782 = vlaneseq
  %v1783 = vshrl.u32 %v1782, 7
  %v1784 = vsub.s32 %v685, %v1783
  %v1785 = vrot.slane %v1777, %v1784
  %v1786 = vlaneseq
  %v1787 = vshrl.u32 %v1786, 7
  %v1788 = vsub.s32 %v685, %v1787
  %v1789 = vrot.slane %v1779, %v1788
  %v1790 = vsel %vm694, %v1789, %v1785
  %v1792 = vsel %vm697, %v1790, -inf
  %1793 = vmax.xlane.f32.xlu0 %v1792
  %v1794 = vpop.xlane.xlu0 %1793
  %v1796 = vlaneseq
  %v1797 = vshrl.u32 %v1796, 7
  %v1798 = vsub.s32 0, %v1797
  %v1799 = vrot.slane %v1794, %v1798
  %v1800 = vlaneseq
  %v1801 = vshrl.u32 %v1800, 7
  %v1802 = vsub.s32 1, %v1801
  %v1803 = vrot.slane %v1794, %v1802
  %v1806 = vsub.f32 %v1777, %v1799
  %v1807 = vsub.f32 %v1779, %v1803
  %v1808 = vmul.f32 %v1806, 1.442695
  %v1809 = vpow.pop %v1808
  %v1810 = vmul.f32 %v1807, 1.442695
  %v1811 = vpow.pop %v1810
  %1814 = vset.pattern.permute.xlu0 0
  %1815 = vperm.xlu0 %1814, %v1809
  %v1816 = vpop.permute.xlu0 %1815
  %1817 = vset.pattern.permute.xlu0 0
  %1818 = vperm.xlu0 %1817, %v1811
  %v1819 = vpop.permute.xlu0 %1818
  %v1820 = vlaneseq
  %v1821 = vshrl.u32 %v1820, 7
  %v1822 = vsub.s32 %v685, %v1821
  %v1823 = vrot.slane %v1816, %v1822
  %v1824 = vlaneseq
  %v1825 = vshrl.u32 %v1824, 7
  %v1826 = vsub.s32 %v685, %v1825
  %v1827 = vrot.slane %v1819, %v1826
  %v1828 = vsel %vm694, %v1827, %v1823
  %v1830 = vsel %vm697, %v1828, 0.0
  %1831 = vadd.xlane.f32.xlu0 %v1830
  %v1832 = vpop.xlane.xlu0 %1831
  %v1833 = vrcp.pop %v1832
  %v1835 = vlaneseq
  %v1836 = vshrl.u32 %v1835, 7
  %v1837 = vsub.s32 0, %v1836
  %v1838 = vrot.slane %v1833, %v1837
  %v1839 = vlaneseq
  %v1840 = vshrl.u32 %v1839, 7
  %v1841 = vsub.s32 1, %v1840
  %v1842 = vrot.slane %v1833, %v1841
  %v1845 = vmul.f32 %v1809, %v1838
  %v1846 = vmul.f32 %v1811, %v1842
  %1848 = vset.pattern.permute.xlu0 0
  %1849 = vperm.xlu0 %1848, %v1845
  %v1850 = vpop.permute.xlu0 %1849
  %v1851 = vlaneseq
  %v1852 = vshrl.u32 %v1851, 7
  %v1853 = vsub.s32 %v685, %v1852
  %v1854 = vrot.slane %v1850, %v1853
  %v1855 = vsel %vm761, %v1854, 0
  %1857 = vmatprep.subr.mxu0 0.0
  %1858 = vmatpush1.msra.mxu0 %v34
  %1859 = vmatprep.subr.mxu0 0.0
  %1860 = vmatpush1.msra.mxu0 0.0
  %1861 = vmatprep.subr.mxu0 0.0
  %1862 = vmatpush1.msra.mxu0 0.0
  %1863 = vmatprep.subr.mxu0 0.0
  %1864 = vmatpush1.msra.mxu0 0.0
  %1865 = vmatprep.subr.mxu0 0.0
  %1866 = vmatpush1.msra.mxu0 0.0
  %1867 = vmatprep.subr.mxu0 0.0
  %1868 = vmatpush1.msra.mxu0 0.0
  %1869 = vmatprep.subr.mxu0 0.0
  %1870 = vmatpush1.msra.mxu0 0.0
  %1871 = vmatprep.subr.mxu0 0.0
  %1872 = vmatpush1.msra.mxu0 0.0
  %1873 = vmatprep.subr.mxu0 0.0
  %1874 = vmatpush1.msra.mxu0 0.0
  %1875 = vmatprep.subr.mxu0 0.0
  %1876 = vmatpush1.msra.mxu0 0.0
  %1877 = vmatprep.subr.mxu0 0.0
  %1878 = vmatpush1.msra.mxu0 0.0
  %1879 = vmatprep.subr.mxu0 0.0
  %1880 = vmatpush1.msra.mxu0 0.0
  %1881 = vmatprep.subr.mxu0 0.0
  %1882 = vmatpush1.msra.mxu0 0.0
  %1883 = vmatprep.subr.mxu0 0.0
  %1884 = vmatpush1.msra.mxu0 0.0
  %1885 = vmatprep.subr.mxu0 0.0
  %1886 = vmatpush1.msra.mxu0 0.0
  %1887 = vmatprep.subr.mxu0 0.0
  %1888 = vmatpush1.msra.mxu0 0.0
  %1889 = vmatprep.subr.mxu0 0.0
  %1890 = vmatpush1.msra.mxu0 0.0
  %1891 = vmatprep.subr.mxu0 0.0
  %1892 = vmatpush1.msra.mxu0 0.0
  %1893 = vmatprep.subr.mxu0 0.0
  %1894 = vmatpush1.msra.mxu0 0.0
  %1895 = vmatprep.subr.mxu0 0.0
  %1896 = vmatpush1.msra.mxu0 0.0
  %1897 = vmatprep.subr.mxu0 0.0
  %1898 = vmatpush1.msra.mxu0 0.0
  %1899 = vmatprep.subr.mxu0 0.0
  %1900 = vmatpush1.msra.mxu0 0.0
  %1901 = vmatprep.subr.mxu0 0.0
  %1902 = vmatpush1.msra.mxu0 0.0
  %1903 = vmatprep.subr.mxu0 0.0
  %1904 = vmatpush1.msra.mxu0 0.0
  %1905 = vmatprep.subr.mxu0 0.0
  %1906 = vmatpush1.msra.mxu0 0.0
  %1907 = vmatprep.subr.mxu0 0.0
  %1908 = vmatpush1.msra.mxu0 0.0
  %1909 = vmatprep.subr.mxu0 0.0
  %1910 = vmatpush1.msra.mxu0 0.0
  %1911 = vmatprep.subr.mxu0 0.0
  %1912 = vmatpush1.msra.mxu0 0.0
  %1913 = vmatprep.subr.mxu0 0.0
  %1914 = vmatpush1.msra.mxu0 0.0
  %1915 = vmatprep.subr.mxu0 0.0
  %1916 = vmatpush1.msra.mxu0 0.0
  %1917 = vmatprep.subr.mxu0 0.0
  %1918 = vmatpush1.msra.mxu0 0.0
  %1919 = vmatprep.subr.mxu0 0.0
  %1920 = vmatpush1.msra.mxu0 0.0
  %1921 = vmatprep.mubr.f32.mxu0 0.0
  %1922 = vmatmul.mubr.f32.gmra.mrb[0].mxu0 %v1855
  %v1923 = vpop.f32.mrb[0].mxu0
  %v1924 = vadd.f32 0.0, %v1923
  %v1925 = vpop.f32.mrb[0].mxu0
  %1926 = vdwg.mxu0
  %1928 = vset.pattern.permute.xlu0 0
  %1929 = vperm.xlu0 %1928, %v1846
  %v1930 = vpop.permute.xlu0 %1929
  %v1931 = vlaneseq
  %v1932 = vshrl.u32 %v1931, 7
  %v1933 = vsub.s32 %v685, %v1932
  %v1934 = vrot.slane %v1930, %v1933
  %v1935 = vsel %vm761, %v1934, 0
  %1937 = vmatprep.subr.mxu0 0.0
  %1938 = vmatpush1.msra.mxu0 %v35
  %1939 = vmatprep.subr.mxu0 0.0
  %1940 = vmatpush1.msra.mxu0 0.0
  %1941 = vmatprep.subr.mxu0 0.0
  %1942 = vmatpush1.msra.mxu0 0.0
  %1943 = vmatprep.subr.mxu0 0.0
  %1944 = vmatpush1.msra.mxu0 0.0
  %1945 = vmatprep.subr.mxu0 0.0
  %1946 = vmatpush1.msra.mxu0 0.0
  %1947 = vmatprep.subr.mxu0 0.0
  %1948 = vmatpush1.msra.mxu0 0.0
  %1949 = vmatprep.subr.mxu0 0.0
  %1950 = vmatpush1.msra.mxu0 0.0
  %1951 = vmatprep.subr.mxu0 0.0
  %1952 = vmatpush1.msra.mxu0 0.0
  %1953 = vmatprep.subr.mxu0 0.0
  %1954 = vmatpush1.msra.mxu0 0.0
  %1955 = vmatprep.subr.mxu0 0.0
  %1956 = vmatpush1.msra.mxu0 0.0
  %1957 = vmatprep.subr.mxu0 0.0
  %1958 = vmatpush1.msra.mxu0 0.0
  %1959 = vmatprep.subr.mxu0 0.0
  %1960 = vmatpush1.msra.mxu0 0.0
  %1961 = vmatprep.subr.mxu0 0.0
  %1962 = vmatpush1.msra.mxu0 0.0
  %1963 = vmatprep.subr.mxu0 0.0
  %1964 = vmatpush1.msra.mxu0 0.0
  %1965 = vmatprep.subr.mxu0 0.0
  %1966 = vmatpush1.msra.mxu0 0.0
  %1967 = vmatprep.subr.mxu0 0.0
  %1968 = vmatpush1.msra.mxu0 0.0
  %1969 = vmatprep.subr.mxu0 0.0
  %1970 = vmatpush1.msra.mxu0 0.0
  %1971 = vmatprep.subr.mxu0 0.0
  %1972 = vmatpush1.msra.mxu0 0.0
  %1973 = vmatprep.subr.mxu0 0.0
  %1974 = vmatpush1.msra.mxu0 0.0
  %1975 = vmatprep.subr.mxu0 0.0
  %1976 = vmatpush1.msra.mxu0 0.0
  %1977 = vmatprep.subr.mxu0 0.0
  %1978 = vmatpush1.msra.mxu0 0.0
  %1979 = vmatprep.subr.mxu0 0.0
  %1980 = vmatpush1.msra.mxu0 0.0
  %1981 = vmatprep.subr.mxu0 0.0
  %1982 = vmatpush1.msra.mxu0 0.0
  %1983 = vmatprep.subr.mxu0 0.0
  %1984 = vmatpush1.msra.mxu0 0.0
  %1985 = vmatprep.subr.mxu0 0.0
  %1986 = vmatpush1.msra.mxu0 0.0
  %1987 = vmatprep.subr.mxu0 0.0
  %1988 = vmatpush1.msra.mxu0 0.0
  %1989 = vmatprep.subr.mxu0 0.0
  %1990 = vmatpush1.msra.mxu0 0.0
  %1991 = vmatprep.subr.mxu0 0.0
  %1992 = vmatpush1.msra.mxu0 0.0
  %1993 = vmatprep.subr.mxu0 0.0
  %1994 = vmatpush1.msra.mxu0 0.0
  %1995 = vmatprep.subr.mxu0 0.0
  %1996 = vmatpush1.msra.mxu0 0.0
  %1997 = vmatprep.subr.mxu0 0.0
  %1998 = vmatpush1.msra.mxu0 0.0
  %1999 = vmatprep.subr.mxu0 0.0
  %2000 = vmatpush1.msra.mxu0 0.0
  %2001 = vmatprep.mubr.f32.mxu0 0.0
  %2002 = vmatmul.mubr.f32.gmra.mrb[0].mxu0 %v1935
  %v2003 = vpop.f32.mrb[0].mxu0
  %v2004 = vadd.f32 0.0, %v2003
  %v2005 = vpop.f32.mrb[0].mxu0
  %2006 = vdwg.mxu0
  %v2009 = vrot.slane %v2004, 7
  %v2010 = vsel %vm694, %v2009, %v1924
  %s2011 = scalar_lea.vmem [#allocation2], 16
  %v2012 = vld [vmem:[%s2011] sm:$0xff]
  %v2013 = vsel %vm40, %v2010, 0
  %2015 = vmatprep.subr.mxu0 %v484
  %2016 = vmatpush1.msra.mxu0 %v483
  %2017 = vmatprep.subr.mxu0 %v488
  %2018 = vmatpush1.msra.mxu0 %v487
  %2019 = vmatprep.subr.mxu0 %v492
  %2020 = vmatpush1.msra.mxu0 %v491
  %2021 = vmatprep.subr.mxu0 %v496
  %2022 = vmatpush1.msra.mxu0 %v495
  %2023 = vmatprep.subr.mxu0 %v500
  %2024 = vmatpush1.msra.mxu0 %v499
  %2025 = vmatprep.subr.mxu0 %v504
  %2026 = vmatpush1.msra.mxu0 %v503
  %2027 = vmatprep.subr.mxu0 %v508
  %2028 = vmatpush1.msra.mxu0 %v507
  %2029 = vmatprep.subr.mxu0 %v512
  %2030 = vmatpush1.msra.mxu0 %v511
  %2031 = vmatprep.subr.mxu0 %v516
  %2032 = vmatpush1.msra.mxu0 %v515
  %2033 = vmatprep.subr.mxu0 %v520
  %2034 = vmatpush1.msra.mxu0 %v519
  %2035 = vmatprep.subr.mxu0 %v524
  %2036 = vmatpush1.msra.mxu0 %v523
  %2037 = vmatprep.subr.mxu0 %v528
  %2038 = vmatpush1.msra.mxu0 %v527
  %2039 = vmatprep.subr.mxu0 %v532
  %2040 = vmatpush1.msra.mxu0 %v531
  %2041 = vmatprep.subr.mxu0 %v536
  %2042 = vmatpush1.msra.mxu0 %v535
  %2043 = vmatprep.subr.mxu0 %v540
  %2044 = vmatpush1.msra.mxu0 %v539
  %2045 = vmatprep.subr.mxu0 %v544
  %2046 = vmatpush1.msra.mxu0 %v543
  %2047 = vmatprep.subr.mxu0 %v548
  %2048 = vmatpush1.msra.mxu0 %v547
  %2049 = vmatprep.subr.mxu0 %v552
  %2050 = vmatpush1.msra.mxu0 %v551
  %2051 = vmatprep.subr.mxu0 %v556
  %2052 = vmatpush1.msra.mxu0 %v555
  %2053 = vmatprep.subr.mxu0 %v560
  %2054 = vmatpush1.msra.mxu0 %v559
  %2055 = vmatprep.subr.mxu0 0.0
  %2056 = vmatpush1.msra.mxu0 0.0
  %2057 = vmatprep.subr.mxu0 0.0
  %2058 = vmatpush1.msra.mxu0 0.0
  %2059 = vmatprep.subr.mxu0 0.0
  %2060 = vmatpush1.msra.mxu0 0.0
  %2061 = vmatprep.subr.mxu0 0.0
  %2062 = vmatpush1.msra.mxu0 0.0
  %2063 = vmatprep.subr.mxu0 0.0
  %2064 = vmatpush1.msra.mxu0 0.0
  %2065 = vmatprep.subr.mxu0 0.0
  %2066 = vmatpush1.msra.mxu0 0.0
  %2067 = vmatprep.subr.mxu0 0.0
  %2068 = vmatpush1.msra.mxu0 0.0
  %2069 = vmatprep.subr.mxu0 0.0
  %2070 = vmatpush1.msra.mxu0 0.0
  %2071 = vmatprep.subr.mxu0 0.0
  %2072 = vmatpush1.msra.mxu0 0.0
  %2073 = vmatprep.subr.mxu0 0.0
  %2074 = vmatpush1.msra.mxu0 0.0
  %2075 = vmatprep.subr.mxu0 0.0
  %2076 = vmatpush1.msra.mxu0 0.0
  %2077 = vmatprep.subr.mxu0 0.0
  %2078 = vmatpush1.msra.mxu0 0.0
  %2079 = vmatprep.mubr.f32.mxu0 %v2013
  %2080 = vmatmul.mubr.f32.gmra.mrb[0].mxu0 %v1662
  %v2081 = vpop.f32.mrb[0].mxu0
  %v2082 = vadd.f32 0.0, %v2081
  %v2083 = vpop.f32.mrb[0].mxu0
  %v2084 = vadd.f32 0.0, %v2083
  %2085 = vdwg.mxu0
  %2086 = vmatprep.subr.mxu0 %v486
  %2087 = vmatpush1.msra.mxu0 %v485
  %2088 = vmatprep.subr.mxu0 %v490
  %2089 = vmatpush1.msra.mxu0 %v489
  %2090 = vmatprep.subr.mxu0 %v494
  %2091 = vmatpush1.msra.mxu0 %v493
  %2092 = vmatprep.subr.mxu0 %v498
  %2093 = vmatpush1.msra.mxu0 %v497
  %2094 = vmatprep.subr.mxu0 %v502
  %2095 = vmatpush1.msra.mxu0 %v501
  %2096 = vmatprep.subr.mxu0 %v506
  %2097 = vmatpush1.msra.mxu0 %v505
  %2098 = vmatprep.subr.mxu0 %v510
  %2099 = vmatpush1.msra.mxu0 %v509
  %2100 = vmatprep.subr.mxu0 %v514
  %2101 = vmatpush1.msra.mxu0 %v513
  %2102 = vmatprep.subr.mxu0 %v518
  %2103 = vmatpush1.msra.mxu0 %v517
  %2104 = vmatprep.subr.mxu0 %v522
  %2105 = vmatpush1.msra.mxu0 %v521
  %2106 = vmatprep.subr.mxu0 %v526
  %2107 = vmatpush1.msra.mxu0 %v525
  %2108 = vmatprep.subr.mxu0 %v530
  %2109 = vmatpush1.msra.mxu0 %v529
  %2110 = vmatprep.subr.mxu0 %v534
  %2111 = vmatpush1.msra.mxu0 %v533
  %2112 = vmatprep.subr.mxu0 %v538
  %2113 = vmatpush1.msra.mxu0 %v537
  %2114 = vmatprep.subr.mxu0 %v542
  %2115 = vmatpush1.msra.mxu0 %v541
  %2116 = vmatprep.subr.mxu0 %v546
  %2117 = vmatpush1.msra.mxu0 %v545
  %2118 = vmatprep.subr.mxu0 %v550
  %2119 = vmatpush1.msra.mxu0 %v549
  %2120 = vmatprep.subr.mxu0 %v554
  %2121 = vmatpush1.msra.mxu0 %v553
  %2122 = vmatprep.subr.mxu0 %v558
  %2123 = vmatpush1.msra.mxu0 %v557
  %2124 = vmatprep.subr.mxu0 %v562
  %2125 = vmatpush1.msra.mxu0 %v561
  %2126 = vmatprep.subr.mxu0 0.0
  %2127 = vmatpush1.msra.mxu0 0.0
  %2128 = vmatprep.subr.mxu0 0.0
  %2129 = vmatpush1.msra.mxu0 0.0
  %2130 = vmatprep.subr.mxu0 0.0
  %2131 = vmatpush1.msra.mxu0 0.0
  %2132 = vmatprep.subr.mxu0 0.0
  %2133 = vmatpush1.msra.mxu0 0.0
  %2134 = vmatprep.subr.mxu0 0.0
  %2135 = vmatpush1.msra.mxu0 0.0
  %2136 = vmatprep.subr.mxu0 0.0
  %2137 = vmatpush1.msra.mxu0 0.0
  %2138 = vmatprep.subr.mxu0 0.0
  %2139 = vmatpush1.msra.mxu0 0.0
  %2140 = vmatprep.subr.mxu0 0.0
  %2141 = vmatpush1.msra.mxu0 0.0
  %2142 = vmatprep.subr.mxu0 0.0
  %2143 = vmatpush1.msra.mxu0 0.0
  %2144 = vmatprep.subr.mxu0 0.0
  %2145 = vmatpush1.msra.mxu0 0.0
  %2146 = vmatprep.subr.mxu0 0.0
  %2147 = vmatpush1.msra.mxu0 0.0
  %2148 = vmatprep.subr.mxu0 0.0
  %2149 = vmatpush1.msra.mxu0 0.0
  %2150 = vmatprep.mubr.f32.mxu0 %v2013
  %2151 = vmatmul.mubr.f32.gmra.mrb[0].mxu0 %v1662
  %v2152 = vpop.f32.mrb[0].mxu0
  %v2153 = vadd.f32 0.0, %v2152
  %v2154 = vpop.f32.mrb[0].mxu0
  %v2155 = vadd.f32 0.0, %v2154
  %2156 = vdwg.mxu0
  %v2161 = vcombine.low %v2082, %v2084
  %v2162 = vcombine.low %v2153, %v2155
  %v2164 = vunpack.c.l.s4 1983009808
  %v2165 = vunpack.c.0.s8 %v2164
  %v2166 = vlaneseq
  %v2167 = vshrl.u32 %v2166, 7
  %v2168 = vsub.s32 %v2165, %v2167
  %v2169 = vrot.slane %v2161, %v2168
  %v2171 = vunpack.c.l.s4 1983009808
  %v2172 = vunpack.c.0.s8 %v2171
  %v2173 = vlaneseq
  %v2174 = vshrl.u32 %v2173, 7
  %v2175 = vsub.s32 %v2172, %v2174
  %v2176 = vrot.slane %v2162, %v2175
  %v2177 = vcombine.low %v2169, %v2176
  %v2179 = vadd.f32 %v2012, %v2177
  %v2180 = vxor.u32 %v2179, 2147483648
  %v2181 = vmul.f32 %v2180, 1.442695
  %v2182 = vpow.pop %v2181
  %v2183 = vadd.f32 %v2182, 1.0
  %v2184 = vrcp.pop %v2183
  %v2185 = vmul.f32 1.0, %v2184
  %v2187 = vrot.slane %v2179, 2
  %v2189 = vxor.u32 %v2187, 2147483648
  %v2190 = vmul.f32 %v2189, 1.442695
  %v2191 = vpow.pop %v2190
  %v2192 = vadd.f32 %v2191, 1.0
  %v2193 = vrcp.pop %v2192
  %v2194 = vmul.f32 1.0, %v2193
  %v2195 = vrot.slane %v2179, 4
  %v2197 = vtanh.pop %v2195
  %v2198 = vrot.slane %v2179, 6
  %v2200 = vxor.u32 %v2198, 2147483648
  %v2201 = vmul.f32 %v2200, 1.442695
  %v2202 = vpow.pop %v2201
  %v2203 = vadd.f32 %v2202, 1.0
  %v2204 = vrcp.pop %v2203
  %v2205 = vmul.f32 1.0, %v2204
  %v2206 = vmul.f32 %v2194, %v1660
  %v2207 = vmul.f32 %v2185, %v2197
  %v2208 = vadd.f32 %v2206, %v2207
  %v2209 = vtanh.pop %v2208
  %v2210 = vmul.f32 %v2205, %v2209
  %s2211 = scalar_lea.vmem %s9, 4
  %2212 = vst [vmem:[%s2211] sm:$0x3] %v2210
  %s2213 = scalar_lea.vmem %s10, 4
  %2214 = vst [vmem:[%s2213] sm:$0x3] %v2208
  %2215 = vmatprep.subr.mxu0 0.0
  %2216 = vmatpush1.msra.mxu0 %v467
  %2217 = vmatprep.subr.mxu0 0.0
  %2218 = vmatpush1.msra.mxu0 %v468
  %2219 = vmatprep.subr.mxu0 0.0
  %2220 = vmatpush1.msra.mxu0 %v469
  %2221 = vmatprep.subr.mxu0 0.0
  %2222 = vmatpush1.msra.mxu0 %v470
  %2223 = vmatprep.subr.mxu0 0.0
  %2224 = vmatpush1.msra.mxu0 %v471
  %2225 = vmatprep.subr.mxu0 0.0
  %2226 = vmatpush1.msra.mxu0 %v472
  %2227 = vmatprep.subr.mxu0 0.0
  %2228 = vmatpush1.msra.mxu0 %v473
  %2229 = vmatprep.subr.mxu0 0.0
  %2230 = vmatpush1.msra.mxu0 %v474
  %2231 = vmatprep.subr.mxu0 0.0
  %2232 = vmatpush1.msra.mxu0 %v475
  %2233 = vmatprep.subr.mxu0 0.0
  %2234 = vmatpush1.msra.mxu0 %v476
  %2235 = vmatprep.subr.mxu0 0.0
  %2236 = vmatpush1.msra.mxu0 %v477
  %2237 = vmatprep.subr.mxu0 0.0
  %2238 = vmatpush1.msra.mxu0 %v478
  %2239 = vmatprep.subr.mxu0 0.0
  %2240 = vmatpush1.msra.mxu0 %v479
  %2241 = vmatprep.subr.mxu0 0.0
  %2242 = vmatpush1.msra.mxu0 %v480
  %2243 = vmatprep.subr.mxu0 0.0
  %2244 = vmatpush1.msra.mxu0 %v481
  %2245 = vmatprep.subr.mxu0 0.0
  %2246 = vmatpush1.msra.mxu0 %v482
  %2247 = vmatprep.subr.mxu0 0.0
  %2248 = vmatpush1.msra.mxu0 0.0
  %2249 = vmatprep.subr.mxu0 0.0
  %2250 = vmatpush1.msra.mxu0 0.0
  %2251 = vmatprep.subr.mxu0 0.0
  %2252 = vmatpush1.msra.mxu0 0.0
  %2253 = vmatprep.subr.mxu0 0.0
  %2254 = vmatpush1.msra.mxu0 0.0
  %2255 = vmatprep.subr.mxu0 0.0
  %2256 = vmatpush1.msra.mxu0 0.0
  %2257 = vmatprep.subr.mxu0 0.0
  %2258 = vmatpush1.msra.mxu0 0.0
  %2259 = vmatprep.subr.mxu0 0.0
  %2260 = vmatpush1.msra.mxu0 0.0
  %2261 = vmatprep.subr.mxu0 0.0
  %2262 = vmatpush1.msra.mxu0 0.0
  %2263 = vmatprep.subr.mxu0 0.0
  %2264 = vmatpush1.msra.mxu0 0.0
  %2265 = vmatprep.subr.mxu0 0.0
  %2266 = vmatpush1.msra.mxu0 0.0
  %2267 = vmatprep.subr.mxu0 0.0
  %2268 = vmatpush1.msra.mxu0 0.0
  %2269 = vmatprep.subr.mxu0 0.0
  %2270 = vmatpush1.msra.mxu0 0.0
  %2271 = vmatprep.subr.mxu0 0.0
  %2272 = vmatpush1.msra.mxu0 0.0
  %2273 = vmatprep.subr.mxu0 0.0
  %2274 = vmatpush1.msra.mxu0 0.0
  %2275 = vmatprep.subr.mxu0 0.0
  %2276 = vmatpush1.msra.mxu0 0.0
  %2277 = vmatprep.subr.mxu0 0.0
  %2278 = vmatpush1.msra.mxu0 0.0
  %2279 = vmatprep.mubr.f32.mxu0 0.0
  %2280 = vmatmul.mubr.f32.gmra.mrb[0].mxu0 %v2208
  %v2281 = vpop.f32.mrb[0].mxu0
  %v2282 = vadd.f32 0.0, %v2281
  %v2283 = vpop.f32.mrb[0].mxu0
  %2284 = vdwg.mxu0
  %v2287 = vunpack.c.l.s4 1966171168
  %v2288 = vunpack.c.0.s8 %v2287
  %v2289 = vlaneseq
  %v2290 = vshrl.u32 %v2289, 7
  %v2291 = vsub.s32 %v2288, %v2290
  %v2292 = vrot.slane %v2282, %v2291
  %v2293 = vcombine.high %v2292, %v2292
  %v2295 = vunpack.c.l.s4 1966171168
  %v2296 = vunpack.c.0.s8 %v2295
  %v2297 = vlaneseq
  %v2298 = vshrl.u32 %v2297, 7
  %v2299 = vsub.s32 %v2296, %v2298
  %v2300 = vrot.slane %v2292, %v2299
  %v2302 = vunpack.c.l.s4 1966171168
  %v2303 = vunpack.c.0.s8 %v2302
  %v2304 = vlaneseq
  %v2305 = vshrl.u32 %v2304, 7
  %v2306 = vsub.s32 %v2303, %v2305
  %v2307 = vrot.slane %v2293, %v2306
  %v2308 = vlaneseq
  %v2309 = vshrl.u32 %v2308, 7
  %v2310 = vsub.s32 0, %v2309
  %v2311 = vrot.slane %v2300, %v2310
  %v2312 = vlaneseq
  %v2313 = vshrl.u32 %v2312, 7
  %v2314 = vsub.s32 0, %v2313
  %v2315 = vrot.slane %v2307, %v2314
  %v2318 = vadd.f32 %v129, %v2311
  %v2319 = vadd.f32 %v130, %v2315
  %v2320 = vtanh.pop %v2318
  %v2321 = vtanh.pop %v2319
  %v2322 = vmul.f32 %v2320, %v674
  %v2323 = vmul.f32 %v2321, %v674
  %2324 = vadd.xlane.f32.xlu0 %v2322
  %v2325 = vpop.xlane.xlu0 %2324
  %2326 = vadd.xlane.f32.xlu0 %v2323
  %v2327 = vpop.xlane.xlu0 %2326
  %v2330 = vlaneseq
  %v2331 = vshrl.u32 %v2330, 7
  %v2332 = vsub.s32 %v685, %v2331
  %v2333 = vrot.slane %v2325, %v2332
  %v2334 = vlaneseq
  %v2335 = vshrl.u32 %v2334, 7
  %v2336 = vsub.s32 %v685, %v2335
  %v2337 = vrot.slane %v2327, %v2336
  %v2338 = vsel %vm694, %v2337, %v2333
  %v2340 = vsel %vm697, %v2338, -inf
  %2341 = vmax.xlane.f32.xlu0 %v2340
  %v2342 = vpop.xlane.xlu0 %2341
  %v2344 = vlaneseq
  %v2345 = vshrl.u32 %v2344, 7
  %v2346 = vsub.s32 0, %v2345
  %v2347 = vrot.slane %v2342, %v2346
  %v2348 = vlaneseq
  %v2349 = vshrl.u32 %v2348, 7
  %v2350 = vsub.s32 1, %v2349
  %v2351 = vrot.slane %v2342, %v2350
  %v2354 = vsub.f32 %v2325, %v2347
  %v2355 = vsub.f32 %v2327, %v2351
  %v2356 = vmul.f32 %v2354, 1.442695
  %v2357 = vpow.pop %v2356
  %v2358 = vmul.f32 %v2355, 1.442695
  %v2359 = vpow.pop %v2358
  %2362 = vset.pattern.permute.xlu0 0
  %2363 = vperm.xlu0 %2362, %v2357
  %v2364 = vpop.permute.xlu0 %2363
  %2365 = vset.pattern.permute.xlu0 0
  %2366 = vperm.xlu0 %2365, %v2359
  %v2367 = vpop.permute.xlu0 %2366
  %v2368 = vlaneseq
  %v2369 = vshrl.u32 %v2368, 7
  %v2370 = vsub.s32 %v685, %v2369
  %v2371 = vrot.slane %v2364, %v2370
  %v2372 = vlaneseq
  %v2373 = vshrl.u32 %v2372, 7
  %v2374 = vsub.s32 %v685, %v2373
  %v2375 = vrot.slane %v2367, %v2374
  %v2376 = vsel %vm694, %v2375, %v2371
  %v2378 = vsel %vm697, %v2376, 0.0
  %2379 = vadd.xlane.f32.xlu0 %v2378
  %v2380 = vpop.xlane.xlu0 %2379
  %v2381 = vrcp.pop %v2380
  %v2383 = vlaneseq
  %v2384 = vshrl.u32 %v2383, 7
  %v2385 = vsub.s32 0, %v2384
  %v2386 = vrot.slane %v2381, %v2385
  %v2387 = vlaneseq
  %v2388 = vshrl.u32 %v2387, 7
  %v2389 = vsub.s32 1, %v2388
  %v2390 = vrot.slane %v2381, %v2389
  %v2393 = vmul.f32 %v2357, %v2386
  %v2394 = vmul.f32 %v2359, %v2390
  %2396 = vset.pattern.permute.xlu0 0
  %2397 = vperm.xlu0 %2396, %v2393
  %v2398 = vpop.permute.xlu0 %2397
  %v2399 = vlaneseq
  %v2400 = vshrl.u32 %v2399, 7
  %v2401 = vsub.s32 %v685, %v2400
  %v2402 = vrot.slane %v2398, %v2401
  %v2403 = vsel %vm761, %v2402, 0
  %2405 = vmatprep.subr.mxu0 0.0
  %2406 = vmatpush1.msra.mxu0 %v34
  %2407 = vmatprep.subr.mxu0 0.0
  %2408 = vmatpush1.msra.mxu0 0.0
  %2409 = vmatprep.subr.mxu0 0.0
  %2410 = vmatpush1.msra.mxu0 0.0
  %2411 = vmatprep.subr.mxu0 0.0
  %2412 = vmatpush1.msra.mxu0 0.0
  %2413 = vmatprep.subr.mxu0 0.0
  %2414 = vmatpush1.msra.mxu0 0.0
  %2415 = vmatprep.subr.mxu0 0.0
  %2416 = vmatpush1.msra.mxu0 0.0
  %2417 = vmatprep.subr.mxu0 0.0
  %2418 = vmatpush1.msra.mxu0 0.0
  %2419 = vmatprep.subr.mxu0 0.0
  %2420 = vmatpush1.msra.mxu0 0.0
  %2421 = vmatprep.subr.mxu0 0.0
  %2422 = vmatpush1.msra.mxu0 0.0
  %2423 = vmatprep.subr.mxu0 0.0
  %2424 = vmatpush1.msra.mxu0 0.0
  %2425 = vmatprep.subr.mxu0 0.0
  %2426 = vmatpush1.msra.mxu0 0.0
  %2427 = vmatprep.subr.mxu0 0.0
  %2428 = vmatpush1.msra.mxu0 0.0
  %2429 = vmatprep.subr.mxu0 0.0
  %2430 = vmatpush1.msra.mxu0 0.0
  %2431 = vmatprep.subr.mxu0 0.0
  %2432 = vmatpush1.msra.mxu0 0.0
  %2433 = vmatprep.subr.mxu0 0.0
  %2434 = vmatpush1.msra.mxu0 0.0
  %2435 = vmatprep.subr.mxu0 0.0
  %2436 = vmatpush1.msra.mxu0 0.0
  %2437 = vmatprep.subr.mxu0 0.0
  %2438 = vmatpush1.msra.mxu0 0.0
  %2439 = vmatprep.subr.mxu0 0.0
  %2440 = vmatpush1.msra.mxu0 0.0
  %2441 = vmatprep.subr.mxu0 0.0
  %2442 = vmatpush1.msra.mxu0 0.0
  %2443 = vmatprep.subr.mxu0 0.0
  %2444 = vmatpush1.msra.mxu0 0.0
  %2445 = vmatprep.subr.mxu0 0.0
  %2446 = vmatpush1.msra.mxu0 0.0
  %2447 = vmatprep.subr.mxu0 0.0
  %2448 = vmatpush1.msra.mxu0 0.0
  %2449 = vmatprep.subr.mxu0 0.0
  %2450 = vmatpush1.msra.mxu0 0.0
  %2451 = vmatprep.subr.mxu0 0.0
  %2452 = vmatpush1.msra.mxu0 0.0
  %2453 = vmatprep.subr.mxu0 0.0
  %2454 = vmatpush1.msra.mxu0 0.0
  %2455 = vmatprep.subr.mxu0 0.0
  %2456 = vmatpush1.msra.mxu0 0.0
  %2457 = vmatprep.subr.mxu0 0.0
  %2458 = vmatpush1.msra.mxu0 0.0
  %2459 = vmatprep.subr.mxu0 0.0
  %2460 = vmatpush1.msra.mxu0 0.0
  %2461 = vmatprep.subr.mxu0 0.0
  %2462 = vmatpush1.msra.mxu0 0.0
  %2463 = vmatprep.subr.mxu0 0.0
  %2464 = vmatpush1.msra.mxu0 0.0
  %2465 = vmatprep.subr.mxu0 0.0
  %2466 = vmatpush1.msra.mxu0 0.0
  %2467 = vmatprep.subr.mxu0 0.0
  %2468 = vmatpush1.msra.mxu0 0.0
  %2469 = vmatprep.mubr.f32.mxu0 0.0
  %2470 = vmatmul.mubr.f32.gmra.mrb[0].mxu0 %v2403
  %v2471 = vpop.f32.mrb[0].mxu0
  %v2472 = vadd.f32 0.0, %v2471
  %v2473 = vpop.f32.mrb[0].mxu0
  %2474 = vdwg.mxu0
  %2476 = vset.pattern.permute.xlu0 0
  %2477 = vperm.xlu0 %2476, %v2394
  %v2478 = vpop.permute.xlu0 %2477
  %v2479 = vlaneseq
  %v2480 = vshrl.u32 %v2479, 7
  %v2481 = vsub.s32 %v685, %v2480
  %v2482 = vrot.slane %v2478, %v2481
  %v2483 = vsel %vm761, %v2482, 0
  %2485 = vmatprep.subr.mxu0 0.0
  %2486 = vmatpush1.msra.mxu0 %v35
  %2487 = vmatprep.subr.mxu0 0.0
  %2488 = vmatpush1.msra.mxu0 0.0
  %2489 = vmatprep.subr.mxu0 0.0
  %2490 = vmatpush1.msra.mxu0 0.0
  %2491 = vmatprep.subr.mxu0 0.0
  %2492 = vmatpush1.msra.mxu0 0.0
  %2493 = vmatprep.subr.mxu0 0.0
  %2494 = vmatpush1.msra.mxu0 0.0
  %2495 = vmatprep.subr.mxu0 0.0
  %2496 = vmatpush1.msra.mxu0 0.0
  %2497 = vmatprep.subr.mxu0 0.0
  %2498 = vmatpush1.msra.mxu0 0.0
  %2499 = vmatprep.subr.mxu0 0.0
  %2500 = vmatpush1.msra.mxu0 0.0
  %2501 = vmatprep.subr.mxu0 0.0
  %2502 = vmatpush1.msra.mxu0 0.0
  %2503 = vmatprep.subr.mxu0 0.0
  %2504 = vmatpush1.msra.mxu0 0.0
  %2505 = vmatprep.subr.mxu0 0.0
  %2506 = vmatpush1.msra.mxu0 0.0
  %2507 = vmatprep.subr.mxu0 0.0
  %2508 = vmatpush1.msra.mxu0 0.0
  %2509 = vmatprep.subr.mxu0 0.0
  %2510 = vmatpush1.msra.mxu0 0.0
  %2511 = vmatprep.subr.mxu0 0.0
  %2512 = vmatpush1.msra.mxu0 0.0
  %2513 = vmatprep.subr.mxu0 0.0
  %2514 = vmatpush1.msra.mxu0 0.0
  %2515 = vmatprep.subr.mxu0 0.0
  %2516 = vmatpush1.msra.mxu0 0.0
  %2517 = vmatprep.subr.mxu0 0.0
  %2518 = vmatpush1.msra.mxu0 0.0
  %2519 = vmatprep.subr.mxu0 0.0
  %2520 = vmatpush1.msra.mxu0 0.0
  %2521 = vmatprep.subr.mxu0 0.0
  %2522 = vmatpush1.msra.mxu0 0.0
  %2523 = vmatprep.subr.mxu0 0.0
  %2524 = vmatpush1.msra.mxu0 0.0
  %2525 = vmatprep.subr.mxu0 0.0
  %2526 = vmatpush1.msra.mxu0 0.0
  %2527 = vmatprep.subr.mxu0 0.0
  %2528 = vmatpush1.msra.mxu0 0.0
  %2529 = vmatprep.subr.mxu0 0.0
  %2530 = vmatpush1.msra.mxu0 0.0
  %2531 = vmatprep.subr.mxu0 0.0
  %2532 = vmatpush1.msra.mxu0 0.0
  %2533 = vmatprep.subr.mxu0 0.0
  %2534 = vmatpush1.msra.mxu0 0.0
  %2535 = vmatprep.subr.mxu0 0.0
  %2536 = vmatpush1.msra.mxu0 0.0
  %2537 = vmatprep.subr.mxu0 0.0
  %2538 = vmatpush1.msra.mxu0 0.0
  %2539 = vmatprep.subr.mxu0 0.0
  %2540 = vmatpush1.msra.mxu0 0.0
  %2541 = vmatprep.subr.mxu0 0.0
  %2542 = vmatpush1.msra.mxu0 0.0
  %2543 = vmatprep.subr.mxu0 0.0
  %2544 = vmatpush1.msra.mxu0 0.0
  %2545 = vmatprep.subr.mxu0 0.0
  %2546 = vmatpush1.msra.mxu0 0.0
  %2547 = vmatprep.subr.mxu0 0.0
  %2548 = vmatpush1.msra.mxu0 0.0
  %2549 = vmatprep.mubr.f32.mxu0 0.0
  %2550 = vmatmul.mubr.f32.gmra.mrb[0].mxu0 %v2483
  %v2551 = vpop.f32.mrb[0].mxu0
  %v2552 = vadd.f32 0.0, %v2551
  %v2553 = vpop.f32.mrb[0].mxu0
  %2554 = vdwg.mxu0
  %v2557 = vrot.slane %v2552, 7
  %v2558 = vsel %vm694, %v2557, %v2472
  %s2559 = scalar_lea.vmem [#allocation2], 24
  %v2560 = vld [vmem:[%s2559] sm:$0xff]
  %v2561 = vsel %vm40, %v2558, 0
  %2563 = vmatprep.subr.mxu0 %v484
  %2564 = vmatpush1.msra.mxu0 %v483
  %2565 = vmatprep.subr.mxu0 %v488
  %2566 = vmatpush1.msra.mxu0 %v487
  %2567 = vmatprep.subr.mxu0 %v492
  %2568 = vmatpush1.msra.mxu0 %v491
  %2569 = vmatprep.subr.mxu0 %v496
  %2570 = vmatpush1.msra.mxu0 %v495
  %2571 = vmatprep.subr.mxu0 %v500
  %2572 = vmatpush1.msra.mxu0 %v499
  %2573 = vmatprep.subr.mxu0 %v504
  %2574 = vmatpush1.msra.mxu0 %v503
  %2575 = vmatprep.subr.mxu0 %v508
  %2576 = vmatpush1.msra.mxu0 %v507
  %2577 = vmatprep.subr.mxu0 %v512
  %2578 = vmatpush1.msra.mxu0 %v511
  %2579 = vmatprep.subr.mxu0 %v516
  %2580 = vmatpush1.msra.mxu0 %v515
  %2581 = vmatprep.subr.mxu0 %v520
  %2582 = vmatpush1.msra.mxu0 %v519
  %2583 = vmatprep.subr.mxu0 %v524
  %2584 = vmatpush1.msra.mxu0 %v523
  %2585 = vmatprep.subr.mxu0 %v528
  %2586 = vmatpush1.msra.mxu0 %v527
  %2587 = vmatprep.subr.mxu0 %v532
  %2588 = vmatpush1.msra.mxu0 %v531
  %2589 = vmatprep.subr.mxu0 %v536
  %2590 = vmatpush1.msra.mxu0 %v535
  %2591 = vmatprep.subr.mxu0 %v540
  %2592 = vmatpush1.msra.mxu0 %v539
  %2593 = vmatprep.subr.mxu0 %v544
  %2594 = vmatpush1.msra.mxu0 %v543
  %2595 = vmatprep.subr.mxu0 %v548
  %2596 = vmatpush1.msra.mxu0 %v547
  %2597 = vmatprep.subr.mxu0 %v552
  %2598 = vmatpush1.msra.mxu0 %v551
  %2599 = vmatprep.subr.mxu0 %v556
  %2600 = vmatpush1.msra.mxu0 %v555
  %2601 = vmatprep.subr.mxu0 %v560
  %2602 = vmatpush1.msra.mxu0 %v559
  %2603 = vmatprep.subr.mxu0 0.0
  %2604 = vmatpush1.msra.mxu0 0.0
  %2605 = vmatprep.subr.mxu0 0.0
  %2606 = vmatpush1.msra.mxu0 0.0
  %2607 = vmatprep.subr.mxu0 0.0
  %2608 = vmatpush1.msra.mxu0 0.0
  %2609 = vmatprep.subr.mxu0 0.0
  %2610 = vmatpush1.msra.mxu0 0.0
  %2611 = vmatprep.subr.mxu0 0.0
  %2612 = vmatpush1.msra.mxu0 0.0
  %2613 = vmatprep.subr.mxu0 0.0
  %2614 = vmatpush1.msra.mxu0 0.0
  %2615 = vmatprep.subr.mxu0 0.0
  %2616 = vmatpush1.msra.mxu0 0.0
  %2617 = vmatprep.subr.mxu0 0.0
  %2618 = vmatpush1.msra.mxu0 0.0
  %2619 = vmatprep.subr.mxu0 0.0
  %2620 = vmatpush1.msra.mxu0 0.0
  %2621 = vmatprep.subr.mxu0 0.0
  %2622 = vmatpush1.msra.mxu0 0.0
  %2623 = vmatprep.subr.mxu0 0.0
  %2624 = vmatpush1.msra.mxu0 0.0
  %2625 = vmatprep.subr.mxu0 0.0
  %2626 = vmatpush1.msra.mxu0 0.0
  %2627 = vmatprep.mubr.f32.mxu0 %v2561
  %2628 = vmatmul.mubr.f32.gmra.mrb[0].mxu0 %v2210
  %v2629 = vpop.f32.mrb[0].mxu0
  %v2630 = vadd.f32 0.0, %v2629
  %v2631 = vpop.f32.mrb[0].mxu0
  %v2632 = vadd.f32 0.0, %v2631
  %2633 = vdwg.mxu0
  %2634 = vmatprep.subr.mxu0 %v486
  %2635 = vmatpush1.msra.mxu0 %v485
  %2636 = vmatprep.subr.mxu0 %v490
  %2637 = vmatpush1.msra.mxu0 %v489
  %2638 = vmatprep.subr.mxu0 %v494
  %2639 = vmatpush1.msra.mxu0 %v493
  %2640 = vmatprep.subr.mxu0 %v498
  %2641 = vmatpush1.msra.mxu0 %v497
  %2642 = vmatprep.subr.mxu0 %v502
  %2643 = vmatpush1.msra.mxu0 %v501
  %2644 = vmatprep.subr.mxu0 %v506
  %2645 = vmatpush1.msra.mxu0 %v505
  %2646 = vmatprep.subr.mxu0 %v510
  %2647 = vmatpush1.msra.mxu0 %v509
  %2648 = vmatprep.subr.mxu0 %v514
  %2649 = vmatpush1.msra.mxu0 %v513
  %2650 = vmatprep.subr.mxu0 %v518
  %2651 = vmatpush1.msra.mxu0 %v517
  %2652 = vmatprep.subr.mxu0 %v522
  %2653 = vmatpush1.msra.mxu0 %v521
  %2654 = vmatprep.subr.mxu0 %v526
  %2655 = vmatpush1.msra.mxu0 %v525
  %2656 = vmatprep.subr.mxu0 %v530
  %2657 = vmatpush1.msra.mxu0 %v529
  %2658 = vmatprep.subr.mxu0 %v534
  %2659 = vmatpush1.msra.mxu0 %v533
  %2660 = vmatprep.subr.mxu0 %v538
  %2661 = vmatpush1.msra.mxu0 %v537
  %2662 = vmatprep.subr.mxu0 %v542
  %2663 = vmatpush1.msra.mxu0 %v541
  %2664 = vmatprep.subr.mxu0 %v546
  %2665 = vmatpush1.msra.mxu0 %v545
  %2666 = vmatprep.subr.mxu0 %v550
  %2667 = vmatpush1.msra.mxu0 %v549
  %2668 = vmatprep.subr.mxu0 %v554
  %2669 = vmatpush1.msra.mxu0 %v553
  %2670 = vmatprep.subr.mxu0 %v558
  %2671 = vmatpush1.msra.mxu0 %v557
  %2672 = vmatprep.subr.mxu0 %v562
  %2673 = vmatpush1.msra.mxu0 %v561
  %2674 = vmatprep.subr.mxu0 0.0
  %2675 = vmatpush1.msra.mxu0 0.0
  %2676 = vmatprep.subr.mxu0 0.0
  %2677 = vmatpush1.msra.mxu0 0.0
  %2678 = vmatprep.subr.mxu0 0.0
  %2679 = vmatpush1.msra.mxu0 0.0
  %2680 = vmatprep.subr.mxu0 0.0
  %2681 = vmatpush1.msra.mxu0 0.0
  %2682 = vmatprep.subr.mxu0 0.0
  %2683 = vmatpush1.msra.mxu0 0.0
  %2684 = vmatprep.subr.mxu0 0.0
  %2685 = vmatpush1.msra.mxu0 0.0
  %2686 = vmatprep.subr.mxu0 0.0
  %2687 = vmatpush1.msra.mxu0 0.0
  %2688 = vmatprep.subr.mxu0 0.0
  %2689 = vmatpush1.msra.mxu0 0.0
  %2690 = vmatprep.subr.mxu0 0.0
  %2691 = vmatpush1.msra.mxu0 0.0
  %2692 = vmatprep.subr.mxu0 0.0
  %2693 = vmatpush1.msra.mxu0 0.0
  %2694 = vmatprep.subr.mxu0 0.0
  %2695 = vmatpush1.msra.mxu0 0.0
  %2696 = vmatprep.subr.mxu0 0.0
  %2697 = vmatpush1.msra.mxu0 0.0
  %2698 = vmatprep.mubr.f32.mxu0 %v2561
  %2699 = vmatmul.mubr.f32.gmra.mrb[0].mxu0 %v2210
  %v2700 = vpop.f32.mrb[0].mxu0
  %v2701 = vadd.f32 0.0, %v2700
  %v2702 = vpop.f32.mrb[0].mxu0
  %v2703 = vadd.f32 0.0, %v2702
  %2704 = vdwg.mxu0
  %v2709 = vcombine.low %v2630, %v2632
  %v2710 = vcombine.low %v2701, %v2703
  %v2712 = vunpack.c.l.s4 1983009808
  %v2713 = vunpack.c.0.s8 %v2712
  %v2714 = vlaneseq
  %v2715 = vshrl.u32 %v2714, 7
  %v2716 = vsub.s32 %v2713, %v2715
  %v2717 = vrot.slane %v2709, %v2716
  %v2719 = vunpack.c.l.s4 1983009808
  %v2720 = vunpack.c.0.s8 %v2719
  %v2721 = vlaneseq
  %v2722 = vshrl.u32 %v2721, 7
  %v2723 = vsub.s32 %v2720, %v2722
  %v2724 = vrot.slane %v2710, %v2723
  %v2725 = vcombine.low %v2717, %v2724
  %v2727 = vadd.f32 %v2560, %v2725
  %v2728 = vxor.u32 %v2727, 2147483648
  %v2729 = vmul.f32 %v2728, 1.442695
  %v2730 = vpow.pop %v2729
  %v2731 = vadd.f32 %v2730, 1.0
  %v2732 = vrcp.pop %v2731
  %v2733 = vmul.f32 1.0, %v2732
  %v2735 = vrot.slane %v2727, 2
  %v2737 = vxor.u32 %v2735, 2147483648
  %v2738 = vmul.f32 %v2737, 1.442695
  %v2739 = vpow.pop %v2738
  %v2740 = vadd.f32 %v2739, 1.0
  %v2741 = vrcp.pop %v2740
  %v2742 = vmul.f32 1.0, %v2741
  %v2743 = vrot.slane %v2727, 4
  %v2745 = vtanh.pop %v2743
  %v2746 = vrot.slane %v2727, 6
  %v2748 = vxor.u32 %v2746, 2147483648
  %v2749 = vmul.f32 %v2748, 1.442695
  %v2750 = vpow.pop %v2749
  %v2751 = vadd.f32 %v2750, 1.0
  %v2752 = vrcp.pop %v2751
  %v2753 = vmul.f32 1.0, %v2752
  %v2754 = vmul.f32 %v2742, %v2208
  %v2755 = vmul.f32 %v2733, %v2745
  %v2756 = vadd.f32 %v2754, %v2755
  %v2757 = vtanh.pop %v2756
  %v2758 = vmul.f32 %v2753, %v2757
  %s2759 = scalar_lea.vmem %s9, 6
  %2760 = vst [vmem:[%s2759] sm:$0x3] %v2758
  %s2761 = scalar_lea.vmem %s10, 6
  %2762 = vst [vmem:[%s2761] sm:$0x3] %v2756
  %2763 = vmatprep.subr.mxu0 0.0
  %2764 = vmatpush1.msra.mxu0 %v467
  %2765 = vmatprep.subr.mxu0 0.0
  %2766 = vmatpush1.msra.mxu0 %v468
  %2767 = vmatprep.subr.mxu0 0.0
  %2768 = vmatpush1.msra.mxu0 %v469
  %2769 = vmatprep.subr.mxu0 0.0
  %2770 = vmatpush1.msra.mxu0 %v470
  %2771 = vmatprep.subr.mxu0 0.0
  %2772 = vmatpush1.msra.mxu0 %v471
  %2773 = vmatprep.subr.mxu0 0.0
  %2774 = vmatpush1.msra.mxu0 %v472
  %2775 = vmatprep.subr.mxu0 0.0
  %2776 = vmatpush1.msra.mxu0 %v473
  %2777 = vmatprep.subr.mxu0 0.0
  %2778 = vmatpush1.msra.mxu0 %v474
  %2779 = vmatprep.subr.mxu0 0.0
  %2780 = vmatpush1.msra.mxu0 %v475
  %2781 = vmatprep.subr.mxu0 0.0
  %2782 = vmatpush1.msra.mxu0 %v476
  %2783 = vmatprep.subr.mxu0 0.0
  %2784 = vmatpush1.msra.mxu0 %v477
  %2785 = vmatprep.subr.mxu0 0.0
  %2786 = vmatpush1.msra.mxu0 %v478
  %2787 = vmatprep.subr.mxu0 0.0
  %2788 = vmatpush1.msra.mxu0 %v479
  %2789 = vmatprep.subr.mxu0 0.0
  %2790 = vmatpush1.msra.mxu0 %v480
  %2791 = vmatprep.subr.mxu0 0.0
  %2792 = vmatpush1.msra.mxu0 %v481
  %2793 = vmatprep.subr.mxu0 0.0
  %2794 = vmatpush1.msra.mxu0 %v482
  %2795 = vmatprep.subr.mxu0 0.0
  %2796 = vmatpush1.msra.mxu0 0.0
  %2797 = vmatprep.subr.mxu0 0.0
  %2798 = vmatpush1.msra.mxu0 0.0
  %2799 = vmatprep.subr.mxu0 0.0
  %2800 = vmatpush1.msra.mxu0 0.0
  %2801 = vmatprep.subr.mxu0 0.0
  %2802 = vmatpush1.msra.mxu0 0.0
  %2803 = vmatprep.subr.mxu0 0.0
  %2804 = vmatpush1.msra.mxu0 0.0
  %2805 = vmatprep.subr.mxu0 0.0
  %2806 = vmatpush1.msra.mxu0 0.0
  %2807 = vmatprep.subr.mxu0 0.0
  %2808 = vmatpush1.msra.mxu0 0.0
  %2809 = vmatprep.subr.mxu0 0.0
  %2810 = vmatpush1.msra.mxu0 0.0
  %2811 = vmatprep.subr.mxu0 0.0
  %2812 = vmatpush1.msra.mxu0 0.0
  %2813 = vmatprep.subr.mxu0 0.0
  %2814 = vmatpush1.msra.mxu0 0.0
  %2815 = vmatprep.subr.mxu0 0.0
  %2816 = vmatpush1.msra.mxu0 0.0
  %2817 = vmatprep.subr.mxu0 0.0
  %2818 = vmatpush1.msra.mxu0 0.0
  %2819 = vmatprep.subr.mxu0 0.0
  %2820 = vmatpush1.msra.mxu0 0.0
  %2821 = vmatprep.subr.mxu0 0.0
  %2822 = vmatpush1.msra.mxu0 0.0
  %2823 = vmatprep.subr.mxu0 0.0
  %2824 = vmatpush1.msra.mxu0 0.0
  %2825 = vmatprep.subr.mxu0 0.0
  %2826 = vmatpush1.msra.mxu0 0.0
  %2827 = vmatprep.mubr.f32.mxu0 0.0
  %2828 = vmatmul.mubr.f32.gmra.mrb[0].mxu0 %v2756
  %v2829 = vpop.f32.mrb[0].mxu0
  %v2830 = vadd.f32 0.0, %v2829
  %v2831 = vpop.f32.mrb[0].mxu0
  %2832 = vdwg.mxu0
  %v2835 = vunpack.c.l.s4 1966171168
  %v2836 = vunpack.c.0.s8 %v2835
  %v2837 = vlaneseq
  %v2838 = vshrl.u32 %v2837, 7
  %v2839 = vsub.s32 %v2836, %v2838
  %v2840 = vrot.slane %v2830, %v2839
  %v2841 = vcombine.high %v2840, %v2840
  %v2843 = vunpack.c.l.s4 1966171168
  %v2844 = vunpack.c.0.s8 %v2843
  %v2845 = vlaneseq
  %v2846 = vshrl.u32 %v2845, 7
  %v2847 = vsub.s32 %v2844, %v2846
  %v2848 = vrot.slane %v2840, %v2847
  %v2850 = vunpack.c.l.s4 1966171168
  %v2851 = vunpack.c.0.s8 %v2850
  %v2852 = vlaneseq
  %v2853 = vshrl.u32 %v2852, 7
  %v2854 = vsub.s32 %v2851, %v2853
  %v2855 = vrot.slane %v2841, %v2854
  %v2856 = vlaneseq
  %v2857 = vshrl.u32 %v2856, 7
  %v2858 = vsub.s32 0, %v2857
  %v2859 = vrot.slane %v2848, %v2858
  %v2860 = vlaneseq
  %v2861 = vshrl.u32 %v2860, 7
  %v2862 = vsub.s32 0, %v2861
  %v2863 = vrot.slane %v2855, %v2862
  %v2866 = vadd.f32 %v129, %v2859
  %v2867 = vadd.f32 %v130, %v2863
  %v2868 = vtanh.pop %v2866
  %v2869 = vtanh.pop %v2867
  %v2870 = vmul.f32 %v2868, %v674
  %v2871 = vmul.f32 %v2869, %v674
  %2872 = vadd.xlane.f32.xlu0 %v2870
  %v2873 = vpop.xlane.xlu0 %2872
  %2874 = vadd.xlane.f32.xlu0 %v2871
  %v2875 = vpop.xlane.xlu0 %2874
  %v2878 = vlaneseq
  %v2879 = vshrl.u32 %v2878, 7
  %v2880 = vsub.s32 %v685, %v2879
  %v2881 = vrot.slane %v2873, %v2880
  %v2882 = vlaneseq
  %v2883 = vshrl.u32 %v2882, 7
  %v2884 = vsub.s32 %v685, %v2883
  %v2885 = vrot.slane %v2875, %v2884
  %v2886 = vsel %vm694, %v2885, %v2881
  %v2888 = vsel %vm697, %v2886, -inf
  %2889 = vmax.xlane.f32.xlu0 %v2888
  %v2890 = vpop.xlane.xlu0 %2889
  %v2892 = vlaneseq
  %v2893 = vshrl.u32 %v2892, 7
  %v2894 = vsub.s32 0, %v2893
  %v2895 = vrot.slane %v2890, %v2894
  %v2896 = vlaneseq
  %v2897 = vshrl.u32 %v2896, 7
  %v2898 = vsub.s32 1, %v2897
  %v2899 = vrot.slane %v2890, %v2898
  %v2902 = vsub.f32 %v2873, %v2895
  %v2903 = vsub.f32 %v2875, %v2899
  %v2904 = vmul.f32 %v2902, 1.442695
  %v2905 = vpow.pop %v2904
  %v2906 = vmul.f32 %v2903, 1.442695
  %v2907 = vpow.pop %v2906
  %2910 = vset.pattern.permute.xlu0 0
  %2911 = vperm.xlu0 %2910, %v2905
  %v2912 = vpop.permute.xlu0 %2911
  %2913 = vset.pattern.permute.xlu0 0
  %2914 = vperm.xlu0 %2913, %v2907
  %v2915 = vpop.permute.xlu0 %2914
  %v2916 = vlaneseq
  %v2917 = vshrl.u32 %v2916, 7
  %v2918 = vsub.s32 %v685, %v2917
  %v2919 = vrot.slane %v2912, %v2918
  %v2920 = vlaneseq
  %v2921 = vshrl.u32 %v2920, 7
  %v2922 = vsub.s32 %v685, %v2921
  %v2923 = vrot.slane %v2915, %v2922
  %v2924 = vsel %vm694, %v2923, %v2919
  %v2926 = vsel %vm697, %v2924, 0.0
  %2927 = vadd.xlane.f32.xlu0 %v2926
  %v2928 = vpop.xlane.xlu0 %2927
  %v2929 = vrcp.pop %v2928
  %v2931 = vlaneseq
  %v2932 = vshrl.u32 %v2931, 7
  %v2933 = vsub.s32 0, %v2932
  %v2934 = vrot.slane %v2929, %v2933
  %v2935 = vlaneseq
  %v2936 = vshrl.u32 %v2935, 7
  %v2937 = vsub.s32 1, %v2936
  %v2938 = vrot.slane %v2929, %v2937
  %v2941 = vmul.f32 %v2905, %v2934
  %v2942 = vmul.f32 %v2907, %v2938
  %2944 = vset.pattern.permute.xlu0 0
  %2945 = vperm.xlu0 %2944, %v2941
  %v2946 = vpop.permute.xlu0 %2945
  %v2947 = vlaneseq
  %v2948 = vshrl.u32 %v2947, 7
  %v2949 = vsub.s32 %v685, %v2948
  %v2950 = vrot.slane %v2946, %v2949
  %v2951 = vsel %vm761, %v2950, 0
  %2953 = vmatprep.subr.mxu0 0.0
  %2954 = vmatpush1.msra.mxu0 %v34
  %2955 = vmatprep.subr.mxu0 0.0
  %2956 = vmatpush1.msra.mxu0 0.0
  %2957 = vmatprep.subr.mxu0 0.0
  %2958 = vmatpush1.msra.mxu0 0.0
  %2959 = vmatprep.subr.mxu0 0.0
  %2960 = vmatpush1.msra.mxu0 0.0
  %2961 = vmatprep.subr.mxu0 0.0
  %2962 = vmatpush1.msra.mxu0 0.0
  %2963 = vmatprep.subr.mxu0 0.0
  %2964 = vmatpush1.msra.mxu0 0.0
  %2965 = vmatprep.subr.mxu0 0.0
  %2966 = vmatpush1.msra.mxu0 0.0
  %2967 = vmatprep.subr.mxu0 0.0
  %2968 = vmatpush1.msra.mxu0 0.0
  %2969 = vmatprep.subr.mxu0 0.0
  %2970 = vmatpush1.msra.mxu0 0.0
  %2971 = vmatprep.subr.mxu0 0.0
  %2972 = vmatpush1.msra.mxu0 0.0
  %2973 = vmatprep.subr.mxu0 0.0
  %2974 = vmatpush1.msra.mxu0 0.0
  %2975 = vmatprep.subr.mxu0 0.0
  %2976 = vmatpush1.msra.mxu0 0.0
  %2977 = vmatprep.subr.mxu0 0.0
  %2978 = vmatpush1.msra.mxu0 0.0
  %2979 = vmatprep.subr.mxu0 0.0
  %2980 = vmatpush1.msra.mxu0 0.0
  %2981 = vmatprep.subr.mxu0 0.0
  %2982 = vmatpush1.msra.mxu0 0.0
  %2983 = vmatprep.subr.mxu0 0.0
  %2984 = vmatpush1.msra.mxu0 0.0
  %2985 = vmatprep.subr.mxu0 0.0
  %2986 = vmatpush1.msra.mxu0 0.0
  %2987 = vmatprep.subr.mxu0 0.0
  %2988 = vmatpush1.msra.mxu0 0.0
  %2989 = vmatprep.subr.mxu0 0.0
  %2990 = vmatpush1.msra.mxu0 0.0
  %2991 = vmatprep.subr.mxu0 0.0
  %2992 = vmatpush1.msra.mxu0 0.0
  %2993 = vmatprep.subr.mxu0 0.0
  %2994 = vmatpush1.msra.mxu0 0.0
  %2995 = vmatprep.subr.mxu0 0.0
  %2996 = vmatpush1.msra.mxu0 0.0
  %2997 = vmatprep.subr.mxu0 0.0
  %2998 = vmatpush1.msra.mxu0 0.0
  %2999 = vmatprep.subr.mxu0 0.0
  %3000 = vmatpush1.msra.mxu0 0.0
  %3001 = vmatprep.subr.mxu0 0.0
  %3002 = vmatpush1.msra.mxu0 0.0
  %3003 = vmatprep.subr.mxu0 0.0
  %3004 = vmatpush1.msra.mxu0 0.0
  %3005 = vmatprep.subr.mxu0 0.0
  %3006 = vmatpush1.msra.mxu0 0.0
  %3007 = vmatprep.subr.mxu0 0.0
  %3008 = vmatpush1.msra.mxu0 0.0
  %3009 = vmatprep.subr.mxu0 0.0
  %3010 = vmatpush1.msra.mxu0 0.0
  %3011 = vmatprep.subr.mxu0 0.0
  %3012 = vmatpush1.msra.mxu0 0.0
  %3013 = vmatprep.subr.mxu0 0.0
  %3014 = vmatpush1.msra.mxu0 0.0
  %3015 = vmatprep.subr.mxu0 0.0
  %3016 = vmatpush1.msra.mxu0 0.0
  %3017 = vmatprep.mubr.f32.mxu0 0.0
  %3018 = vmatmul.mubr.f32.gmra.mrb[0].mxu0 %v2951
  %v3019 = vpop.f32.mrb[0].mxu0
  %v3020 = vadd.f32 0.0, %v3019
  %v3021 = vpop.f32.mrb[0].mxu0
  %3022 = vdwg.mxu0
  %3024 = vset.pattern.permute.xlu0 0
  %3025 = vperm.xlu0 %3024, %v2942
  %v3026 = vpop.permute.xlu0 %3025
  %v3027 = vlaneseq
  %v3028 = vshrl.u32 %v3027, 7
  %v3029 = vsub.s32 %v685, %v3028
  %v3030 = vrot.slane %v3026, %v3029
  %v3031 = vsel %vm761, %v3030, 0
  %3033 = vmatprep.subr.mxu0 0.0
  %3034 = vmatpush1.msra.mxu0 %v35
  %3035 = vmatprep.subr.mxu0 0.0
  %3036 = vmatpush1.msra.mxu0 0.0
  %3037 = vmatprep.subr.mxu0 0.0
  %3038 = vmatpush1.msra.mxu0 0.0
  %3039 = vmatprep.subr.mxu0 0.0
  %3040 = vmatpush1.msra.mxu0 0.0
  %3041 = vmatprep.subr.mxu0 0.0
  %3042 = vmatpush1.msra.mxu0 0.0
  %3043 = vmatprep.subr.mxu0 0.0
  %3044 = vmatpush1.msra.mxu0 0.0
  %3045 = vmatprep.subr.mxu0 0.0
  %3046 = vmatpush1.msra.mxu0 0.0
  %3047 = vmatprep.subr.mxu0 0.0
  %3048 = vmatpush1.msra.mxu0 0.0
  %3049 = vmatprep.subr.mxu0 0.0
  %3050 = vmatpush1.msra.mxu0 0.0
  %3051 = vmatprep.subr.mxu0 0.0
  %3052 = vmatpush1.msra.mxu0 0.0
  %3053 = vmatprep.subr.mxu0 0.0
  %3054 = vmatpush1.msra.mxu0 0.0
  %3055 = vmatprep.subr.mxu0 0.0
  %3056 = vmatpush1.msra.mxu0 0.0
  %3057 = vmatprep.subr.mxu0 0.0
  %3058 = vmatpush1.msra.mxu0 0.0
  %3059 = vmatprep.subr.mxu0 0.0
  %3060 = vmatpush1.msra.mxu0 0.0
  %3061 = vmatprep.subr.mxu0 0.0
  %3062 = vmatpush1.msra.mxu0 0.0
  %3063 = vmatprep.subr.mxu0 0.0
  %3064 = vmatpush1.msra.mxu0 0.0
  %3065 = vmatprep.subr.mxu0 0.0
  %3066 = vmatpush1.msra.mxu0 0.0
  %3067 = vmatprep.subr.mxu0 0.0
  %3068 = vmatpush1.msra.mxu0 0.0
  %3069 = vmatprep.subr.mxu0 0.0
  %3070 = vmatpush1.msra.mxu0 0.0
  %3071 = vmatprep.subr.mxu0 0.0
  %3072 = vmatpush1.msra.mxu0 0.0
  %3073 = vmatprep.subr.mxu0 0.0
  %3074 = vmatpush1.msra.mxu0 0.0
  %3075 = vmatprep.subr.mxu0 0.0
  %3076 = vmatpush1.msra.mxu0 0.0
  %3077 = vmatprep.subr.mxu0 0.0
  %3078 = vmatpush1.msra.mxu0 0.0
  %3079 = vmatprep.subr.mxu0 0.0
  %3080 = vmatpush1.msra.mxu0 0.0
  %3081 = vmatprep.subr.mxu0 0.0
  %3082 = vmatpush1.msra.mxu0 0.0
  %3083 = vmatprep.subr.mxu0 0.0
  %3084 = vmatpush1.msra.mxu0 0.0
  %3085 = vmatprep.subr.mxu0 0.0
  %3086 = vmatpush1.msra.mxu0 0.0
  %3087 = vmatprep.subr.mxu0 0.0
  %3088 = vmatpush1.msra.mxu0 0.0
  %3089 = vmatprep.subr.mxu0 0.0
  %3090 = vmatpush1.msra.mxu0 0.0
  %3091 = vmatprep.subr.mxu0 0.0
  %3092 = vmatpush1.msra.mxu0 0.0
  %3093 = vmatprep.subr.mxu0 0.0
  %3094 = vmatpush1.msra.mxu0 0.0
  %3095 = vmatprep.subr.mxu0 0.0
  %3096 = vmatpush1.msra.mxu0 0.0
  %3097 = vmatprep.mubr.f32.mxu0 0.0
  %3098 = vmatmul.mubr.f32.gmra.mrb[0].mxu0 %v3031
  %v3099 = vpop.f32.mrb[0].mxu0
  %v3100 = vadd.f32 0.0, %v3099
  %v3101 = vpop.f32.mrb[0].mxu0
  %3102 = vdwg.mxu0
  %v3105 = vrot.slane %v3100, 7
  %v3106 = vsel %vm694, %v3105, %v3020
  %s3107 = scalar_lea.vmem [#allocation2], 32
  %v3108 = vld [vmem:[%s3107] sm:$0xff]
  %v3109 = vsel %vm40, %v3106, 0
  %3111 = vmatprep.subr.mxu0 %v484
  %3112 = vmatpush1.msra.mxu0 %v483
  %3113 = vmatprep.subr.mxu0 %v488
  %3114 = vmatpush1.msra.mxu0 %v487
  %3115 = vmatprep.subr.mxu0 %v492
  %3116 = vmatpush1.msra.mxu0 %v491
  %3117 = vmatprep.subr.mxu0 %v496
  %3118 = vmatpush1.msra.mxu0 %v495
  %3119 = vmatprep.subr.mxu0 %v500
  %3120 = vmatpush1.msra.mxu0 %v499
  %3121 = vmatprep.subr.mxu0 %v504
  %3122 = vmatpush1.msra.mxu0 %v503
  %3123 = vmatprep.subr.mxu0 %v508
  %3124 = vmatpush1.msra.mxu0 %v507
  %3125 = vmatprep.subr.mxu0 %v512
  %3126 = vmatpush1.msra.mxu0 %v511
  %3127 = vmatprep.subr.mxu0 %v516
  %3128 = vmatpush1.msra.mxu0 %v515
  %3129 = vmatprep.subr.mxu0 %v520
  %3130 = vmatpush1.msra.mxu0 %v519
  %3131 = vmatprep.subr.mxu0 %v524
  %3132 = vmatpush1.msra.mxu0 %v523
  %3133 = vmatprep.subr.mxu0 %v528
  %3134 = vmatpush1.msra.mxu0 %v527
  %3135 = vmatprep.subr.mxu0 %v532
  %3136 = vmatpush1.msra.mxu0 %v531
  %3137 = vmatprep.subr.mxu0 %v536
  %3138 = vmatpush1.msra.mxu0 %v535
  %3139 = vmatprep.subr.mxu0 %v540
  %3140 = vmatpush1.msra.mxu0 %v539
  %3141 = vmatprep.subr.mxu0 %v544
  %3142 = vmatpush1.msra.mxu0 %v543
  %3143 = vmatprep.subr.mxu0 %v548
  %3144 = vmatpush1.msra.mxu0 %v547
  %3145 = vmatprep.subr.mxu0 %v552
  %3146 = vmatpush1.msra.mxu0 %v551
  %3147 = vmatprep.subr.mxu0 %v556
  %3148 = vmatpush1.msra.mxu0 %v555
  %3149 = vmatprep.subr.mxu0 %v560
  %3150 = vmatpush1.msra.mxu0 %v559
  %3151 = vmatprep.subr.mxu0 0.0
  %3152 = vmatpush1.msra.mxu0 0.0
  %3153 = vmatprep.subr.mxu0 0.0
  %3154 = vmatpush1.msra.mxu0 0.0
  %3155 = vmatprep.subr.mxu0 0.0
  %3156 = vmatpush1.msra.mxu0 0.0
  %3157 = vmatprep.subr.mxu0 0.0
  %3158 = vmatpush1.msra.mxu0 0.0
  %3159 = vmatprep.subr.mxu0 0.0
  %3160 = vmatpush1.msra.mxu0 0.0
  %3161 = vmatprep.subr.mxu0 0.0
  %3162 = vmatpush1.msra.mxu0 0.0
  %3163 = vmatprep.subr.mxu0 0.0
  %3164 = vmatpush1.msra.mxu0 0.0
  %3165 = vmatprep.subr.mxu0 0.0
  %3166 = vmatpush1.msra.mxu0 0.0
  %3167 = vmatprep.subr.mxu0 0.0
  %3168 = vmatpush1.msra.mxu0 0.0
  %3169 = vmatprep.subr.mxu0 0.0
  %3170 = vmatpush1.msra.mxu0 0.0
  %3171 = vmatprep.subr.mxu0 0.0
  %3172 = vmatpush1.msra.mxu0 0.0
  %3173 = vmatprep.subr.mxu0 0.0
  %3174 = vmatpush1.msra.mxu0 0.0
  %3175 = vmatprep.mubr.f32.mxu0 %v3109
  %3176 = vmatmul.mubr.f32.gmra.mrb[0].mxu0 %v2758
  %v3177 = vpop.f32.mrb[0].mxu0
  %v3178 = vadd.f32 0.0, %v3177
  %v3179 = vpop.f32.mrb[0].mxu0
  %v3180 = vadd.f32 0.0, %v3179
  %3181 = vdwg.mxu0
  %3182 = vmatprep.subr.mxu0 %v486
  %3183 = vmatpush1.msra.mxu0 %v485
  %3184 = vmatprep.subr.mxu0 %v490
  %3185 = vmatpush1.msra.mxu0 %v489
  %3186 = vmatprep.subr.mxu0 %v494
  %3187 = vmatpush1.msra.mxu0 %v493
  %3188 = vmatprep.subr.mxu0 %v498
  %3189 = vmatpush1.msra.mxu0 %v497
  %3190 = vmatprep.subr.mxu0 %v502
  %3191 = vmatpush1.msra.mxu0 %v501
  %3192 = vmatprep.subr.mxu0 %v506
  %3193 = vmatpush1.msra.mxu0 %v505
  %3194 = vmatprep.subr.mxu0 %v510
  %3195 = vmatpush1.msra.mxu0 %v509
  %3196 = vmatprep.subr.mxu0 %v514
  %3197 = vmatpush1.msra.mxu0 %v513
  %3198 = vmatprep.subr.mxu0 %v518
  %3199 = vmatpush1.msra.mxu0 %v517
  %3200 = vmatprep.subr.mxu0 %v522
  %3201 = vmatpush1.msra.mxu0 %v521
  %3202 = vmatprep.subr.mxu0 %v526
  %3203 = vmatpush1.msra.mxu0 %v525
  %3204 = vmatprep.subr.mxu0 %v530
  %3205 = vmatpush1.msra.mxu0 %v529
  %3206 = vmatprep.subr.mxu0 %v534
  %3207 = vmatpush1.msra.mxu0 %v533
  %3208 = vmatprep.subr.mxu0 %v538
  %3209 = vmatpush1.msra.mxu0 %v537
  %3210 = vmatprep.subr.mxu0 %v542
  %3211 = vmatpush1.msra.mxu0 %v541
  %3212 = vmatprep.subr.mxu0 %v546
  %3213 = vmatpush1.msra.mxu0 %v545
  %3214 = vmatprep.subr.mxu0 %v550
  %3215 = vmatpush1.msra.mxu0 %v549
  %3216 = vmatprep.subr.mxu0 %v554
  %3217 = vmatpush1.msra.mxu0 %v553
  %3218 = vmatprep.subr.mxu0 %v558
  %3219 = vmatpush1.msra.mxu0 %v557
  %3220 = vmatprep.subr.mxu0 %v562
  %3221 = vmatpush1.msra.mxu0 %v561
  %3222 = vmatprep.subr.mxu0 0.0
  %3223 = vmatpush1.msra.mxu0 0.0
  %3224 = vmatprep.subr.mxu0 0.0
  %3225 = vmatpush1.msra.mxu0 0.0
  %3226 = vmatprep.subr.mxu0 0.0
  %3227 = vmatpush1.msra.mxu0 0.0
  %3228 = vmatprep.subr.mxu0 0.0
  %3229 = vmatpush1.msra.mxu0 0.0
  %3230 = vmatprep.subr.mxu0 0.0
  %3231 = vmatpush1.msra.mxu0 0.0
  %3232 = vmatprep.subr.mxu0 0.0
  %3233 = vmatpush1.msra.mxu0 0.0
  %3234 = vmatprep.subr.mxu0 0.0
  %3235 = vmatpush1.msra.mxu0 0.0
  %3236 = vmatprep.subr.mxu0 0.0
  %3237 = vmatpush1.msra.mxu0 0.0
  %3238 = vmatprep.subr.mxu0 0.0
  %3239 = vmatpush1.msra.mxu0 0.0
  %3240 = vmatprep.subr.mxu0 0.0
  %3241 = vmatpush1.msra.mxu0 0.0
  %3242 = vmatprep.subr.mxu0 0.0
  %3243 = vmatpush1.msra.mxu0 0.0
  %3244 = vmatprep.subr.mxu0 0.0
  %3245 = vmatpush1.msra.mxu0 0.0
  %3246 = vmatprep.mubr.f32.mxu0 %v3109
  %3247 = vmatmul.mubr.f32.gmra.mrb[0].mxu0 %v2758
  %v3248 = vpop.f32.mrb[0].mxu0
  %v3249 = vadd.f32 0.0, %v3248
  %v3250 = vpop.f32.mrb[0].mxu0
  %v3251 = vadd.f32 0.0, %v3250
  %3252 = vdwg.mxu0
  %v3257 = vcombine.low %v3178, %v3180
  %v3258 = vcombine.low %v3249, %v3251
  %v3260 = vunpack.c.l.s4 1983009808
  %v3261 = vunpack.c.0.s8 %v3260
  %v3262 = vlaneseq
  %v3263 = vshrl.u32 %v3262, 7
  %v3264 = vsub.s32 %v3261, %v3263
  %v3265 = vrot.slane %v3257, %v3264
  %v3267 = vunpack.c.l.s4 1983009808
  %v3268 = vunpack.c.0.s8 %v3267
  %v3269 = vlaneseq
  %v3270 = vshrl.u32 %v3269, 7
  %v3271 = vsub.s32 %v3268, %v3270
  %v3272 = vrot.slane %v3258, %v3271
  %v3273 = vcombine.low %v3265, %v3272
  %v3275 = vadd.f32 %v3108, %v3273
  %v3276 = vxor.u32 %v3275, 2147483648
  %v3277 = vmul.f32 %v3276, 1.442695
  %v3278 = vpow.pop %v3277
  %v3279 = vadd.f32 %v3278, 1.0
  %v3280 = vrcp.pop %v3279
  %v3281 = vmul.f32 1.0, %v3280
  %v3283 = vrot.slane %v3275, 2
  %v3285 = vxor.u32 %v3283, 2147483648
  %v3286 = vmul.f32 %v3285, 1.442695
  %v3287 = vpow.pop %v3286
  %v3288 = vadd.f32 %v3287, 1.0
  %v3289 = vrcp.pop %v3288
  %v3290 = vmul.f32 1.0, %v3289
  %v3291 = vrot.slane %v3275, 4
  %v3293 = vtanh.pop %v3291
  %v3294 = vrot.slane %v3275, 6
  %v3296 = vxor.u32 %v3294, 2147483648
  %v3297 = vmul.f32 %v3296, 1.442695
  %v3298 = vpow.pop %v3297
  %v3299 = vadd.f32 %v3298, 1.0
  %v3300 = vrcp.pop %v3299
  %v3301 = vmul.f32 1.0, %v3300
  %v3302 = vmul.f32 %v3290, %v2756
  %v3303 = vmul.f32 %v3281, %v3293
  %v3304 = vadd.f32 %v3302, %v3303
  %v3305 = vtanh.pop %v3304
  %v3306 = vmul.f32 %v3301, %v3305
  %s3307 = scalar_lea.vmem %s9, 8
  %3308 = vst [vmem:[%s3307] sm:$0x3] %v3306
  %s3309 = scalar_lea.vmem %s10, 8
  %3310 = vst [vmem:[%s3309] sm:$0x3] %v3304
  %3311 = vmatprep.subr.mxu0 0.0
  %3312 = vmatpush1.msra.mxu0 %v467
  %3313 = vmatprep.subr.mxu0 0.0
  %3314 = vmatpush1.msra.mxu0 %v468
  %3315 = vmatprep.subr.mxu0 0.0
  %3316 = vmatpush1.msra.mxu0 %v469
  %3317 = vmatprep.subr.mxu0 0.0
  %3318 = vmatpush1.msra.mxu0 %v470
  %3319 = vmatprep.subr.mxu0 0.0
  %3320 = vmatpush1.msra.mxu0 %v471
  %3321 = vmatprep.subr.mxu0 0.0
  %3322 = vmatpush1.msra.mxu0 %v472
  %3323 = vmatprep.subr.mxu0 0.0
  %3324 = vmatpush1.msra.mxu0 %v473
  %3325 = vmatprep.subr.mxu0 0.0
  %3326 = vmatpush1.msra.mxu0 %v474
  %3327 = vmatprep.subr.mxu0 0.0
  %3328 = vmatpush1.msra.mxu0 %v475
  %3329 = vmatprep.subr.mxu0 0.0
  %3330 = vmatpush1.msra.mxu0 %v476
  %3331 = vmatprep.subr.mxu0 0.0
  %3332 = vmatpush1.msra.mxu0 %v477
  %3333 = vmatprep.subr.mxu0 0.0
  %3334 = vmatpush1.msra.mxu0 %v478
  %3335 = vmatprep.subr.mxu0 0.0
  %3336 = vmatpush1.msra.mxu0 %v479
  %3337 = vmatprep.subr.mxu0 0.0
  %3338 = vmatpush1.msra.mxu0 %v480
  %3339 = vmatprep.subr.mxu0 0.0
  %3340 = vmatpush1.msra.mxu0 %v481
  %3341 = vmatprep.subr.mxu0 0.0
  %3342 = vmatpush1.msra.mxu0 %v482
  %3343 = vmatprep.subr.mxu0 0.0
  %3344 = vmatpush1.msra.mxu0 0.0
  %3345 = vmatprep.subr.mxu0 0.0
  %3346 = vmatpush1.msra.mxu0 0.0
  %3347 = vmatprep.subr.mxu0 0.0
  %3348 = vmatpush1.msra.mxu0 0.0
  %3349 = vmatprep.subr.mxu0 0.0
  %3350 = vmatpush1.msra.mxu0 0.0
  %3351 = vmatprep.subr.mxu0 0.0
  %3352 = vmatpush1.msra.mxu0 0.0
  %3353 = vmatprep.subr.mxu0 0.0
  %3354 = vmatpush1.msra.mxu0 0.0
  %3355 = vmatprep.subr.mxu0 0.0
  %3356 = vmatpush1.msra.mxu0 0.0
  %3357 = vmatprep.subr.mxu0 0.0
  %3358 = vmatpush1.msra.mxu0 0.0
  %3359 = vmatprep.subr.mxu0 0.0
  %3360 = vmatpush1.msra.mxu0 0.0
  %3361 = vmatprep.subr.mxu0 0.0
  %3362 = vmatpush1.msra.mxu0 0.0
  %3363 = vmatprep.subr.mxu0 0.0
  %3364 = vmatpush1.msra.mxu0 0.0
  %3365 = vmatprep.subr.mxu0 0.0
  %3366 = vmatpush1.msra.mxu0 0.0
  %3367 = vmatprep.subr.mxu0 0.0
  %3368 = vmatpush1.msra.mxu0 0.0
  %3369 = vmatprep.subr.mxu0 0.0
  %3370 = vmatpush1.msra.mxu0 0.0
  %3371 = vmatprep.subr.mxu0 0.0
  %3372 = vmatpush1.msra.mxu0 0.0
  %3373 = vmatprep.subr.mxu0 0.0
  %3374 = vmatpush1.msra.mxu0 0.0
  %3375 = vmatprep.mubr.f32.mxu0 0.0
  %3376 = vmatmul.mubr.f32.gmra.mrb[0].mxu0 %v3304
  %v3377 = vpop.f32.mrb[0].mxu0
  %v3378 = vadd.f32 0.0, %v3377
  %v3379 = vpop.f32.mrb[0].mxu0
  %3380 = vdwg.mxu0
  %v3383 = vunpack.c.l.s4 1966171168
  %v3384 = vunpack.c.0.s8 %v3383
  %v3385 = vlaneseq
  %v3386 = vshrl.u32 %v3385, 7
  %v3387 = vsub.s32 %v3384, %v3386
  %v3388 = vrot.slane %v3378, %v3387
  %v3389 = vcombine.high %v3388, %v3388
  %v3391 = vunpack.c.l.s4 1966171168
  %v3392 = vunpack.c.0.s8 %v3391
  %v3393 = vlaneseq
  %v3394 = vshrl.u32 %v3393, 7
  %v3395 = vsub.s32 %v3392, %v3394
  %v3396 = vrot.slane %v3388, %v3395
  %v3398 = vunpack.c.l.s4 1966171168
  %v3399 = vunpack.c.0.s8 %v3398
  %v3400 = vlaneseq
  %v3401 = vshrl.u32 %v3400, 7
  %v3402 = vsub.s32 %v3399, %v3401
  %v3403 = vrot.slane %v3389, %v3402
  %v3404 = vlaneseq
  %v3405 = vshrl.u32 %v3404, 7
  %v3406 = vsub.s32 0, %v3405
  %v3407 = vrot.slane %v3396, %v3406
  %v3408 = vlaneseq
  %v3409 = vshrl.u32 %v3408, 7
  %v3410 = vsub.s32 0, %v3409
  %v3411 = vrot.slane %v3403, %v3410
  %v3414 = vadd.f32 %v129, %v3407
  %v3415 = vadd.f32 %v130, %v3411
  %v3416 = vtanh.pop %v3414
  %v3417 = vtanh.pop %v3415
  %v3418 = vmul.f32 %v3416, %v674
  %v3419 = vmul.f32 %v3417, %v674
  %3420 = vadd.xlane.f32.xlu0 %v3418
  %v3421 = vpop.xlane.xlu0 %3420
  %3422 = vadd.xlane.f32.xlu0 %v3419
  %v3423 = vpop.xlane.xlu0 %3422
  %v3426 = vlaneseq
  %v3427 = vshrl.u32 %v3426, 7
  %v3428 = vsub.s32 %v685, %v3427
  %v3429 = vrot.slane %v3421, %v3428
  %v3430 = vlaneseq
  %v3431 = vshrl.u32 %v3430, 7
  %v3432 = vsub.s32 %v685, %v3431
  %v3433 = vrot.slane %v3423, %v3432
  %v3434 = vsel %vm694, %v3433, %v3429
  %v3436 = vsel %vm697, %v3434, -inf
  %3437 = vmax.xlane.f32.xlu0 %v3436
  %v3438 = vpop.xlane.xlu0 %3437
  %v3440 = vlaneseq
  %v3441 = vshrl.u32 %v3440, 7
  %v3442 = vsub.s32 0, %v3441
  %v3443 = vrot.slane %v3438, %v3442
  %v3444 = vlaneseq
  %v3445 = vshrl.u32 %v3444, 7
  %v3446 = vsub.s32 1, %v3445
  %v3447 = vrot.slane %v3438, %v3446
  %v3450 = vsub.f32 %v3421, %v3443
  %v3451 = vsub.f32 %v3423, %v3447
  %v3452 = vmul.f32 %v3450, 1.442695
  %v3453 = vpow.pop %v3452
  %v3454 = vmul.f32 %v3451, 1.442695
  %v3455 = vpow.pop %v3454
  %3458 = vset.pattern.permute.xlu0 0
  %3459 = vperm.xlu0 %3458, %v3453
  %v3460 = vpop.permute.xlu0 %3459
  %3461 = vset.pattern.permute.xlu0 0
  %3462 = vperm.xlu0 %3461, %v3455
  %v3463 = vpop.permute.xlu0 %3462
  %v3464 = vlaneseq
  %v3465 = vshrl.u32 %v3464, 7
  %v3466 = vsub.s32 %v685, %v3465
  %v3467 = vrot.slane %v3460, %v3466
  %v3468 = vlaneseq
  %v3469 = vshrl.u32 %v3468, 7
  %v3470 = vsub.s32 %v685, %v3469
  %v3471 = vrot.slane %v3463, %v3470
  %v3472 = vsel %vm694, %v3471, %v3467
  %v3474 = vsel %vm697, %v3472, 0.0
  %3475 = vadd.xlane.f32.xlu0 %v3474
  %v3476 = vpop.xlane.xlu0 %3475
  %v3477 = vrcp.pop %v3476
  %v3479 = vlaneseq
  %v3480 = vshrl.u32 %v3479, 7
  %v3481 = vsub.s32 0, %v3480
  %v3482 = vrot.slane %v3477, %v3481
  %v3483 = vlaneseq
  %v3484 = vshrl.u32 %v3483, 7
  %v3485 = vsub.s32 1, %v3484
  %v3486 = vrot.slane %v3477, %v3485
  %v3489 = vmul.f32 %v3453, %v3482
  %v3490 = vmul.f32 %v3455, %v3486
  %3492 = vset.pattern.permute.xlu0 0
  %3493 = vperm.xlu0 %3492, %v3489
  %v3494 = vpop.permute.xlu0 %3493
  %v3495 = vlaneseq
  %v3496 = vshrl.u32 %v3495, 7
  %v3497 = vsub.s32 %v685, %v3496
  %v3498 = vrot.slane %v3494, %v3497
  %v3499 = vsel %vm761, %v3498, 0
  %3501 = vmatprep.subr.mxu0 0.0
  %3502 = vmatpush1.msra.mxu0 %v34
  %3503 = vmatprep.subr.mxu0 0.0
  %3504 = vmatpush1.msra.mxu0 0.0
  %3505 = vmatprep.subr.mxu0 0.0
  %3506 = vmatpush1.msra.mxu0 0.0
  %3507 = vmatprep.subr.mxu0 0.0
  %3508 = vmatpush1.msra.mxu0 0.0
  %3509 = vmatprep.subr.mxu0 0.0
  %3510 = vmatpush1.msra.mxu0 0.0
  %3511 = vmatprep.subr.mxu0 0.0
  %3512 = vmatpush1.msra.mxu0 0.0
  %3513 = vmatprep.subr.mxu0 0.0
  %3514 = vmatpush1.msra.mxu0 0.0
  %3515 = vmatprep.subr.mxu0 0.0
  %3516 = vmatpush1.msra.mxu0 0.0
  %3517 = vmatprep.subr.mxu0 0.0
  %3518 = vmatpush1.msra.mxu0 0.0
  %3519 = vmatprep.subr.mxu0 0.0
  %3520 = vmatpush1.msra.mxu0 0.0
  %3521 = vmatprep.subr.mxu0 0.0
  %3522 = vmatpush1.msra.mxu0 0.0
  %3523 = vmatprep.subr.mxu0 0.0
  %3524 = vmatpush1.msra.mxu0 0.0
  %3525 = vmatprep.subr.mxu0 0.0
  %3526 = vmatpush1.msra.mxu0 0.0
  %3527 = vmatprep.subr.mxu0 0.0
  %3528 = vmatpush1.msra.mxu0 0.0
  %3529 = vmatprep.subr.mxu0 0.0
  %3530 = vmatpush1.msra.mxu0 0.0
  %3531 = vmatprep.subr.mxu0 0.0
  %3532 = vmatpush1.msra.mxu0 0.0
  %3533 = vmatprep.subr.mxu0 0.0
  %3534 = vmatpush1.msra.mxu0 0.0
  %3535 = vmatprep.subr.mxu0 0.0
  %3536 = vmatpush1.msra.mxu0 0.0
  %3537 = vmatprep.subr.mxu0 0.0
  %3538 = vmatpush1.msra.mxu0 0.0
  %3539 = vmatprep.subr.mxu0 0.0
  %3540 = vmatpush1.msra.mxu0 0.0
  %3541 = vmatprep.subr.mxu0 0.0
  %3542 = vmatpush1.msra.mxu0 0.0
  %3543 = vmatprep.subr.mxu0 0.0
  %3544 = vmatpush1.msra.mxu0 0.0
  %3545 = vmatprep.subr.mxu0 0.0
  %3546 = vmatpush1.msra.mxu0 0.0
  %3547 = vmatprep.subr.mxu0 0.0
  %3548 = vmatpush1.msra.mxu0 0.0
  %3549 = vmatprep.subr.mxu0 0.0
  %3550 = vmatpush1.msra.mxu0 0.0
  %3551 = vmatprep.subr.mxu0 0.0
  %3552 = vmatpush1.msra.mxu0 0.0
  %3553 = vmatprep.subr.mxu0 0.0
  %3554 = vmatpush1.msra.mxu0 0.0
  %3555 = vmatprep.subr.mxu0 0.0
  %3556 = vmatpush1.msra.mxu0 0.0
  %3557 = vmatprep.subr.mxu0 0.0
  %3558 = vmatpush1.msra.mxu0 0.0
  %3559 = vmatprep.subr.mxu0 0.0
  %3560 = vmatpush1.msra.mxu0 0.0
  %3561 = vmatprep.subr.mxu0 0.0
  %3562 = vmatpush1.msra.mxu0 0.0
  %3563 = vmatprep.subr.mxu0 0.0
  %3564 = vmatpush1.msra.mxu0 0.0
  %3565 = vmatprep.mubr.f32.mxu0 0.0
  %3566 = vmatmul.mubr.f32.gmra.mrb[0].mxu0 %v3499
  %v3567 = vpop.f32.mrb[0].mxu0
  %v3568 = vadd.f32 0.0, %v3567
  %v3569 = vpop.f32.mrb[0].mxu0
  %3570 = vdwg.mxu0
  %3572 = vset.pattern.permute.xlu0 0
  %3573 = vperm.xlu0 %3572, %v3490
  %v3574 = vpop.permute.xlu0 %3573
  %v3575 = vlaneseq
  %v3576 = vshrl.u32 %v3575, 7
  %v3577 = vsub.s32 %v685, %v3576
  %v3578 = vrot.slane %v3574, %v3577
  %v3579 = vsel %vm761, %v3578, 0
  %3581 = vmatprep.subr.mxu0 0.0
  %3582 = vmatpush1.msra.mxu0 %v35
  %3583 = vmatprep.subr.mxu0 0.0
  %3584 = vmatpush1.msra.mxu0 0.0
  %3585 = vmatprep.subr.mxu0 0.0
  %3586 = vmatpush1.msra.mxu0 0.0
  %3587 = vmatprep.subr.mxu0 0.0
  %3588 = vmatpush1.msra.mxu0 0.0
  %3589 = vmatprep.subr.mxu0 0.0
  %3590 = vmatpush1.msra.mxu0 0.0
  %3591 = vmatprep.subr.mxu0 0.0
  %3592 = vmatpush1.msra.mxu0 0.0
  %3593 = vmatprep.subr.mxu0 0.0
  %3594 = vmatpush1.msra.mxu0 0.0
  %3595 = vmatprep.subr.mxu0 0.0
  %3596 = vmatpush1.msra.mxu0 0.0
  %3597 = vmatprep.subr.mxu0 0.0
  %3598 = vmatpush1.msra.mxu0 0.0
  %3599 = vmatprep.subr.mxu0 0.0
  %3600 = vmatpush1.msra.mxu0 0.0
  %3601 = vmatprep.subr.mxu0 0.0
  %3602 = vmatpush1.msra.mxu0 0.0
  %3603 = vmatprep.subr.mxu0 0.0
  %3604 = vmatpush1.msra.mxu0 0.0
  %3605 = vmatprep.subr.mxu0 0.0
  %3606 = vmatpush1.msra.mxu0 0.0
  %3607 = vmatprep.subr.mxu0 0.0
  %3608 = vmatpush1.msra.mxu0 0.0
  %3609 = vmatprep.subr.mxu0 0.0
  %3610 = vmatpush1.msra.mxu0 0.0
  %3611 = vmatprep.subr.mxu0 0.0
  %3612 = vmatpush1.msra.mxu0 0.0
  %3613 = vmatprep.subr.mxu0 0.0
  %3614 = vmatpush1.msra.mxu0 0.0
  %3615 = vmatprep.subr.mxu0 0.0
  %3616 = vmatpush1.msra.mxu0 0.0
  %3617 = vmatprep.subr.mxu0 0.0
  %3618 = vmatpush1.msra.mxu0 0.0
  %3619 = vmatprep.subr.mxu0 0.0
  %3620 = vmatpush1.msra.mxu0 0.0
  %3621 = vmatprep.subr.mxu0 0.0
  %3622 = vmatpush1.msra.mxu0 0.0
  %3623 = vmatprep.subr.mxu0 0.0
  %3624 = vmatpush1.msra.mxu0 0.0
  %3625 = vmatprep.subr.mxu0 0.0
  %3626 = vmatpush1.msra.mxu0 0.0
  %3627 = vmatprep.subr.mxu0 0.0
  %3628 = vmatpush1.msra.mxu0 0.0
  %3629 = vmatprep.subr.mxu0 0.0
  %3630 = vmatpush1.msra.mxu0 0.0
  %3631 = vmatprep.subr.mxu0 0.0
  %3632 = vmatpush1.msra.mxu0 0.0
  %3633 = vmatprep.subr.mxu0 0.0
  %3634 = vmatpush1.msra.mxu0 0.0
  %3635 = vmatprep.subr.mxu0 0.0
  %3636 = vmatpush1.msra.mxu0 0.0
  %3637 = vmatprep.subr.mxu0 0.0
  %3638 = vmatpush1.msra.mxu0 0.0
  %3639 = vmatprep.subr.mxu0 0.0
  %3640 = vmatpush1.msra.mxu0 0.0
  %3641 = vmatprep.subr.mxu0 0.0
  %3642 = vmatpush1.msra.mxu0 0.0
  %3643 = vmatprep.subr.mxu0 0.0
  %3644 = vmatpush1.msra.mxu0 0.0
  %3645 = vmatprep.mubr.f32.mxu0 0.0
  %3646 = vmatmul.mubr.f32.gmra.mrb[0].mxu0 %v3579
  %v3647 = vpop.f32.mrb[0].mxu0
  %v3648 = vadd.f32 0.0, %v3647
  %v3649 = vpop.f32.mrb[0].mxu0
  %3650 = vdwg.mxu0
  %v3653 = vrot.slane %v3648, 7
  %v3654 = vsel %vm694, %v3653, %v3568
  %s3655 = scalar_lea.vmem [#allocation2], 40
  %v3656 = vld [vmem:[%s3655] sm:$0xff]
  %v3657 = vsel %vm40, %v3654, 0
  %3659 = vmatprep.subr.mxu0 %v484
  %3660 = vmatpush1.msra.mxu0 %v483
  %3661 = vmatprep.subr.mxu0 %v488
  %3662 = vmatpush1.msra.mxu0 %v487
  %3663 = vmatprep.subr.mxu0 %v492
  %3664 = vmatpush1.msra.mxu0 %v491
  %3665 = vmatprep.subr.mxu0 %v496
  %3666 = vmatpush1.msra.mxu0 %v495
  %3667 = vmatprep.subr.mxu0 %v500
  %3668 = vmatpush1.msra.mxu0 %v499
  %3669 = vmatprep.subr.mxu0 %v504
  %3670 = vmatpush1.msra.mxu0 %v503
  %3671 = vmatprep.subr.mxu0 %v508
  %3672 = vmatpush1.msra.mxu0 %v507
  %3673 = vmatprep.subr.mxu0 %v512
  %3674 = vmatpush1.msra.mxu0 %v511
  %3675 = vmatprep.subr.mxu0 %v516
  %3676 = vmatpush1.msra.mxu0 %v515
  %3677 = vmatprep.subr.mxu0 %v520
  %3678 = vmatpush1.msra.mxu0 %v519
  %3679 = vmatprep.subr.mxu0 %v524
  %3680 = vmatpush1.msra.mxu0 %v523
  %3681 = vmatprep.subr.mxu0 %v528
  %3682 = vmatpush1.msra.mxu0 %v527
  %3683 = vmatprep.subr.mxu0 %v532
  %3684 = vmatpush1.msra.mxu0 %v531
  %3685 = vmatprep.subr.mxu0 %v536
  %3686 = vmatpush1.msra.mxu0 %v535
  %3687 = vmatprep.subr.mxu0 %v540
  %3688 = vmatpush1.msra.mxu0 %v539
  %3689 = vmatprep.subr.mxu0 %v544
  %3690 = vmatpush1.msra.mxu0 %v543
  %3691 = vmatprep.subr.mxu0 %v548
  %3692 = vmatpush1.msra.mxu0 %v547
  %3693 = vmatprep.subr.mxu0 %v552
  %3694 = vmatpush1.msra.mxu0 %v551
  %3695 = vmatprep.subr.mxu0 %v556
  %3696 = vmatpush1.msra.mxu0 %v555
  %3697 = vmatprep.subr.mxu0 %v560
  %3698 = vmatpush1.msra.mxu0 %v559
  %3699 = vmatprep.subr.mxu0 0.0
  %3700 = vmatpush1.msra.mxu0 0.0
  %3701 = vmatprep.subr.mxu0 0.0
  %3702 = vmatpush1.msra.mxu0 0.0
  %3703 = vmatprep.subr.mxu0 0.0
  %3704 = vmatpush1.msra.mxu0 0.0
  %3705 = vmatprep.subr.mxu0 0.0
  %3706 = vmatpush1.msra.mxu0 0.0
  %3707 = vmatprep.subr.mxu0 0.0
  %3708 = vmatpush1.msra.mxu0 0.0
  %3709 = vmatprep.subr.mxu0 0.0
  %3710 = vmatpush1.msra.mxu0 0.0
  %3711 = vmatprep.subr.mxu0 0.0
  %3712 = vmatpush1.msra.mxu0 0.0
  %3713 = vmatprep.subr.mxu0 0.0
  %3714 = vmatpush1.msra.mxu0 0.0
  %3715 = vmatprep.subr.mxu0 0.0
  %3716 = vmatpush1.msra.mxu0 0.0
  %3717 = vmatprep.subr.mxu0 0.0
  %3718 = vmatpush1.msra.mxu0 0.0
  %3719 = vmatprep.subr.mxu0 0.0
  %3720 = vmatpush1.msra.mxu0 0.0
  %3721 = vmatprep.subr.mxu0 0.0
  %3722 = vmatpush1.msra.mxu0 0.0
  %3723 = vmatprep.mubr.f32.mxu0 %v3657
  %3724 = vmatmul.mubr.f32.gmra.mrb[0].mxu0 %v3306
  %v3725 = vpop.f32.mrb[0].mxu0
  %v3726 = vadd.f32 0.0, %v3725
  %v3727 = vpop.f32.mrb[0].mxu0
  %v3728 = vadd.f32 0.0, %v3727
  %3729 = vdwg.mxu0
  %3730 = vmatprep.subr.mxu0 %v486
  %3731 = vmatpush1.msra.mxu0 %v485
  %3732 = vmatprep.subr.mxu0 %v490
  %3733 = vmatpush1.msra.mxu0 %v489
  %3734 = vmatprep.subr.mxu0 %v494
  %3735 = vmatpush1.msra.mxu0 %v493
  %3736 = vmatprep.subr.mxu0 %v498
  %3737 = vmatpush1.msra.mxu0 %v497
  %3738 = vmatprep.subr.mxu0 %v502
  %3739 = vmatpush1.msra.mxu0 %v501
  %3740 = vmatprep.subr.mxu0 %v506
  %3741 = vmatpush1.msra.mxu0 %v505
  %3742 = vmatprep.subr.mxu0 %v510
  %3743 = vmatpush1.msra.mxu0 %v509
  %3744 = vmatprep.subr.mxu0 %v514
  %3745 = vmatpush1.msra.mxu0 %v513
  %3746 = vmatprep.subr.mxu0 %v518
  %3747 = vmatpush1.msra.mxu0 %v517
  %3748 = vmatprep.subr.mxu0 %v522
  %3749 = vmatpush1.msra.mxu0 %v521
  %3750 = vmatprep.subr.mxu0 %v526
  %3751 = vmatpush1.msra.mxu0 %v525
  %3752 = vmatprep.subr.mxu0 %v530
  %3753 = vmatpush1.msra.mxu0 %v529
  %3754 = vmatprep.subr.mxu0 %v534
  %3755 = vmatpush1.msra.mxu0 %v533
  %3756 = vmatprep.subr.mxu0 %v538
  %3757 = vmatpush1.msra.mxu0 %v537
  %3758 = vmatprep.subr.mxu0 %v542
  %3759 = vmatpush1.msra.mxu0 %v541
  %3760 = vmatprep.subr.mxu0 %v546
  %3761 = vmatpush1.msra.mxu0 %v545
  %3762 = vmatprep.subr.mxu0 %v550
  %3763 = vmatpush1.msra.mxu0 %v549
  %3764 = vmatprep.subr.mxu0 %v554
  %3765 = vmatpush1.msra.mxu0 %v553
  %3766 = vmatprep.subr.mxu0 %v558
  %3767 = vmatpush1.msra.mxu0 %v557
  %3768 = vmatprep.subr.mxu0 %v562
  %3769 = vmatpush1.msra.mxu0 %v561
  %3770 = vmatprep.subr.mxu0 0.0
  %3771 = vmatpush1.msra.mxu0 0.0
  %3772 = vmatprep.subr.mxu0 0.0
  %3773 = vmatpush1.msra.mxu0 0.0
  %3774 = vmatprep.subr.mxu0 0.0
  %3775 = vmatpush1.msra.mxu0 0.0
  %3776 = vmatprep.subr.mxu0 0.0
  %3777 = vmatpush1.msra.mxu0 0.0
  %3778 = vmatprep.subr.mxu0 0.0
  %3779 = vmatpush1.msra.mxu0 0.0
  %3780 = vmatprep.subr.mxu0 0.0
  %3781 = vmatpush1.msra.mxu0 0.0
  %3782 = vmatprep.subr.mxu0 0.0
  %3783 = vmatpush1.msra.mxu0 0.0
  %3784 = vmatprep.subr.mxu0 0.0
  %3785 = vmatpush1.msra.mxu0 0.0
  %3786 = vmatprep.subr.mxu0 0.0
  %3787 = vmatpush1.msra.mxu0 0.0
  %3788 = vmatprep.subr.mxu0 0.0
  %3789 = vmatpush1.msra.mxu0 0.0
  %3790 = vmatprep.subr.mxu0 0.0
  %3791 = vmatpush1.msra.mxu0 0.0
  %3792 = vmatprep.subr.mxu0 0.0
  %3793 = vmatpush1.msra.mxu0 0.0
  %3794 = vmatprep.mubr.f32.mxu0 %v3657
  %3795 = vmatmul.mubr.f32.gmra.mrb[0].mxu0 %v3306
  %v3796 = vpop.f32.mrb[0].mxu0
  %v3797 = vadd.f32 0.0, %v3796
  %v3798 = vpop.f32.mrb[0].mxu0
  %v3799 = vadd.f32 0.0, %v3798
  %3800 = vdwg.mxu0
  %v3805 = vcombine.low %v3726, %v3728
  %v3806 = vcombine.low %v3797, %v3799
  %v3808 = vunpack.c.l.s4 1983009808
  %v3809 = vunpack.c.0.s8 %v3808
  %v3810 = vlaneseq
  %v3811 = vshrl.u32 %v3810, 7
  %v3812 = vsub.s32 %v3809, %v3811
  %v3813 = vrot.slane %v3805, %v3812
  %v3815 = vunpack.c.l.s4 1983009808
  %v3816 = vunpack.c.0.s8 %v3815
  %v3817 = vlaneseq
  %v3818 = vshrl.u32 %v3817, 7
  %v3819 = vsub.s32 %v3816, %v3818
  %v3820 = vrot.slane %v3806, %v3819
  %v3821 = vcombine.low %v3813, %v3820
  %v3823 = vadd.f32 %v3656, %v3821
  %v3824 = vxor.u32 %v3823, 2147483648
  %v3825 = vmul.f32 %v3824, 1.442695
  %v3826 = vpow.pop %v3825
  %v3827 = vadd.f32 %v3826, 1.0
  %v3828 = vrcp.pop %v3827
  %v3829 = vmul.f32 1.0, %v3828
  %v3831 = vrot.slane %v3823, 2
  %v3833 = vxor.u32 %v3831, 2147483648
  %v3834 = vmul.f32 %v3833, 1.442695
  %v3835 = vpow.pop %v3834
  %v3836 = vadd.f32 %v3835, 1.0
  %v3837 = vrcp.pop %v3836
  %v3838 = vmul.f32 1.0, %v3837
  %v3839 = vrot.slane %v3823, 4
  %v3841 = vtanh.pop %v3839
  %v3842 = vrot.slane %v3823, 6
  %v3844 = vxor.u32 %v3842, 2147483648
  %v3845 = vmul.f32 %v3844, 1.442695
  %v3846 = vpow.pop %v3845
  %v3847 = vadd.f32 %v3846, 1.0
  %v3848 = vrcp.pop %v3847
  %v3849 = vmul.f32 1.0, %v3848
  %v3850 = vmul.f32 %v3838, %v3304
  %v3851 = vmul.f32 %v3829, %v3841
  %v3852 = vadd.f32 %v3850, %v3851
  %v3853 = vtanh.pop %v3852
  %v3854 = vmul.f32 %v3849, %v3853
  %s3855 = scalar_lea.vmem %s9, 10
  %3856 = vst [vmem:[%s3855] sm:$0x3] %v3854
  %s3857 = scalar_lea.vmem %s10, 10
  %3858 = vst [vmem:[%s3857] sm:$0x3] %v3852
  %3859 = vmatprep.subr.mxu0 0.0
  %3860 = vmatpush1.msra.mxu0 %v467
  %3861 = vmatprep.subr.mxu0 0.0
  %3862 = vmatpush1.msra.mxu0 %v468
  %3863 = vmatprep.subr.mxu0 0.0
  %3864 = vmatpush1.msra.mxu0 %v469
  %3865 = vmatprep.subr.mxu0 0.0
  %3866 = vmatpush1.msra.mxu0 %v470
  %3867 = vmatprep.subr.mxu0 0.0
  %3868 = vmatpush1.msra.mxu0 %v471
  %3869 = vmatprep.subr.mxu0 0.0
  %3870 = vmatpush1.msra.mxu0 %v472
  %3871 = vmatprep.subr.mxu0 0.0
  %3872 = vmatpush1.msra.mxu0 %v473
  %3873 = vmatprep.subr.mxu0 0.0
  %3874 = vmatpush1.msra.mxu0 %v474
  %3875 = vmatprep.subr.mxu0 0.0
  %3876 = vmatpush1.msra.mxu0 %v475
  %3877 = vmatprep.subr.mxu0 0.0
  %3878 = vmatpush1.msra.mxu0 %v476
  %3879 = vmatprep.subr.mxu0 0.0
  %3880 = vmatpush1.msra.mxu0 %v477
  %3881 = vmatprep.subr.mxu0 0.0
  %3882 = vmatpush1.msra.mxu0 %v478
  %3883 = vmatprep.subr.mxu0 0.0
  %3884 = vmatpush1.msra.mxu0 %v479
  %3885 = vmatprep.subr.mxu0 0.0
  %3886 = vmatpush1.msra.mxu0 %v480
  %3887 = vmatprep.subr.mxu0 0.0
  %3888 = vmatpush1.msra.mxu0 %v481
  %3889 = vmatprep.subr.mxu0 0.0
  %3890 = vmatpush1.msra.mxu0 %v482
  %3891 = vmatprep.subr.mxu0 0.0
  %3892 = vmatpush1.msra.mxu0 0.0
  %3893 = vmatprep.subr.mxu0 0.0
  %3894 = vmatpush1.msra.mxu0 0.0
  %3895 = vmatprep.subr.mxu0 0.0
  %3896 = vmatpush1.msra.mxu0 0.0
  %3897 = vmatprep.subr.mxu0 0.0
  %3898 = vmatpush1.msra.mxu0 0.0
  %3899 = vmatprep.subr.mxu0 0.0
  %3900 = vmatpush1.msra.mxu0 0.0
  %3901 = vmatprep.subr.mxu0 0.0
  %3902 = vmatpush1.msra.mxu0 0.0
  %3903 = vmatprep.subr.mxu0 0.0
  %3904 = vmatpush1.msra.mxu0 0.0
  %3905 = vmatprep.subr.mxu0 0.0
  %3906 = vmatpush1.msra.mxu0 0.0
  %3907 = vmatprep.subr.mxu0 0.0
  %3908 = vmatpush1.msra.mxu0 0.0
  %3909 = vmatprep.subr.mxu0 0.0
  %3910 = vmatpush1.msra.mxu0 0.0
  %3911 = vmatprep.subr.mxu0 0.0
  %3912 = vmatpush1.msra.mxu0 0.0
  %3913 = vmatprep.subr.mxu0 0.0
  %3914 = vmatpush1.msra.mxu0 0.0
  %3915 = vmatprep.subr.mxu0 0.0
  %3916 = vmatpush1.msra.mxu0 0.0
  %3917 = vmatprep.subr.mxu0 0.0
  %3918 = vmatpush1.msra.mxu0 0.0
  %3919 = vmatprep.subr.mxu0 0.0
  %3920 = vmatpush1.msra.mxu0 0.0
  %3921 = vmatprep.subr.mxu0 0.0
  %3922 = vmatpush1.msra.mxu0 0.0
  %3923 = vmatprep.mubr.f32.mxu0 0.0
  %3924 = vmatmul.mubr.f32.gmra.mrb[0].mxu0 %v3852
  %v3925 = vpop.f32.mrb[0].mxu0
  %v3926 = vadd.f32 0.0, %v3925
  %v3927 = vpop.f32.mrb[0].mxu0
  %3928 = vdwg.mxu0
  %v3931 = vunpack.c.l.s4 1966171168
  %v3932 = vunpack.c.0.s8 %v3931
  %v3933 = vlaneseq
  %v3934 = vshrl.u32 %v3933, 7
  %v3935 = vsub.s32 %v3932, %v3934
  %v3936 = vrot.slane %v3926, %v3935
  %v3937 = vcombine.high %v3936, %v3936
  %v3939 = vunpack.c.l.s4 1966171168
  %v3940 = vunpack.c.0.s8 %v3939
  %v3941 = vlaneseq
  %v3942 = vshrl.u32 %v3941, 7
  %v3943 = vsub.s32 %v3940, %v3942
  %v3944 = vrot.slane %v3936, %v3943
  %v3946 = vunpack.c.l.s4 1966171168
  %v3947 = vunpack.c.0.s8 %v3946
  %v3948 = vlaneseq
  %v3949 = vshrl.u32 %v3948, 7
  %v3950 = vsub.s32 %v3947, %v3949
  %v3951 = vrot.slane %v3937, %v3950
  %v3952 = vlaneseq
  %v3953 = vshrl.u32 %v3952, 7
  %v3954 = vsub.s32 0, %v3953
  %v3955 = vrot.slane %v3944, %v3954
  %v3956 = vlaneseq
  %v3957 = vshrl.u32 %v3956, 7
  %v3958 = vsub.s32 0, %v3957
  %v3959 = vrot.slane %v3951, %v3958
  %v3962 = vadd.f32 %v129, %v3955
  %v3963 = vadd.f32 %v130, %v3959
  %v3964 = vtanh.pop %v3962
  %v3965 = vtanh.pop %v3963
  %v3966 = vmul.f32 %v3964, %v674
  %v3967 = vmul.f32 %v3965, %v674
  %3968 = vadd.xlane.f32.xlu0 %v3966
  %v3969 = vpop.xlane.xlu0 %3968
  %3970 = vadd.xlane.f32.xlu0 %v3967
  %v3971 = vpop.xlane.xlu0 %3970
  %v3974 = vlaneseq
  %v3975 = vshrl.u32 %v3974, 7
  %v3976 = vsub.s32 %v685, %v3975
  %v3977 = vrot.slane %v3969, %v3976
  %v3978 = vlaneseq
  %v3979 = vshrl.u32 %v3978, 7
  %v3980 = vsub.s32 %v685, %v3979
  %v3981 = vrot.slane %v3971, %v3980
  %v3982 = vsel %vm694, %v3981, %v3977
  %v3984 = vsel %vm697, %v3982, -inf
  %3985 = vmax.xlane.f32.xlu0 %v3984
  %v3986 = vpop.xlane.xlu0 %3985
  %v3988 = vlaneseq
  %v3989 = vshrl.u32 %v3988, 7
  %v3990 = vsub.s32 0, %v3989
  %v3991 = vrot.slane %v3986, %v3990
  %v3992 = vlaneseq
  %v3993 = vshrl.u32 %v3992, 7
  %v3994 = vsub.s32 1, %v3993
  %v3995 = vrot.slane %v3986, %v3994
  %v3998 = vsub.f32 %v3969, %v3991
  %v3999 = vsub.f32 %v3971, %v3995
  %v4000 = vmul.f32 %v3998, 1.442695
  %v4001 = vpow.pop %v4000
  %v4002 = vmul.f32 %v3999, 1.442695
  %v4003 = vpow.pop %v4002
  %4006 = vset.pattern.permute.xlu0 0
  %4007 = vperm.xlu0 %4006, %v4001
  %v4008 = vpop.permute.xlu0 %4007
  %4009 = vset.pattern.permute.xlu0 0
  %4010 = vperm.xlu0 %4009, %v4003
  %v4011 = vpop.permute.xlu0 %4010
  %v4012 = vlaneseq
  %v4013 = vshrl.u32 %v4012, 7
  %v4014 = vsub.s32 %v685, %v4013
  %v4015 = vrot.slane %v4008, %v4014
  %v4016 = vlaneseq
  %v4017 = vshrl.u32 %v4016, 7
  %v4018 = vsub.s32 %v685, %v4017
  %v4019 = vrot.slane %v4011, %v4018
  %v4020 = vsel %vm694, %v4019, %v4015
  %v4022 = vsel %vm697, %v4020, 0.0
  %4023 = vadd.xlane.f32.xlu0 %v4022
  %v4024 = vpop.xlane.xlu0 %4023
  %v4025 = vrcp.pop %v4024
  %v4027 = vlaneseq
  %v4028 = vshrl.u32 %v4027, 7
  %v4029 = vsub.s32 0, %v4028
  %v4030 = vrot.slane %v4025, %v4029
  %v4031 = vlaneseq
  %v4032 = vshrl.u32 %v4031, 7
  %v4033 = vsub.s32 1, %v4032
  %v4034 = vrot.slane %v4025, %v4033
  %v4037 = vmul.f32 %v4001, %v4030
  %v4038 = vmul.f32 %v4003, %v4034
  %4040 = vset.pattern.permute.xlu0 0
  %4041 = vperm.xlu0 %4040, %v4037
  %v4042 = vpop.permute.xlu0 %4041
  %v4043 = vlaneseq
  %v4044 = vshrl.u32 %v4043, 7
  %v4045 = vsub.s32 %v685, %v4044
  %v4046 = vrot.slane %v4042, %v4045
  %v4047 = vsel %vm761, %v4046, 0
  %4049 = vmatprep.subr.mxu0 0.0
  %4050 = vmatpush1.msra.mxu0 %v34
  %4051 = vmatprep.subr.mxu0 0.0
  %4052 = vmatpush1.msra.mxu0 0.0
  %4053 = vmatprep.subr.mxu0 0.0
  %4054 = vmatpush1.msra.mxu0 0.0
  %4055 = vmatprep.subr.mxu0 0.0
  %4056 = vmatpush1.msra.mxu0 0.0
  %4057 = vmatprep.subr.mxu0 0.0
  %4058 = vmatpush1.msra.mxu0 0.0
  %4059 = vmatprep.subr.mxu0 0.0
  %4060 = vmatpush1.msra.mxu0 0.0
  %4061 = vmatprep.subr.mxu0 0.0
  %4062 = vmatpush1.msra.mxu0 0.0
  %4063 = vmatprep.subr.mxu0 0.0
  %4064 = vmatpush1.msra.mxu0 0.0
  %4065 = vmatprep.subr.mxu0 0.0
  %4066 = vmatpush1.msra.mxu0 0.0
  %4067 = vmatprep.subr.mxu0 0.0
  %4068 = vmatpush1.msra.mxu0 0.0
  %4069 = vmatprep.subr.mxu0 0.0
  %4070 = vmatpush1.msra.mxu0 0.0
  %4071 = vmatprep.subr.mxu0 0.0
  %4072 = vmatpush1.msra.mxu0 0.0
  %4073 = vmatprep.subr.mxu0 0.0
  %4074 = vmatpush1.msra.mxu0 0.0
  %4075 = vmatprep.subr.mxu0 0.0
  %4076 = vmatpush1.msra.mxu0 0.0
  %4077 = vmatprep.subr.mxu0 0.0
  %4078 = vmatpush1.msra.mxu0 0.0
  %4079 = vmatprep.subr.mxu0 0.0
  %4080 = vmatpush1.msra.mxu0 0.0
  %4081 = vmatprep.subr.mxu0 0.0
  %4082 = vmatpush1.msra.mxu0 0.0
  %4083 = vmatprep.subr.mxu0 0.0
  %4084 = vmatpush1.msra.mxu0 0.0
  %4085 = vmatprep.subr.mxu0 0.0
  %4086 = vmatpush1.msra.mxu0 0.0
  %4087 = vmatprep.subr.mxu0 0.0
  %4088 = vmatpush1.msra.mxu0 0.0
  %4089 = vmatprep.subr.mxu0 0.0
  %4090 = vmatpush1.msra.mxu0 0.0
  %4091 = vmatprep.subr.mxu0 0.0
  %4092 = vmatpush1.msra.mxu0 0.0
  %4093 = vmatprep.subr.mxu0 0.0
  %4094 = vmatpush1.msra.mxu0 0.0
  %4095 = vmatprep.subr.mxu0 0.0
  %4096 = vmatpush1.msra.mxu0 0.0
  %4097 = vmatprep.subr.mxu0 0.0
  %4098 = vmatpush1.msra.mxu0 0.0
  %4099 = vmatprep.subr.mxu0 0.0
  %4100 = vmatpush1.msra.mxu0 0.0
  %4101 = vmatprep.subr.mxu0 0.0
  %4102 = vmatpush1.msra.mxu0 0.0
  %4103 = vmatprep.subr.mxu0 0.0
  %4104 = vmatpush1.msra.mxu0 0.0
  %4105 = vmatprep.subr.mxu0 0.0
  %4106 = vmatpush1.msra.mxu0 0.0
  %4107 = vmatprep.subr.mxu0 0.0
  %4108 = vmatpush1.msra.mxu0 0.0
  %4109 = vmatprep.subr.mxu0 0.0
  %4110 = vmatpush1.msra.mxu0 0.0
  %4111 = vmatprep.subr.mxu0 0.0
  %4112 = vmatpush1.msra.mxu0 0.0
  %4113 = vmatprep.mubr.f32.mxu0 0.0
  %4114 = vmatmul.mubr.f32.gmra.mrb[0].mxu0 %v4047
  %v4115 = vpop.f32.mrb[0].mxu0
  %v4116 = vadd.f32 0.0, %v4115
  %v4117 = vpop.f32.mrb[0].mxu0
  %4118 = vdwg.mxu0
  %4120 = vset.pattern.permute.xlu0 0
  %4121 = vperm.xlu0 %4120, %v4038
  %v4122 = vpop.permute.xlu0 %4121
  %v4123 = vlaneseq
  %v4124 = vshrl.u32 %v4123, 7
  %v4125 = vsub.s32 %v685, %v4124
  %v4126 = vrot.slane %v4122, %v4125
  %v4127 = vsel %vm761, %v4126, 0
  %4129 = vmatprep.subr.mxu0 0.0
  %4130 = vmatpush1.msra.mxu0 %v35
  %4131 = vmatprep.subr.mxu0 0.0
  %4132 = vmatpush1.msra.mxu0 0.0
  %4133 = vmatprep.subr.mxu0 0.0
  %4134 = vmatpush1.msra.mxu0 0.0
  %4135 = vmatprep.subr.mxu0 0.0
  %4136 = vmatpush1.msra.mxu0 0.0
  %4137 = vmatprep.subr.mxu0 0.0
  %4138 = vmatpush1.msra.mxu0 0.0
  %4139 = vmatprep.subr.mxu0 0.0
  %4140 = vmatpush1.msra.mxu0 0.0
  %4141 = vmatprep.subr.mxu0 0.0
  %4142 = vmatpush1.msra.mxu0 0.0
  %4143 = vmatprep.subr.mxu0 0.0
  %4144 = vmatpush1.msra.mxu0 0.0
  %4145 = vmatprep.subr.mxu0 0.0
  %4146 = vmatpush1.msra.mxu0 0.0
  %4147 = vmatprep.subr.mxu0 0.0
  %4148 = vmatpush1.msra.mxu0 0.0
  %4149 = vmatprep.subr.mxu0 0.0
  %4150 = vmatpush1.msra.mxu0 0.0
  %4151 = vmatprep.subr.mxu0 0.0
  %4152 = vmatpush1.msra.mxu0 0.0
  %4153 = vmatprep.subr.mxu0 0.0
  %4154 = vmatpush1.msra.mxu0 0.0
  %4155 = vmatprep.subr.mxu0 0.0
  %4156 = vmatpush1.msra.mxu0 0.0
  %4157 = vmatprep.subr.mxu0 0.0
  %4158 = vmatpush1.msra.mxu0 0.0
  %4159 = vmatprep.subr.mxu0 0.0
  %4160 = vmatpush1.msra.mxu0 0.0
  %4161 = vmatprep.subr.mxu0 0.0
  %4162 = vmatpush1.msra.mxu0 0.0
  %4163 = vmatprep.subr.mxu0 0.0
  %4164 = vmatpush1.msra.mxu0 0.0
  %4165 = vmatprep.subr.mxu0 0.0
  %4166 = vmatpush1.msra.mxu0 0.0
  %4167 = vmatprep.subr.mxu0 0.0
  %4168 = vmatpush1.msra.mxu0 0.0
  %4169 = vmatprep.subr.mxu0 0.0
  %4170 = vmatpush1.msra.mxu0 0.0
  %4171 = vmatprep.subr.mxu0 0.0
  %4172 = vmatpush1.msra.mxu0 0.0
  %4173 = vmatprep.subr.mxu0 0.0
  %4174 = vmatpush1.msra.mxu0 0.0
  %4175 = vmatprep.subr.mxu0 0.0
  %4176 = vmatpush1.msra.mxu0 0.0
  %4177 = vmatprep.subr.mxu0 0.0
  %4178 = vmatpush1.msra.mxu0 0.0
  %4179 = vmatprep.subr.mxu0 0.0
  %4180 = vmatpush1.msra.mxu0 0.0
  %4181 = vmatprep.subr.mxu0 0.0
  %4182 = vmatpush1.msra.mxu0 0.0
  %4183 = vmatprep.subr.mxu0 0.0
  %4184 = vmatpush1.msra.mxu0 0.0
  %4185 = vmatprep.subr.mxu0 0.0
  %4186 = vmatpush1.msra.mxu0 0.0
  %4187 = vmatprep.subr.mxu0 0.0
  %4188 = vmatpush1.msra.mxu0 0.0
  %4189 = vmatprep.subr.mxu0 0.0
  %4190 = vmatpush1.msra.mxu0 0.0
  %4191 = vmatprep.subr.mxu0 0.0
  %4192 = vmatpush1.msra.mxu0 0.0
  %4193 = vmatprep.mubr.f32.mxu0 0.0
  %4194 = vmatmul.mubr.f32.gmra.mrb[0].mxu0 %v4127
  %v4195 = vpop.f32.mrb[0].mxu0
  %v4196 = vadd.f32 0.0, %v4195
  %v4197 = vpop.f32.mrb[0].mxu0
  %4198 = vdwg.mxu0
  %v4201 = vrot.slane %v4196, 7
  %v4202 = vsel %vm694, %v4201, %v4116
  %s4203 = scalar_lea.vmem [#allocation2], 48
  %v4204 = vld [vmem:[%s4203] sm:$0xff]
  %v4205 = vsel %vm40, %v4202, 0
  %4207 = vmatprep.subr.mxu0 %v484
  %4208 = vmatpush1.msra.mxu0 %v483
  %4209 = vmatprep.subr.mxu0 %v488
  %4210 = vmatpush1.msra.mxu0 %v487
  %4211 = vmatprep.subr.mxu0 %v492
  %4212 = vmatpush1.msra.mxu0 %v491
  %4213 = vmatprep.subr.mxu0 %v496
  %4214 = vmatpush1.msra.mxu0 %v495
  %4215 = vmatprep.subr.mxu0 %v500
  %4216 = vmatpush1.msra.mxu0 %v499
  %4217 = vmatprep.subr.mxu0 %v504
  %4218 = vmatpush1.msra.mxu0 %v503
  %4219 = vmatprep.subr.mxu0 %v508
  %4220 = vmatpush1.msra.mxu0 %v507
  %4221 = vmatprep.subr.mxu0 %v512
  %4222 = vmatpush1.msra.mxu0 %v511
  %4223 = vmatprep.subr.mxu0 %v516
  %4224 = vmatpush1.msra.mxu0 %v515
  %4225 = vmatprep.subr.mxu0 %v520
  %4226 = vmatpush1.msra.mxu0 %v519
  %4227 = vmatprep.subr.mxu0 %v524
  %4228 = vmatpush1.msra.mxu0 %v523
  %4229 = vmatprep.subr.mxu0 %v528
  %4230 = vmatpush1.msra.mxu0 %v527
  %4231 = vmatprep.subr.mxu0 %v532
  %4232 = vmatpush1.msra.mxu0 %v531
  %4233 = vmatprep.subr.mxu0 %v536
  %4234 = vmatpush1.msra.mxu0 %v535
  %4235 = vmatprep.subr.mxu0 %v540
  %4236 = vmatpush1.msra.mxu0 %v539
  %4237 = vmatprep.subr.mxu0 %v544
  %4238 = vmatpush1.msra.mxu0 %v543
  %4239 = vmatprep.subr.mxu0 %v548
  %4240 = vmatpush1.msra.mxu0 %v547
  %4241 = vmatprep.subr.mxu0 %v552
  %4242 = vmatpush1.msra.mxu0 %v551
  %4243 = vmatprep.subr.mxu0 %v556
  %4244 = vmatpush1.msra.mxu0 %v555
  %4245 = vmatprep.subr.mxu0 %v560
  %4246 = vmatpush1.msra.mxu0 %v559
  %4247 = vmatprep.subr.mxu0 0.0
  %4248 = vmatpush1.msra.mxu0 0.0
  %4249 = vmatprep.subr.mxu0 0.0
  %4250 = vmatpush1.msra.mxu0 0.0
  %4251 = vmatprep.subr.mxu0 0.0
  %4252 = vmatpush1.msra.mxu0 0.0
  %4253 = vmatprep.subr.mxu0 0.0
  %4254 = vmatpush1.msra.mxu0 0.0
  %4255 = vmatprep.subr.mxu0 0.0
  %4256 = vmatpush1.msra.mxu0 0.0
  %4257 = vmatprep.subr.mxu0 0.0
  %4258 = vmatpush1.msra.mxu0 0.0
  %4259 = vmatprep.subr.mxu0 0.0
  %4260 = vmatpush1.msra.mxu0 0.0
  %4261 = vmatprep.subr.mxu0 0.0
  %4262 = vmatpush1.msra.mxu0 0.0
  %4263 = vmatprep.subr.mxu0 0.0
  %4264 = vmatpush1.msra.mxu0 0.0
  %4265 = vmatprep.subr.mxu0 0.0
  %4266 = vmatpush1.msra.mxu0 0.0
  %4267 = vmatprep.subr.mxu0 0.0
  %4268 = vmatpush1.msra.mxu0 0.0
  %4269 = vmatprep.subr.mxu0 0.0
  %4270 = vmatpush1.msra.mxu0 0.0
  %4271 = vmatprep.mubr.f32.mxu0 %v4205
  %4272 = vmatmul.mubr.f32.gmra.mrb[0].mxu0 %v3854
  %v4273 = vpop.f32.mrb[0].mxu0
  %v4274 = vadd.f32 0.0, %v4273
  %v4275 = vpop.f32.mrb[0].mxu0
  %v4276 = vadd.f32 0.0, %v4275
  %4277 = vdwg.mxu0
  %4278 = vmatprep.subr.mxu0 %v486
  %4279 = vmatpush1.msra.mxu0 %v485
  %4280 = vmatprep.subr.mxu0 %v490
  %4281 = vmatpush1.msra.mxu0 %v489
  %4282 = vmatprep.subr.mxu0 %v494
  %4283 = vmatpush1.msra.mxu0 %v493
  %4284 = vmatprep.subr.mxu0 %v498
  %4285 = vmatpush1.msra.mxu0 %v497
  %4286 = vmatprep.subr.mxu0 %v502
  %4287 = vmatpush1.msra.mxu0 %v501
  %4288 = vmatprep.subr.mxu0 %v506
  %4289 = vmatpush1.msra.mxu0 %v505
  %4290 = vmatprep.subr.mxu0 %v510
  %4291 = vmatpush1.msra.mxu0 %v509
  %4292 = vmatprep.subr.mxu0 %v514
  %4293 = vmatpush1.msra.mxu0 %v513
  %4294 = vmatprep.subr.mxu0 %v518
  %4295 = vmatpush1.msra.mxu0 %v517
  %4296 = vmatprep.subr.mxu0 %v522
  %4297 = vmatpush1.msra.mxu0 %v521
  %4298 = vmatprep.subr.mxu0 %v526
  %4299 = vmatpush1.msra.mxu0 %v525
  %4300 = vmatprep.subr.mxu0 %v530
  %4301 = vmatpush1.msra.mxu0 %v529
  %4302 = vmatprep.subr.mxu0 %v534
  %4303 = vmatpush1.msra.mxu0 %v533
  %4304 = vmatprep.subr.mxu0 %v538
  %4305 = vmatpush1.msra.mxu0 %v537
  %4306 = vmatprep.subr.mxu0 %v542
  %4307 = vmatpush1.msra.mxu0 %v541
  %4308 = vmatprep.subr.mxu0 %v546
  %4309 = vmatpush1.msra.mxu0 %v545
  %4310 = vmatprep.subr.mxu0 %v550
  %4311 = vmatpush1.msra.mxu0 %v549
  %4312 = vmatprep.subr.mxu0 %v554
  %4313 = vmatpush1.msra.mxu0 %v553
  %4314 = vmatprep.subr.mxu0 %v558
  %4315 = vmatpush1.msra.mxu0 %v557
  %4316 = vmatprep.subr.mxu0 %v562
  %4317 = vmatpush1.msra.mxu0 %v561
  %4318 = vmatprep.subr.mxu0 0.0
  %4319 = vmatpush1.msra.mxu0 0.0
  %4320 = vmatprep.subr.mxu0 0.0
  %4321 = vmatpush1.msra.mxu0 0.0
  %4322 = vmatprep.subr.mxu0 0.0
  %4323 = vmatpush1.msra.mxu0 0.0
  %4324 = vmatprep.subr.mxu0 0.0
  %4325 = vmatpush1.msra.mxu0 0.0
  %4326 = vmatprep.subr.mxu0 0.0
  %4327 = vmatpush1.msra.mxu0 0.0
  %4328 = vmatprep.subr.mxu0 0.0
  %4329 = vmatpush1.msra.mxu0 0.0
  %4330 = vmatprep.subr.mxu0 0.0
  %4331 = vmatpush1.msra.mxu0 0.0
  %4332 = vmatprep.subr.mxu0 0.0
  %4333 = vmatpush1.msra.mxu0 0.0
  %4334 = vmatprep.subr.mxu0 0.0
  %4335 = vmatpush1.msra.mxu0 0.0
  %4336 = vmatprep.subr.mxu0 0.0
  %4337 = vmatpush1.msra.mxu0 0.0
  %4338 = vmatprep.subr.mxu0 0.0
  %4339 = vmatpush1.msra.mxu0 0.0
  %4340 = vmatprep.subr.mxu0 0.0
  %4341 = vmatpush1.msra.mxu0 0.0
  %4342 = vmatprep.mubr.f32.mxu0 %v4205
  %4343 = vmatmul.mubr.f32.gmra.mrb[0].mxu0 %v3854
  %v4344 = vpop.f32.mrb[0].mxu0
  %v4345 = vadd.f32 0.0, %v4344
  %v4346 = vpop.f32.mrb[0].mxu0
  %v4347 = vadd.f32 0.0, %v4346
  %4348 = vdwg.mxu0
  %v4353 = vcombine.low %v4274, %v4276
  %v4354 = vcombine.low %v4345, %v4347
  %v4356 = vunpack.c.l.s4 1983009808
  %v4357 = vunpack.c.0.s8 %v4356
  %v4358 = vlaneseq
  %v4359 = vshrl.u32 %v4358, 7
  %v4360 = vsub.s32 %v4357, %v4359
  %v4361 = vrot.slane %v4353, %v4360
  %v4363 = vunpack.c.l.s4 1983009808
  %v4364 = vunpack.c.0.s8 %v4363
  %v4365 = vlaneseq
  %v4366 = vshrl.u32 %v4365, 7
  %v4367 = vsub.s32 %v4364, %v4366
  %v4368 = vrot.slane %v4354, %v4367
  %v4369 = vcombine.low %v4361, %v4368
  %v4371 = vadd.f32 %v4204, %v4369
  %v4372 = vxor.u32 %v4371, 2147483648
  %v4373 = vmul.f32 %v4372, 1.442695
  %v4374 = vpow.pop %v4373
  %v4375 = vadd.f32 %v4374, 1.0
  %v4376 = vrcp.pop %v4375
  %v4377 = vmul.f32 1.0, %v4376
  %v4379 = vrot.slane %v4371, 2
  %v4381 = vxor.u32 %v4379, 2147483648
  %v4382 = vmul.f32 %v4381, 1.442695
  %v4383 = vpow.pop %v4382
  %v4384 = vadd.f32 %v4383, 1.0
  %v4385 = vrcp.pop %v4384
  %v4386 = vmul.f32 1.0, %v4385
  %v4387 = vrot.slane %v4371, 4
  %v4389 = vtanh.pop %v4387
  %v4390 = vrot.slane %v4371, 6
  %v4392 = vxor.u32 %v4390, 2147483648
  %v4393 = vmul.f32 %v4392, 1.442695
  %v4394 = vpow.pop %v4393
  %v4395 = vadd.f32 %v4394, 1.0
  %v4396 = vrcp.pop %v4395
  %v4397 = vmul.f32 1.0, %v4396
  %v4398 = vmul.f32 %v4386, %v3852
  %v4399 = vmul.f32 %v4377, %v4389
  %v4400 = vadd.f32 %v4398, %v4399
  %v4401 = vtanh.pop %v4400
  %v4402 = vmul.f32 %v4397, %v4401
  %s4403 = scalar_lea.vmem %s9, 12
  %4404 = vst [vmem:[%s4403] sm:$0x3] %v4402
  %s4405 = scalar_lea.vmem %s10, 12
  %4406 = vst [vmem:[%s4405] sm:$0x3] %v4400
  %4407 = vmatprep.subr.mxu0 0.0
  %4408 = vmatpush1.msra.mxu0 %v467
  %4409 = vmatprep.subr.mxu0 0.0
  %4410 = vmatpush1.msra.mxu0 %v468
  %4411 = vmatprep.subr.mxu0 0.0
  %4412 = vmatpush1.msra.mxu0 %v469
  %4413 = vmatprep.subr.mxu0 0.0
  %4414 = vmatpush1.msra.mxu0 %v470
  %4415 = vmatprep.subr.mxu0 0.0
  %4416 = vmatpush1.msra.mxu0 %v471
  %4417 = vmatprep.subr.mxu0 0.0
  %4418 = vmatpush1.msra.mxu0 %v472
  %4419 = vmatprep.subr.mxu0 0.0
  %4420 = vmatpush1.msra.mxu0 %v473
  %4421 = vmatprep.subr.mxu0 0.0
  %4422 = vmatpush1.msra.mxu0 %v474
  %4423 = vmatprep.subr.mxu0 0.0
  %4424 = vmatpush1.msra.mxu0 %v475
  %4425 = vmatprep.subr.mxu0 0.0
  %4426 = vmatpush1.msra.mxu0 %v476
  %4427 = vmatprep.subr.mxu0 0.0
  %4428 = vmatpush1.msra.mxu0 %v477
  %4429 = vmatprep.subr.mxu0 0.0
  %4430 = vmatpush1.msra.mxu0 %v478
  %4431 = vmatprep.subr.mxu0 0.0
  %4432 = vmatpush1.msra.mxu0 %v479
  %4433 = vmatprep.subr.mxu0 0.0
  %4434 = vmatpush1.msra.mxu0 %v480
  %4435 = vmatprep.subr.mxu0 0.0
  %4436 = vmatpush1.msra.mxu0 %v481
  %4437 = vmatprep.subr.mxu0 0.0
  %4438 = vmatpush1.msra.mxu0 %v482
  %4439 = vmatprep.subr.mxu0 0.0
  %4440 = vmatpush1.msra.mxu0 0.0
  %4441 = vmatprep.subr.mxu0 0.0
  %4442 = vmatpush1.msra.mxu0 0.0
  %4443 = vmatprep.subr.mxu0 0.0
  %4444 = vmatpush1.msra.mxu0 0.0
  %4445 = vmatprep.subr.mxu0 0.0
  %4446 = vmatpush1.msra.mxu0 0.0
  %4447 = vmatprep.subr.mxu0 0.0
  %4448 = vmatpush1.msra.mxu0 0.0
  %4449 = vmatprep.subr.mxu0 0.0
  %4450 = vmatpush1.msra.mxu0 0.0
  %4451 = vmatprep.subr.mxu0 0.0
  %4452 = vmatpush1.msra.mxu0 0.0
  %4453 = vmatprep.subr.mxu0 0.0
  %4454 = vmatpush1.msra.mxu0 0.0
  %4455 = vmatprep.subr.mxu0 0.0
  %4456 = vmatpush1.msra.mxu0 0.0
  %4457 = vmatprep.subr.mxu0 0.0
  %4458 = vmatpush1.msra.mxu0 0.0
  %4459 = vmatprep.subr.mxu0 0.0
  %4460 = vmatpush1.msra.mxu0 0.0
  %4461 = vmatprep.subr.mxu0 0.0
  %4462 = vmatpush1.msra.mxu0 0.0
  %4463 = vmatprep.subr.mxu0 0.0
  %4464 = vmatpush1.msra.mxu0 0.0
  %4465 = vmatprep.subr.mxu0 0.0
  %4466 = vmatpush1.msra.mxu0 0.0
  %4467 = vmatprep.subr.mxu0 0.0
  %4468 = vmatpush1.msra.mxu0 0.0
  %4469 = vmatprep.subr.mxu0 0.0
  %4470 = vmatpush1.msra.mxu0 0.0
  %4471 = vmatprep.mubr.f32.mxu0 0.0
  %4472 = vmatmul.mubr.f32.gmra.mrb[0].mxu0 %v4400
  %v4473 = vpop.f32.mrb[0].mxu0
  %v4474 = vadd.f32 0.0, %v4473
  %v4475 = vpop.f32.mrb[0].mxu0
  %4476 = vdwg.mxu0
  %v4479 = vunpack.c.l.s4 1966171168
  %v4480 = vunpack.c.0.s8 %v4479
  %v4481 = vlaneseq
  %v4482 = vshrl.u32 %v4481, 7
  %v4483 = vsub.s32 %v4480, %v4482
  %v4484 = vrot.slane %v4474, %v4483
  %v4485 = vcombine.high %v4484, %v4484
  %v4487 = vunpack.c.l.s4 1966171168
  %v4488 = vunpack.c.0.s8 %v4487
  %v4489 = vlaneseq
  %v4490 = vshrl.u32 %v4489, 7
  %v4491 = vsub.s32 %v4488, %v4490
  %v4492 = vrot.slane %v4484, %v4491
  %v4494 = vunpack.c.l.s4 1966171168
  %v4495 = vunpack.c.0.s8 %v4494
  %v4496 = vlaneseq
  %v4497 = vshrl.u32 %v4496, 7
  %v4498 = vsub.s32 %v4495, %v4497
  %v4499 = vrot.slane %v4485, %v4498
  %v4500 = vlaneseq
  %v4501 = vshrl.u32 %v4500, 7
  %v4502 = vsub.s32 0, %v4501
  %v4503 = vrot.slane %v4492, %v4502
  %v4504 = vlaneseq
  %v4505 = vshrl.u32 %v4504, 7
  %v4506 = vsub.s32 0, %v4505
  %v4507 = vrot.slane %v4499, %v4506
  %v4510 = vadd.f32 %v129, %v4503
  %v4511 = vadd.f32 %v130, %v4507
  %v4512 = vtanh.pop %v4510
  %v4513 = vtanh.pop %v4511
  %v4514 = vmul.f32 %v4512, %v674
  %v4515 = vmul.f32 %v4513, %v674
  %4516 = vadd.xlane.f32.xlu0 %v4514
  %v4517 = vpop.xlane.xlu0 %4516
  %4518 = vadd.xlane.f32.xlu0 %v4515
  %v4519 = vpop.xlane.xlu0 %4518
  %v4522 = vlaneseq
  %v4523 = vshrl.u32 %v4522, 7
  %v4524 = vsub.s32 %v685, %v4523
  %v4525 = vrot.slane %v4517, %v4524
  %v4526 = vlaneseq
  %v4527 = vshrl.u32 %v4526, 7
  %v4528 = vsub.s32 %v685, %v4527
  %v4529 = vrot.slane %v4519, %v4528
  %v4530 = vsel %vm694, %v4529, %v4525
  %v4532 = vsel %vm697, %v4530, -inf
  %4533 = vmax.xlane.f32.xlu0 %v4532
  %v4534 = vpop.xlane.xlu0 %4533
  %v4536 = vlaneseq
  %v4537 = vshrl.u32 %v4536, 7
  %v4538 = vsub.s32 0, %v4537
  %v4539 = vrot.slane %v4534, %v4538
  %v4540 = vlaneseq
  %v4541 = vshrl.u32 %v4540, 7
  %v4542 = vsub.s32 1, %v4541
  %v4543 = vrot.slane %v4534, %v4542
  %v4546 = vsub.f32 %v4517, %v4539
  %v4547 = vsub.f32 %v4519, %v4543
  %v4548 = vmul.f32 %v4546, 1.442695
  %v4549 = vpow.pop %v4548
  %v4550 = vmul.f32 %v4547, 1.442695
  %v4551 = vpow.pop %v4550
  %4554 = vset.pattern.permute.xlu0 0
  %4555 = vperm.xlu0 %4554, %v4549
  %v4556 = vpop.permute.xlu0 %4555
  %4557 = vset.pattern.permute.xlu0 0
  %4558 = vperm.xlu0 %4557, %v4551
  %v4559 = vpop.permute.xlu0 %4558
  %v4560 = vlaneseq
  %v4561 = vshrl.u32 %v4560, 7
  %v4562 = vsub.s32 %v685, %v4561
  %v4563 = vrot.slane %v4556, %v4562
  %v4564 = vlaneseq
  %v4565 = vshrl.u32 %v4564, 7
  %v4566 = vsub.s32 %v685, %v4565
  %v4567 = vrot.slane %v4559, %v4566
  %v4568 = vsel %vm694, %v4567, %v4563
  %v4570 = vsel %vm697, %v4568, 0.0
  %4571 = vadd.xlane.f32.xlu0 %v4570
  %v4572 = vpop.xlane.xlu0 %4571
  %v4573 = vrcp.pop %v4572
  %v4575 = vlaneseq
  %v4576 = vshrl.u32 %v4575, 7
  %v4577 = vsub.s32 0, %v4576
  %v4578 = vrot.slane %v4573, %v4577
  %v4579 = vlaneseq
  %v4580 = vshrl.u32 %v4579, 7
  %v4581 = vsub.s32 1, %v4580
  %v4582 = vrot.slane %v4573, %v4581
  %v4585 = vmul.f32 %v4549, %v4578
  %v4586 = vmul.f32 %v4551, %v4582
  %4588 = vset.pattern.permute.xlu0 0
  %4589 = vperm.xlu0 %4588, %v4585
  %v4590 = vpop.permute.xlu0 %4589
  %v4591 = vlaneseq
  %v4592 = vshrl.u32 %v4591, 7
  %v4593 = vsub.s32 %v685, %v4592
  %v4594 = vrot.slane %v4590, %v4593
  %v4595 = vsel %vm761, %v4594, 0
  %4597 = vmatprep.subr.mxu0 0.0
  %4598 = vmatpush1.msra.mxu0 %v34
  %4599 = vmatprep.subr.mxu0 0.0
  %4600 = vmatpush1.msra.mxu0 0.0
  %4601 = vmatprep.subr.mxu0 0.0
  %4602 = vmatpush1.msra.mxu0 0.0
  %4603 = vmatprep.subr.mxu0 0.0
  %4604 = vmatpush1.msra.mxu0 0.0
  %4605 = vmatprep.subr.mxu0 0.0
  %4606 = vmatpush1.msra.mxu0 0.0
  %4607 = vmatprep.subr.mxu0 0.0
  %4608 = vmatpush1.msra.mxu0 0.0
  %4609 = vmatprep.subr.mxu0 0.0
  %4610 = vmatpush1.msra.mxu0 0.0
  %4611 = vmatprep.subr.mxu0 0.0
  %4612 = vmatpush1.msra.mxu0 0.0
  %4613 = vmatprep.subr.mxu0 0.0
  %4614 = vmatpush1.msra.mxu0 0.0
  %4615 = vmatprep.subr.mxu0 0.0
  %4616 = vmatpush1.msra.mxu0 0.0
  %4617 = vmatprep.subr.mxu0 0.0
  %4618 = vmatpush1.msra.mxu0 0.0
  %4619 = vmatprep.subr.mxu0 0.0
  %4620 = vmatpush1.msra.mxu0 0.0
  %4621 = vmatprep.subr.mxu0 0.0
  %4622 = vmatpush1.msra.mxu0 0.0
  %4623 = vmatprep.subr.mxu0 0.0
  %4624 = vmatpush1.msra.mxu0 0.0
  %4625 = vmatprep.subr.mxu0 0.0
  %4626 = vmatpush1.msra.mxu0 0.0
  %4627 = vmatprep.subr.mxu0 0.0
  %4628 = vmatpush1.msra.mxu0 0.0
  %4629 = vmatprep.subr.mxu0 0.0
  %4630 = vmatpush1.msra.mxu0 0.0
  %4631 = vmatprep.subr.mxu0 0.0
  %4632 = vmatpush1.msra.mxu0 0.0
  %4633 = vmatprep.subr.mxu0 0.0
  %4634 = vmatpush1.msra.mxu0 0.0
  %4635 = vmatprep.subr.mxu0 0.0
  %4636 = vmatpush1.msra.mxu0 0.0
  %4637 = vmatprep.subr.mxu0 0.0
  %4638 = vmatpush1.msra.mxu0 0.0
  %4639 = vmatprep.subr.mxu0 0.0
  %4640 = vmatpush1.msra.mxu0 0.0
  %4641 = vmatprep.subr.mxu0 0.0
  %4642 = vmatpush1.msra.mxu0 0.0
  %4643 = vmatprep.subr.mxu0 0.0
  %4644 = vmatpush1.msra.mxu0 0.0
  %4645 = vmatprep.subr.mxu0 0.0
  %4646 = vmatpush1.msra.mxu0 0.0
  %4647 = vmatprep.subr.mxu0 0.0
  %4648 = vmatpush1.msra.mxu0 0.0
  %4649 = vmatprep.subr.mxu0 0.0
  %4650 = vmatpush1.msra.mxu0 0.0
  %4651 = vmatprep.subr.mxu0 0.0
  %4652 = vmatpush1.msra.mxu0 0.0
  %4653 = vmatprep.subr.mxu0 0.0
  %4654 = vmatpush1.msra.mxu0 0.0
  %4655 = vmatprep.subr.mxu0 0.0
  %4656 = vmatpush1.msra.mxu0 0.0
  %4657 = vmatprep.subr.mxu0 0.0
  %4658 = vmatpush1.msra.mxu0 0.0
  %4659 = vmatprep.subr.mxu0 0.0
  %4660 = vmatpush1.msra.mxu0 0.0
  %4661 = vmatprep.mubr.f32.mxu0 0.0
  %4662 = vmatmul.mubr.f32.gmra.mrb[0].mxu0 %v4595
  %v4663 = vpop.f32.mrb[0].mxu0
  %v4664 = vadd.f32 0.0, %v4663
  %v4665 = vpop.f32.mrb[0].mxu0
  %4666 = vdwg.mxu0
  %4668 = vset.pattern.permute.xlu0 0
  %4669 = vperm.xlu0 %4668, %v4586
  %v4670 = vpop.permute.xlu0 %4669
  %v4671 = vlaneseq
  %v4672 = vshrl.u32 %v4671, 7
  %v4673 = vsub.s32 %v685, %v4672
  %v4674 = vrot.slane %v4670, %v4673
  %v4675 = vsel %vm761, %v4674, 0
  %4677 = vmatprep.subr.mxu0 0.0
  %4678 = vmatpush1.msra.mxu0 %v35
  %4679 = vmatprep.subr.mxu0 0.0
  %4680 = vmatpush1.msra.mxu0 0.0
  %4681 = vmatprep.subr.mxu0 0.0
  %4682 = vmatpush1.msra.mxu0 0.0
  %4683 = vmatprep.subr.mxu0 0.0
  %4684 = vmatpush1.msra.mxu0 0.0
  %4685 = vmatprep.subr.mxu0 0.0
  %4686 = vmatpush1.msra.mxu0 0.0
  %4687 = vmatprep.subr.mxu0 0.0
  %4688 = vmatpush1.msra.mxu0 0.0
  %4689 = vmatprep.subr.mxu0 0.0
  %4690 = vmatpush1.msra.mxu0 0.0
  %4691 = vmatprep.subr.mxu0 0.0
  %4692 = vmatpush1.msra.mxu0 0.0
  %4693 = vmatprep.subr.mxu0 0.0
  %4694 = vmatpush1.msra.mxu0 0.0
  %4695 = vmatprep.subr.mxu0 0.0
  %4696 = vmatpush1.msra.mxu0 0.0
  %4697 = vmatprep.subr.mxu0 0.0
  %4698 = vmatpush1.msra.mxu0 0.0
  %4699 = vmatprep.subr.mxu0 0.0
  %4700 = vmatpush1.msra.mxu0 0.0
  %4701 = vmatprep.subr.mxu0 0.0
  %4702 = vmatpush1.msra.mxu0 0.0
  %4703 = vmatprep.subr.mxu0 0.0
  %4704 = vmatpush1.msra.mxu0 0.0
  %4705 = vmatprep.subr.mxu0 0.0
  %4706 = vmatpush1.msra.mxu0 0.0
  %4707 = vmatprep.subr.mxu0 0.0
  %4708 = vmatpush1.msra.mxu0 0.0
  %4709 = vmatprep.subr.mxu0 0.0
  %4710 = vmatpush1.msra.mxu0 0.0
  %4711 = vmatprep.subr.mxu0 0.0
  %4712 = vmatpush1.msra.mxu0 0.0
  %4713 = vmatprep.subr.mxu0 0.0
  %4714 = vmatpush1.msra.mxu0 0.0
  %4715 = vmatprep.subr.mxu0 0.0
  %4716 = vmatpush1.msra.mxu0 0.0
  %4717 = vmatprep.subr.mxu0 0.0
  %4718 = vmatpush1.msra.mxu0 0.0
  %4719 = vmatprep.subr.mxu0 0.0
  %4720 = vmatpush1.msra.mxu0 0.0
  %4721 = vmatprep.subr.mxu0 0.0
  %4722 = vmatpush1.msra.mxu0 0.0
  %4723 = vmatprep.subr.mxu0 0.0
  %4724 = vmatpush1.msra.mxu0 0.0
  %4725 = vmatprep.subr.mxu0 0.0
  %4726 = vmatpush1.msra.mxu0 0.0
  %4727 = vmatprep.subr.mxu0 0.0
  %4728 = vmatpush1.msra.mxu0 0.0
  %4729 = vmatprep.subr.mxu0 0.0
  %4730 = vmatpush1.msra.mxu0 0.0
  %4731 = vmatprep.subr.mxu0 0.0
  %4732 = vmatpush1.msra.mxu0 0.0
  %4733 = vmatprep.subr.mxu0 0.0
  %4734 = vmatpush1.msra.mxu0 0.0
  %4735 = vmatprep.subr.mxu0 0.0
  %4736 = vmatpush1.msra.mxu0 0.0
  %4737 = vmatprep.subr.mxu0 0.0
  %4738 = vmatpush1.msra.mxu0 0.0
  %4739 = vmatprep.subr.mxu0 0.0
  %4740 = vmatpush1.msra.mxu0 0.0
  %4741 = vmatprep.mubr.f32.mxu0 0.0
  %4742 = vmatmul.mubr.f32.gmra.mrb[0].mxu0 %v4675
  %v4743 = vpop.f32.mrb[0].mxu0
  %v4744 = vadd.f32 0.0, %v4743
  %v4745 = vpop.f32.mrb[0].mxu0
  %4746 = vdwg.mxu0
  %v4749 = vrot.slane %v4744, 7
  %v4750 = vsel %vm694, %v4749, %v4664
  %s4751 = scalar_lea.vmem [#allocation2], 56
  %v4752 = vld [vmem:[%s4751] sm:$0xff]
  %v4753 = vsel %vm40, %v4750, 0
  %4755 = vmatprep.subr.mxu0 %v484
  %4756 = vmatpush1.msra.mxu0 %v483
  %4757 = vmatprep.subr.mxu0 %v488
  %4758 = vmatpush1.msra.mxu0 %v487
  %4759 = vmatprep.subr.mxu0 %v492
  %4760 = vmatpush1.msra.mxu0 %v491
  %4761 = vmatprep.subr.mxu0 %v496
  %4762 = vmatpush1.msra.mxu0 %v495
  %4763 = vmatprep.subr.mxu0 %v500
  %4764 = vmatpush1.msra.mxu0 %v499
  %4765 = vmatprep.subr.mxu0 %v504
  %4766 = vmatpush1.msra.mxu0 %v503
  %4767 = vmatprep.subr.mxu0 %v508
  %4768 = vmatpush1.msra.mxu0 %v507
  %4769 = vmatprep.subr.mxu0 %v512
  %4770 = vmatpush1.msra.mxu0 %v511
  %4771 = vmatprep.subr.mxu0 %v516
  %4772 = vmatpush1.msra.mxu0 %v515
  %4773 = vmatprep.subr.mxu0 %v520
  %4774 = vmatpush1.msra.mxu0 %v519
  %4775 = vmatprep.subr.mxu0 %v524
  %4776 = vmatpush1.msra.mxu0 %v523
  %4777 = vmatprep.subr.mxu0 %v528
  %4778 = vmatpush1.msra.mxu0 %v527
  %4779 = vmatprep.subr.mxu0 %v532
  %4780 = vmatpush1.msra.mxu0 %v531
  %4781 = vmatprep.subr.mxu0 %v536
  %4782 = vmatpush1.msra.mxu0 %v535
  %4783 = vmatprep.subr.mxu0 %v540
  %4784 = vmatpush1.msra.mxu0 %v539
  %4785 = vmatprep.subr.mxu0 %v544
  %4786 = vmatpush1.msra.mxu0 %v543
  %4787 = vmatprep.subr.mxu0 %v548
  %4788 = vmatpush1.msra.mxu0 %v547
  %4789 = vmatprep.subr.mxu0 %v552
  %4790 = vmatpush1.msra.mxu0 %v551
  %4791 = vmatprep.subr.mxu0 %v556
  %4792 = vmatpush1.msra.mxu0 %v555
  %4793 = vmatprep.subr.mxu0 %v560
  %4794 = vmatpush1.msra.mxu0 %v559
  %4795 = vmatprep.subr.mxu0 0.0
  %4796 = vmatpush1.msra.mxu0 0.0
  %4797 = vmatprep.subr.mxu0 0.0
  %4798 = vmatpush1.msra.mxu0 0.0
  %4799 = vmatprep.subr.mxu0 0.0
  %4800 = vmatpush1.msra.mxu0 0.0
  %4801 = vmatprep.subr.mxu0 0.0
  %4802 = vmatpush1.msra.mxu0 0.0
  %4803 = vmatprep.subr.mxu0 0.0
  %4804 = vmatpush1.msra.mxu0 0.0
  %4805 = vmatprep.subr.mxu0 0.0
  %4806 = vmatpush1.msra.mxu0 0.0
  %4807 = vmatprep.subr.mxu0 0.0
  %4808 = vmatpush1.msra.mxu0 0.0
  %4809 = vmatprep.subr.mxu0 0.0
  %4810 = vmatpush1.msra.mxu0 0.0
  %4811 = vmatprep.subr.mxu0 0.0
  %4812 = vmatpush1.msra.mxu0 0.0
  %4813 = vmatprep.subr.mxu0 0.0
  %4814 = vmatpush1.msra.mxu0 0.0
  %4815 = vmatprep.subr.mxu0 0.0
  %4816 = vmatpush1.msra.mxu0 0.0
  %4817 = vmatprep.subr.mxu0 0.0
  %4818 = vmatpush1.msra.mxu0 0.0
  %4819 = vmatprep.mubr.f32.mxu0 %v4753
  %4820 = vmatmul.mubr.f32.gmra.mrb[0].mxu0 %v4402
  %v4821 = vpop.f32.mrb[0].mxu0
  %v4822 = vadd.f32 0.0, %v4821
  %v4823 = vpop.f32.mrb[0].mxu0
  %v4824 = vadd.f32 0.0, %v4823
  %4825 = vdwg.mxu0
  %4826 = vmatprep.subr.mxu0 %v486
  %4827 = vmatpush1.msra.mxu0 %v485
  %4828 = vmatprep.subr.mxu0 %v490
  %4829 = vmatpush1.msra.mxu0 %v489
  %4830 = vmatprep.subr.mxu0 %v494
  %4831 = vmatpush1.msra.mxu0 %v493
  %4832 = vmatprep.subr.mxu0 %v498
  %4833 = vmatpush1.msra.mxu0 %v497
  %4834 = vmatprep.subr.mxu0 %v502
  %4835 = vmatpush1.msra.mxu0 %v501
  %4836 = vmatprep.subr.mxu0 %v506
  %4837 = vmatpush1.msra.mxu0 %v505
  %4838 = vmatprep.subr.mxu0 %v510
  %4839 = vmatpush1.msra.mxu0 %v509
  %4840 = vmatprep.subr.mxu0 %v514
  %4841 = vmatpush1.msra.mxu0 %v513
  %4842 = vmatprep.subr.mxu0 %v518
  %4843 = vmatpush1.msra.mxu0 %v517
  %4844 = vmatprep.subr.mxu0 %v522
  %4845 = vmatpush1.msra.mxu0 %v521
  %4846 = vmatprep.subr.mxu0 %v526
  %4847 = vmatpush1.msra.mxu0 %v525
  %4848 = vmatprep.subr.mxu0 %v530
  %4849 = vmatpush1.msra.mxu0 %v529
  %4850 = vmatprep.subr.mxu0 %v534
  %4851 = vmatpush1.msra.mxu0 %v533
  %4852 = vmatprep.subr.mxu0 %v538
  %4853 = vmatpush1.msra.mxu0 %v537
  %4854 = vmatprep.subr.mxu0 %v542
  %4855 = vmatpush1.msra.mxu0 %v541
  %4856 = vmatprep.subr.mxu0 %v546
  %4857 = vmatpush1.msra.mxu0 %v545
  %4858 = vmatprep.subr.mxu0 %v550
  %4859 = vmatpush1.msra.mxu0 %v549
  %4860 = vmatprep.subr.mxu0 %v554
  %4861 = vmatpush1.msra.mxu0 %v553
  %4862 = vmatprep.subr.mxu0 %v558
  %4863 = vmatpush1.msra.mxu0 %v557
  %4864 = vmatprep.subr.mxu0 %v562
  %4865 = vmatpush1.msra.mxu0 %v561
  %4866 = vmatprep.subr.mxu0 0.0
  %4867 = vmatpush1.msra.mxu0 0.0
  %4868 = vmatprep.subr.mxu0 0.0
  %4869 = vmatpush1.msra.mxu0 0.0
  %4870 = vmatprep.subr.mxu0 0.0
  %4871 = vmatpush1.msra.mxu0 0.0
  %4872 = vmatprep.subr.mxu0 0.0
  %4873 = vmatpush1.msra.mxu0 0.0
  %4874 = vmatprep.subr.mxu0 0.0
  %4875 = vmatpush1.msra.mxu0 0.0
  %4876 = vmatprep.subr.mxu0 0.0
  %4877 = vmatpush1.msra.mxu0 0.0
  %4878 = vmatprep.subr.mxu0 0.0
  %4879 = vmatpush1.msra.mxu0 0.0
  %4880 = vmatprep.subr.mxu0 0.0
  %4881 = vmatpush1.msra.mxu0 0.0
  %4882 = vmatprep.subr.mxu0 0.0
  %4883 = vmatpush1.msra.mxu0 0.0
  %4884 = vmatprep.subr.mxu0 0.0
  %4885 = vmatpush1.msra.mxu0 0.0
  %4886 = vmatprep.subr.mxu0 0.0
  %4887 = vmatpush1.msra.mxu0 0.0
  %4888 = vmatprep.subr.mxu0 0.0
  %4889 = vmatpush1.msra.mxu0 0.0
  %4890 = vmatprep.mubr.f32.mxu0 %v4753
  %4891 = vmatmul.mubr.f32.gmra.mrb[0].mxu0 %v4402
  %v4892 = vpop.f32.mrb[0].mxu0
  %v4893 = vadd.f32 0.0, %v4892
  %v4894 = vpop.f32.mrb[0].mxu0
  %v4895 = vadd.f32 0.0, %v4894
  %4896 = vdwg.mxu0
  %v4901 = vcombine.low %v4822, %v4824
  %v4902 = vcombine.low %v4893, %v4895
  %v4904 = vunpack.c.l.s4 1983009808
  %v4905 = vunpack.c.0.s8 %v4904
  %v4906 = vlaneseq
  %v4907 = vshrl.u32 %v4906, 7
  %v4908 = vsub.s32 %v4905, %v4907
  %v4909 = vrot.slane %v4901, %v4908
  %v4911 = vunpack.c.l.s4 1983009808
  %v4912 = vunpack.c.0.s8 %v4911
  %v4913 = vlaneseq
  %v4914 = vshrl.u32 %v4913, 7
  %v4915 = vsub.s32 %v4912, %v4914
  %v4916 = vrot.slane %v4902, %v4915
  %v4917 = vcombine.low %v4909, %v4916
  %v4919 = vadd.f32 %v4752, %v4917
  %v4920 = vxor.u32 %v4919, 2147483648
  %v4921 = vmul.f32 %v4920, 1.442695
  %v4922 = vpow.pop %v4921
  %v4923 = vadd.f32 %v4922, 1.0
  %v4924 = vrcp.pop %v4923
  %v4925 = vmul.f32 1.0, %v4924
  %v4927 = vrot.slane %v4919, 2
  %v4929 = vxor.u32 %v4927, 2147483648
  %v4930 = vmul.f32 %v4929, 1.442695
  %v4931 = vpow.pop %v4930
  %v4932 = vadd.f32 %v4931, 1.0
  %v4933 = vrcp.pop %v4932
  %v4934 = vmul.f32 1.0, %v4933
  %v4935 = vrot.slane %v4919, 4
  %v4937 = vtanh.pop %v4935
  %v4938 = vrot.slane %v4919, 6
  %v4940 = vxor.u32 %v4938, 2147483648
  %v4941 = vmul.f32 %v4940, 1.442695
  %v4942 = vpow.pop %v4941
  %v4943 = vadd.f32 %v4942, 1.0
  %v4944 = vrcp.pop %v4943
  %v4945 = vmul.f32 1.0, %v4944
  %v4946 = vmul.f32 %v4934, %v4400
  %v4947 = vmul.f32 %v4925, %v4937
  %v4948 = vadd.f32 %v4946, %v4947
  %v4949 = vtanh.pop %v4948
  %v4950 = vmul.f32 %v4945, %v4949
  %s4951 = scalar_lea.vmem %s9, 14
  %4952 = vst [vmem:[%s4951] sm:$0x3] %v4950
  %s4953 = scalar_lea.vmem %s10, 14
  %4954 = vst [vmem:[%s4953] sm:$0x3] %v4948
  // Predicated region
  $region38: #{attn_lstm_forward.1} parent=0 // pred_check
    _
  $region39: #{attn_lstm_forward.1} parent=0 // pred_check_branch
    %4956 = sbr.rel (0) target = $region41
  $region40: #{attn_lstm_forward.1} parent=0 // pred_region
    _
  $region41: #{attn_lstm_forward.1} parent=0 // pred_fallthru
    _
  // Predicated region
  $region42: #{attn_lstm_forward.1} parent=0 // pred_check
    _
  $region43: #{attn_lstm_forward.1} parent=0 // pred_check_branch
    %4958 = sbr.rel (0) target = $region45
  $region44: #{attn_lstm_forward.1} parent=0 // pred_region
    _
  $region45: #{attn_lstm_forward.1} parent=0 // pred_fallthru
    _
  // Predicated region
  $region46: #{attn_lstm_forward.1} parent=0 // pred_check
    _
  $region47: #{attn_lstm_forward.1} parent=0 // pred_check_branch
    %4960 = sbr.rel (0) target = $region49
  $region48: #{attn_lstm_forward.1} parent=0 // pred_region
    _
  $region49: #{attn_lstm_forward.1} parent=0 // pred_fallthru
    _
  // Predicated region
  $region50: #{attn_lstm_forward.1} parent=0 // pred_check
    _
  $region51: #{attn_lstm_forward.1} parent=0 // pred_check_branch
    %4962 = sbr.rel (0) target = $region53
  $region52: #{attn_lstm_forward.1} parent=0 // pred_region
    _
  $region53: #{attn_lstm_forward.1} parent=0 // pred_fallthru
    _

</llo_original>
